<compile_context>
chip_gen: v6e
topology: v6e:2x2x1
jax: 0.10.0
libtpu: 0.0.40
codegen_flags: <defaults>
</compile_context>

<pallas_src>
import numpy as np
import jax
import jax.numpy as jnp
from jax import lax
from jax.experimental import pallas as pl
from jax.experimental.pallas import tpu as pltpu

EMB_SIZE = 8
CORE_NUMS = 128
K1, S1 = 512, 512
K2, S2 = 1024, 512
BN_EPS = 1e-5
KT = 1024               # K-tile (columns of p1 / rows of the fused weight) per grid step


def make_gatecnn_kernel(B, nW1):
    O = CORE_NUMS
    O2 = 2 * O
    nW2 = nW1 - 1
    M_real = B * nW1

    def kernel(p1_ref, w_ref, b1_ref, b2_ref,
               s_a_ref, t_a_ref, s_b_ref, t_b_ref,
               fc1wa_ref, fc1wb_ref, fc1b_ref, fc2w_ref, fc2b_ref,
               out_ref, acc_ref):
        k = pl.program_id(0)

        @pl.when(k == 0)
        def _init():
            acc_ref[...] = jnp.zeros_like(acc_ref)

        # One fused 768-wide bf16 matmul per K-tile; f32 accumulation in VMEM.
        acc_ref[...] += jnp.dot(p1_ref[...], w_ref[...],
                                preferred_element_type=jnp.float32)

        @pl.when(k == pl.num_programs(0) - 1)
        def _epilogue():
            acc = acc_ref[...]
            if acc_ref.shape[0] != M_real:        # static; only if rows were padded
                acc = acc[:M_real]

            # Column groups of the fused matmul (256-aligned -> lane-tile aligned).
            z1 = (acc[:, :O2] + b1_ref[...]).reshape(B, nW1, O2)
            zlo = (acc[:, O2:2 * O2] + b2_ref[...]).reshape(B, nW1, O2)
            zhi = acc[:, 2 * O2:].reshape(B, nW1, O2)

            # conv2 (K=1024, S=512) window i = low taps on window i
            #                                + high taps on window i+1.
            z2 = zlo[:, :nW2, :] + zhi[:, 1:, :]              # (B, nW2, 2*O)

            c1 = jax.nn.sigmoid(z1[..., :O]) * z1[..., O:]    # (B, nW1, O)
            c2 = jax.nn.sigmoid(z2[..., :O]) * z2[..., O:]    # (B, nW2, O)
            out1 = jnp.max(c1, axis=1)                        # (B, O)
            out2 = jnp.max(c2, axis=1)                        # (B, O)

            # FC head: BN2 affine (eval) + split fc1 (no lane concat) + ReLU.
            # DEFAULT precision, f32 accumulation (HIGHEST dropped per review).
            h = jnp.dot(out1 * s_a_ref[...] + t_a_ref[...], fc1wa_ref[...],
                        preferred_element_type=jnp.float32)
            h = h + jnp.dot(out2 * s_b_ref[...] + t_b_ref[...], fc1wb_ref[...],
                            preferred_element_type=jnp.float32)
            h = jnp.maximum(h + fc1b_ref[...], 0.0)
            # TODO(synk): dropout omitted (eval-mode identity)

            # Final N=1 projection as VPU multiply + lane reduce.
            y = jnp.sum(h * fc2w_ref[...], axis=-1, keepdims=True) + fc2b_ref[...]
            out_ref[...] = jax.nn.sigmoid(y)

    return kernel


def _conv_pair_to_matrix(w_a, w_b):
    # PyTorch Conv1d weights (O, C, K) -> fused matmul matrix (K*C, 2*O) with
    # (k, c)-major rows, columns ordered [gate | value].
    O, C, K = w_a.shape
    Wa = jnp.transpose(w_a, (2, 1, 0)).reshape(K * C, O)
    Wb = jnp.transpose(w_b, (2, 1, 0)).reshape(K * C, O)
    return jnp.concatenate([Wa, Wb], axis=1)


def gatecnn_forward(x, params):
    B, L = x.shape
    E = params["emb"].shape[1]
    O = CORE_NUMS
    O2 = 2 * O
    KE = K1 * E

    # --- Fold BN1 (eval) into the embedding table: exact, incl. padding row ---
    scale1 = params["bn1_gamma"] * lax.rsqrt(params["bn1_var"] + BN_EPS)
    shift1 = params["bn1_beta"] - params["bn1_mean"] * scale1
    emb_bn = params["emb"] * scale1[None, :] + shift1[None, :]

    nW1 = (L - K1) // S1 + 1
    nW2 = (L - K2) // S2 + 1
    assert K2 == 2 * K1 and S2 == S1 and nW2 == nW1 - 1 and nW2 >= 1
    L_used = nW1 * S1

    # --- Patches: gather + reshape only (stride1 == K1), bf16 for the MXU ---
    p1 = jnp.take(emb_bn, x[:, :L_used], axis=0).reshape(B * nW1, KE)
    p1 = p1.astype(jnp.bfloat16)
    M = B * nW1
    M_pad = ((M + 7) // 8) * 8
    if M_pad != M:
        p1 = jnp.pad(p1, ((0, M_pad - M), (0, 0)))

    # --- Single fused RHS: [conv1 gate|value | conv2 low taps | conv2 high taps] ---
    w1f = _conv_pair_to_matrix(params["w11"], params["w12"])
    w2f = _conv_pair_to_matrix(params["w21"], params["w22"])
    w_all = jnp.concatenate([w1f, w2f[:KE], w2f[KE:]], axis=1).astype(jnp.bfloat16)
    b1f = jnp.concatenate([params["b11"], params["b12"]])[None, :]     # (1, 2*O)
    b2f = jnp.concatenate([params["b21"], params["b22"]])[None, :]

    bn2_scale = params["bn2_gamma"] * lax.rsqrt(params["bn2_var"] + BN_EPS)
    bn2_shift = params["bn2_beta"] - params["bn2_mean"] * bn2_scale
    s_a, s_b = bn2_scale[None, :O], bn2_scale[None, O:]
    t_a, t_b = bn2_shift[None, :O], bn2_shift[None, O:]
    fc1wa, fc1wb = params["fc1_w"][:O], params["fc1_w"][O:]
    fc1b = params["fc1_b"][None, :]
    fc2w_row = params["fc2_w"].T                                       # (1, O)
    fc2b = params["fc2_b"][None, :]                                    # (1, 1)

    assert KE % KT == 0
    n_k = KE // KT

    def small(shape):
        return pl.BlockSpec(shape, lambda k: tuple(0 for _ in shape))

    grid_spec = pltpu.PrefetchScalarGridSpec(
        num_scalar_prefetch=0,
        grid=(n_k,),
        in_specs=[
            pl.BlockSpec((M_pad, KT), lambda k: (0, k)),       # p1 K-tile
            pl.BlockSpec((KT, 3 * O2), lambda k: (k, 0)),      # fused weight K-tile
            small((1, O2)), small((1, O2)),                    # b1, b2
            small((1, O)), small((1, O)), small((1, O)), small((1, O)),  # BN2 affine
            small((O, O)), small((O, O)), small((1, O)),       # fc1 halves + bias
            small((1, O)), small((1, 1)),                      # fc2 row + bias
        ],
        out_specs=pl.BlockSpec((B, 1), lambda k: (0, 0)),
        scratch_shapes=[pltpu.VMEM((M_pad, 3 * O2), jnp.float32)],
    )

    return pl.pallas_call(
        make_gatecnn_kernel(B, nW1),
        out_shape=jax.ShapeDtypeStruct((B, 1), jnp.float32),
        grid_spec=grid_spec,
        compiler_params=pltpu.CompilerParams(
            dimension_semantics=("arbitrary",),     # K is a reduction axis
            vmem_limit_bytes=12 * 1024 * 1024,      # ~3.5 MiB actual footprint
        ),
    )(p1, w_all, b1f, b2f, s_a, t_a, s_b, t_b,
      fc1wa, fc1wb, fc1b, fc2w_row, fc2b)


def init_params(key):
    ks = jax.random.split(key, 12)
    emb = jax.random.normal(ks[0], (257, EMB_SIZE), jnp.float32)
    emb = emb.at[0].set(0.0)  # padding_idx=0

    def conv_w(k, K):
        return jax.random.normal(k, (CORE_NUMS, EMB_SIZE, K), jnp.float32) * 0.02

    def bias(k, n):
        return jax.random.normal(k, (n,), jnp.float32) * 0.01

    p = {
        "emb": emb,
        # bn1 / fc-bn: PyTorch init values (gamma=1, beta=0, mean=0, var=1)
        "bn1_gamma": jnp.ones((EMB_SIZE,), jnp.float32),
        "bn1_beta": jnp.zeros((EMB_SIZE,), jnp.float32),
        "bn1_mean": jnp.zeros((EMB_SIZE,), jnp.float32),
        "bn1_var": jnp.ones((EMB_SIZE,), jnp.float32),
        "w11": conv_w(ks[1], K1), "b11": bias(ks[2], CORE_NUMS),
        "w12": conv_w(ks[3], K1), "b12": bias(ks[4], CORE_NUMS),
        "w21": conv_w(ks[5], K2), "b21": bias(ks[6], CORE_NUMS),
        "w22": conv_w(ks[7], K2), "b22": bias(ks[8], CORE_NUMS),
        "bn2_gamma": jnp.ones((CORE_NUMS * 2,), jnp.float32),
        "bn2_beta": jnp.zeros((CORE_NUMS * 2,), jnp.float32),
        "bn2_mean": jnp.zeros((CORE_NUMS * 2,), jnp.float32),
        "bn2_var": jnp.ones((CORE_NUMS * 2,), jnp.float32),
        "fc1_w": jax.random.normal(ks[9], (CORE_NUMS * 2, CORE_NUMS), jnp.float32) * 0.02,
        "fc1_b": bias(ks[10], CORE_NUMS),
        "fc2_w": jax.random.normal(ks[11], (CORE_NUMS, 1), jnp.float32) * 0.02,
        "fc2_b": jnp.zeros((1,), jnp.float32),
    }
    return p


def reference_forward(x, params):
    hi = jax.lax.Precision.HIGHEST
    x_embed = jnp.take(params["emb"], x, axis=0)          # (B, L, E)
    xc = jnp.transpose(x_embed, (0, 2, 1))                # (B, E, L)  (NCW)
    scale1 = params["bn1_gamma"] / jnp.sqrt(params["bn1_var"] + BN_EPS)
    shift1 = params["bn1_beta"] - params["bn1_mean"] * scale1
    xc = xc * scale1[None, :, None] + shift1[None, :, None]

    def conv(xn, w, b, stride):
        y = lax.conv_general_dilated(xn, w, (stride,), "VALID",
                                     dimension_numbers=("NCH", "OIH", "NCH"),
                                     precision=hi)
        return y + b[None, :, None]

    c1 = jax.nn.sigmoid(conv(xc, params["w11"], params["b11"], S1)) * \
        conv(xc, params["w12"], params["b12"], S1)
    c2 = jax.nn.sigmoid(conv(xc, params["w21"], params["b21"], S2)) * \
        conv(xc, params["w22"], params["b22"], S2)
    out1 = jnp.max(c1, axis=-1)
    out2 = jnp.max(c2, axis=-1)
    out = jnp.concatenate([out1, out2], axis=-1)

    bn2_scale = params["bn2_gamma"] / jnp.sqrt(params["bn2_var"] + BN_EPS)
    bn2_shift = params["bn2_beta"] - params["bn2_mean"] * bn2_scale
    h = out * bn2_scale[None, :] + bn2_shift[None, :]
    h = jnp.maximum(jnp.dot(h, params["fc1_w"], precision=hi) + params["fc1_b"][None, :], 0.0)
    y = jnp.dot(h, params["fc2_w"], precision=hi) + params["fc2_b"][None, :]
    return jax.nn.sigmoid(y)


if __name__ == "__main__":
    key = jax.random.PRNGKey(0)
    kp, kx = jax.random.split(key)
    params = init_params(kp)

    B, L = 2, 2048   # L must allow at least one kernel-1024 window
    x = jax.random.randint(kx, (B, L), 0, 257, dtype=jnp.int32)

    out = gatecnn_forward(x, params)
    out = jax.block_until_ready(out)
    assert out.shape == (B, 1) and out.dtype == jnp.float32

    ref = reference_forward(x, params)
    # bf16 conv weights/patches with f32 accumulation: relaxed vs HIGHEST-f32 ref.
    np.testing.assert_allclose(np.asarray(out), np.asarray(ref), atol=5e-3, rtol=5e-3)

    print("KERNEL_OK")
</pallas_src>

<mosaic_0001>
module attributes {stable_mosaic.version = 11 : i64} {
  func.func @kernel(%arg0: i32, %arg1: memref<8x1024xbf16, #tpu.memory_space<vmem>>, %arg2: memref<1024x768xbf16, #tpu.memory_space<vmem>>, %arg3: memref<1x256xf32, #tpu.memory_space<vmem>>, %arg4: memref<1x256xf32, #tpu.memory_space<vmem>>, %arg5: memref<1x128xf32, #tpu.memory_space<vmem>>, %arg6: memref<1x128xf32, #tpu.memory_space<vmem>>, %arg7: memref<1x128xf32, #tpu.memory_space<vmem>>, %arg8: memref<1x128xf32, #tpu.memory_space<vmem>>, %arg9: memref<128x128xf32, #tpu.memory_space<vmem>>, %arg10: memref<128x128xf32, #tpu.memory_space<vmem>>, %arg11: memref<1x128xf32, #tpu.memory_space<vmem>>, %arg12: memref<1x128xf32, #tpu.memory_space<vmem>>, %arg13: memref<1x1xf32, #tpu.memory_space<vmem>>, %arg14: memref<2x1xf32, #tpu.memory_space<vmem>>, %arg15: memref<8x768xf32, #tpu.memory_space<vmem>>) attributes {dimension_semantics = [#tpu.dimension_semantics<arbitrary>], iteration_bounds = array<i64: 4>, scalar_prefetch = 0 : i64, scratch_operands = 1 : i64, tpu.core_type = #tpu.core_type<tc>, window_params = [{transform_indices = @transform_0, window_bounds = array<i64: 8, 1024>}, {transform_indices = @transform_1, window_bounds = array<i64: 1024, 768>}, {pipeline_mode = #tpu.pipeline_mode<synchronous>, transform_indices = @transform_2, window_bounds = array<i64: 1, 256>}, {pipeline_mode = #tpu.pipeline_mode<synchronous>, transform_indices = @transform_3, window_bounds = array<i64: 1, 256>}, {pipeline_mode = #tpu.pipeline_mode<synchronous>, transform_indices = @transform_4, window_bounds = array<i64: 1, 128>}, {pipeline_mode = #tpu.pipeline_mode<synchronous>, transform_indices = @transform_5, window_bounds = array<i64: 1, 128>}, {pipeline_mode = #tpu.pipeline_mode<synchronous>, transform_indices = @transform_6, window_bounds = array<i64: 1, 128>}, {pipeline_mode = #tpu.pipeline_mode<synchronous>, transform_indices = @transform_7, window_bounds = array<i64: 1, 128>}, {pipeline_mode = #tpu.pipeline_mode<synchronous>, transform_indices = @transform_8, window_bounds = array<i64: 128, 128>}, {pipeline_mode = #tpu.pipeline_mode<synchronous>, transform_indices = @transform_9, window_bounds = array<i64: 128, 128>}, {pipeline_mode = #tpu.pipeline_mode<synchronous>, transform_indices = @transform_10, window_bounds = array<i64: 1, 128>}, {pipeline_mode = #tpu.pipeline_mode<synchronous>, transform_indices = @transform_11, window_bounds = array<i64: 1, 128>}, {pipeline_mode = #tpu.pipeline_mode<synchronous>, transform_indices = @transform_12, window_bounds = array<i64: 1, 1>}, {pipeline_mode = #tpu.pipeline_mode<synchronous>, transform_indices = @transform_13, window_bounds = array<i64: 2, 1>}]} {
    %c0_i32 = arith.constant 0 : i32
    %0 = arith.cmpi eq, %arg0, %c0_i32 : i32
    %1 = arith.extui %0 : i1 to i32
    %c0_i32_0 = arith.constant 0 : i32
    %2 = arith.cmpi ne, %1, %c0_i32_0 : i32
    scf.if %2 {
      %cst_9 = arith.constant 0.000000e+00 : f32
      %12 = vector.broadcast %cst_9 : f32 to vector<8x768xf32>
      %c0_10 = arith.constant 0 : index
      %c0_11 = arith.constant 0 : index
      %13 = vector.load %arg15[%c0_10, %c0_11] : memref<8x768xf32, #tpu.memory_space<vmem>>, vector<8x768xf32>
      tpu.vector_store %arg15[%c0_10, %c0_11], %12 {strides = array<i32>} : memref<8x768xf32, #tpu.memory_space<vmem>>, vector<8x768xf32>,
    } else {
    }
    %c0 = arith.constant 0 : index
    %c0_1 = arith.constant 0 : index
    %3 = vector.load %arg15[%c0, %c0_1] : memref<8x768xf32, #tpu.memory_space<vmem>>, vector<8x768xf32>
    %c0_2 = arith.constant 0 : index
    %c0_3 = arith.constant 0 : index
    %4 = vector.load %arg1[%c0_2, %c0_3] : memref<8x1024xbf16, #tpu.memory_space<vmem>>, vector<8x1024xbf16>
    %c0_4 = arith.constant 0 : index
    %c0_5 = arith.constant 0 : index
    %5 = vector.load %arg2[%c0_4, %c0_5] : memref<1024x768xbf16, #tpu.memory_space<vmem>>, vector<1024x768xbf16>
    %cst = arith.constant dense<0.000000e+00> : vector<8x768xf32>
    %6 = tpu.matmul %4, %5, %cst {dimension_numbers = #tpu.dot_dimension_numbers<[1], [0], [0], [1], [0, 0, 1, 1], [], []>} : vector<8x1024xbf16>, vector<1024x768xbf16>, vector<8x768xf32> -> vector<8x768xf32>
    %7 = arith.addf %3, %6 : vector<8x768xf32>
    %c0_6 = arith.constant 0 : index
    %c0_7 = arith.constant 0 : index
    %8 = vector.load %arg15[%c0_6, %c0_7] : memref<8x768xf32, #tpu.memory_space<vmem>>, vector<8x768xf32>
    tpu.vector_store %arg15[%c0_6, %c0_7], %7 {strides = array<i32>} : memref<8x768xf32, #tpu.memory_space<vmem>>, vector<8x768xf32>,
    %c3_i32 = arith.constant 3 : i32
    %9 = arith.cmpi eq, %arg0, %c3_i32 : i32
    %10 = arith.extui %9 : i1 to i32
    %c0_i32_8 = arith.constant 0 : i32
    %11 = arith.cmpi ne, %10, %c0_i32_8 : i32
    scf.if %11 {
      %c0_9 = arith.constant 0 : index
      %c0_10 = arith.constant 0 : index
      %12 = vector.load %arg15[%c0_9, %c0_10] : memref<8x768xf32, #tpu.memory_space<vmem>>, vector<8x768xf32>
      %13 = vector.extract_strided_slice %12 {offsets = [0, 0], sizes = [8, 256], strides = [1, 1]} : vector<8x768xf32> to vector<8x256xf32>
      %c0_11 = arith.constant 0 : index
      %c0_12 = arith.constant 0 : index
      %14 = vector.load %arg3[%c0_11, %c0_12] : memref<1x256xf32, #tpu.memory_space<vmem>>, vector<1x256xf32>
      %15 = vector.broadcast %14 : vector<1x256xf32> to vector<8x256xf32>
      %16 = arith.addf %13, %15 : vector<8x256xf32>
      %17 = vector.shape_cast %16 : vector<8x256xf32> to vector<2x4x256xf32>
      %18 = vector.extract_strided_slice %12 {offsets = [0, 256], sizes = [8, 256], strides = [1, 1]} : vector<8x768xf32> to vector<8x256xf32>
      %c0_13 = arith.constant 0 : index
      %c0_14 = arith.constant 0 : index
      %19 = vector.load %arg4[%c0_13, %c0_14] : memref<1x256xf32, #tpu.memory_space<vmem>>, vector<1x256xf32>
      %20 = vector.broadcast %19 : vector<1x256xf32> to vector<8x256xf32>
      %21 = arith.addf %18, %20 : vector<8x256xf32>
      %22 = vector.shape_cast %21 : vector<8x256xf32> to vector<2x4x256xf32>
      %23 = vector.extract_strided_slice %12 {offsets = [0, 512], sizes = [8, 256], strides = [1, 1]} : vector<8x768xf32> to vector<8x256xf32>
      %24 = vector.shape_cast %23 : vector<8x256xf32> to vector<2x4x256xf32>
      %25 = vector.extract_strided_slice %22 {offsets = [0, 0, 0], sizes = [2, 3, 256], strides = [1, 1, 1]} : vector<2x4x256xf32> to vector<2x3x256xf32>
      %26 = vector.extract_strided_slice %24 {offsets = [0, 1, 0], sizes = [2, 3, 256], strides = [1, 1, 1]} : vector<2x4x256xf32> to vector<2x3x256xf32>
      %27 = arith.addf %25, %26 : vector<2x3x256xf32>
      %28 = vector.extract_strided_slice %17 {offsets = [0, 0, 0], sizes = [2, 4, 128], strides = [1, 1, 1]} : vector<2x4x256xf32> to vector<2x4x128xf32>
      %29 = arith.negf %28 : vector<2x4x128xf32>
      %30 = math.exp %29 : vector<2x4x128xf32>
      %cst_15 = arith.constant 1.000000e+00 : f32
      %31 = vector.broadcast %cst_15 : f32 to vector<2x4x128xf32>
      %32 = arith.addf %31, %30 : vector<2x4x128xf32>
      %33 = arith.divf %31, %32 : vector<2x4x128xf32>
      %34 = vector.extract_strided_slice %17 {offsets = [0, 0, 128], sizes = [2, 4, 128], strides = [1, 1, 1]} : vector<2x4x256xf32> to vector<2x4x128xf32>
      %35 = arith.mulf %33, %34 : vector<2x4x128xf32>
      %36 = vector.extract_strided_slice %27 {offsets = [0, 0, 0], sizes = [2, 3, 128], strides = [1, 1, 1]} : vector<2x3x256xf32> to vector<2x3x128xf32>
      %37 = arith.negf %36 : vector<2x3x128xf32>
      %38 = math.exp %37 : vector<2x3x128xf32>
      %cst_16 = arith.constant 1.000000e+00 : f32
      %39 = vector.broadcast %cst_16 : f32 to vector<2x3x128xf32>
      %40 = arith.addf %39, %38 : vector<2x3x128xf32>
      %41 = arith.divf %39, %40 : vector<2x3x128xf32>
      %42 = vector.extract_strided_slice %27 {offsets = [0, 0, 128], sizes = [2, 3, 128], strides = [1, 1, 1]} : vector<2x3x256xf32> to vector<2x3x128xf32>
      %43 = arith.mulf %41, %42 : vector<2x3x128xf32>
      %cst_17 = arith.constant dense<0xFF800000> : vector<2x128xf32>
      %44 = vector.multi_reduction <maximumf>, %35, %cst_17 [1] : vector<2x4x128xf32> to vector<2x128xf32>
      %cst_18 = arith.constant dense<0xFF800000> : vector<2x128xf32>
      %45 = vector.multi_reduction <maximumf>, %43, %cst_18 [1] : vector<2x3x128xf32> to vector<2x128xf32>
      %c0_19 = arith.constant 0 : index
      %c0_20 = arith.constant 0 : index
      %46 = vector.load %arg5[%c0_19, %c0_20] : memref<1x128xf32, #tpu.memory_space<vmem>>, vector<1x128xf32>
      %47 = vector.broadcast %46 : vector<1x128xf32> to vector<2x128xf32>
      %48 = arith.mulf %44, %47 : vector<2x128xf32>
      %c0_21 = arith.constant 0 : index
      %c0_22 = arith.constant 0 : index
      %49 = vector.load %arg6[%c0_21, %c0_22] : memref<1x128xf32, #tpu.memory_space<vmem>>, vector<1x128xf32>
      %50 = vector.broadcast %49 : vector<1x128xf32> to vector<2x128xf32>
      %51 = arith.addf %48, %50 : vector<2x128xf32>
      %c0_23 = arith.constant 0 : index
      %c0_24 = arith.constant 0 : index
      %52 = vector.load %arg9[%c0_23, %c0_24] : memref<128x128xf32, #tpu.memory_space<vmem>>, vector<128x128xf32>
      %cst_25 = arith.constant dense<0.000000e+00> : vector<2x128xf32>
      %53 = tpu.matmul %51, %52, %cst_25 {dimension_numbers = #tpu.dot_dimension_numbers<[1], [0], [0], [1], [0, 0, 1, 1], [], []>} : vector<2x128xf32>, vector<128x128xf32>, vector<2x128xf32> -> vector<2x128xf32>
      %c0_26 = arith.constant 0 : index
      %c0_27 = arith.constant 0 : index
      %54 = vector.load %arg7[%c0_26, %c0_27] : memref<1x128xf32, #tpu.memory_space<vmem>>, vector<1x128xf32>
      %55 = vector.broadcast %54 : vector<1x128xf32> to vector<2x128xf32>
      %56 = arith.mulf %45, %55 : vector<2x128xf32>
      %c0_28 = arith.constant 0 : index
      %c0_29 = arith.constant 0 : index
      %57 = vector.load %arg8[%c0_28, %c0_29] : memref<1x128xf32, #tpu.memory_space<vmem>>, vector<1x128xf32>
      %58 = vector.broadcast %57 : vector<1x128xf32> to vector<2x128xf32>
      %59 = arith.addf %56, %58 : vector<2x128xf32>
      %c0_30 = arith.constant 0 : index
      %c0_31 = arith.constant 0 : index
      %60 = vector.load %arg10[%c0_30, %c0_31] : memref<128x128xf32, #tpu.memory_space<vmem>>, vector<128x128xf32>
      %cst_32 = arith.constant dense<0.000000e+00> : vector<2x128xf32>
      %61 = tpu.matmul %59, %60, %cst_32 {dimension_numbers = #tpu.dot_dimension_numbers<[1], [0], [0], [1], [0, 0, 1, 1], [], []>} : vector<2x128xf32>, vector<128x128xf32>, vector<2x128xf32> -> vector<2x128xf32>
      %62 = arith.addf %53, %61 : vector<2x128xf32>
      %c0_33 = arith.constant 0 : index
      %c0_34 = arith.constant 0 : index
      %63 = vector.load %arg11[%c0_33, %c0_34] : memref<1x128xf32, #tpu.memory_space<vmem>>, vector<1x128xf32>
      %64 = vector.broadcast %63 : vector<1x128xf32> to vector<2x128xf32>
      %65 = arith.addf %62, %64 : vector<2x128xf32>
      %cst_35 = arith.constant 0.000000e+00 : f32
      %66 = vector.broadcast %cst_35 : f32 to vector<2x128xf32>
      %67 = arith.maximumf %65, %66 : vector<2x128xf32>
      %c0_36 = arith.constant 0 : index
      %c0_37 = arith.constant 0 : index
      %68 = vector.load %arg12[%c0_36, %c0_37] : memref<1x128xf32, #tpu.memory_space<vmem>>, vector<1x128xf32>
      %69 = vector.broadcast %68 : vector<1x128xf32> to vector<2x128xf32>
      %70 = arith.mulf %67, %69 : vector<2x128xf32>
      %cst_38 = arith.constant dense<0.000000e+00> : vector<2xf32>
      %71 = vector.multi_reduction <add>, %70, %cst_38 [1] : vector<2x128xf32> to vector<2xf32>
      %72 = vector.shape_cast %71 : vector<2xf32> to vector<2x1xf32>
      %c0_39 = arith.constant 0 : index
      %c0_40 = arith.constant 0 : index
      %73 = vector.load %arg13[%c0_39, %c0_40] : memref<1x1xf32, #tpu.memory_space<vmem>>, vector<1x1xf32>
      %74 = vector.broadcast %73 : vector<1x1xf32> to vector<2x1xf32>
      %75 = arith.addf %72, %74 : vector<2x1xf32>
      %76 = arith.negf %75 : vector<2x1xf32>
      %77 = math.exp %76 : vector<2x1xf32>
      %cst_41 = arith.constant 1.000000e+00 : f32
      %78 = vector.broadcast %cst_41 : f32 to vector<2x1xf32>
      %79 = arith.addf %78, %77 : vector<2x1xf32>
      %80 = arith.divf %78, %79 : vector<2x1xf32>
      %c0_42 = arith.constant 0 : index
      %c0_43 = arith.constant 0 : index
      %81 = vector.load %arg14[%c0_42, %c0_43] : memref<2x1xf32, #tpu.memory_space<vmem>>, vector<2x1xf32>
      tpu.vector_store %arg14[%c0_42, %c0_43], %80 {strides = array<i32>} : memref<2x1xf32, #tpu.memory_space<vmem>>, vector<2x1xf32>,
    } else {
    }
    return
  }
  func.func @transform_0(%arg0: i32) -> (i32, i32) {
    %c0_i32 = arith.constant 0 : i32
    %c0_i32_0 = arith.constant 0 : i32
    return %c0_i32, %arg0 : i32, i32
  }
  func.func @transform_1(%arg0: i32) -> (i32, i32) {
    %c0_i32 = arith.constant 0 : i32
    %c0_i32_0 = arith.constant 0 : i32
    return %arg0, %c0_i32 : i32, i32
  }
  func.func @transform_2(%arg0: i32) -> (i32, i32) {
    %c0_i32 = arith.constant 0 : i32
    %c0_i32_0 = arith.constant 0 : i32
    %c0_i32_1 = arith.constant 0 : i32
    return %c0_i32, %c0_i32_0 : i32, i32
  }
  func.func @transform_3(%arg0: i32) -> (i32, i32) {
    %c0_i32 = arith.constant 0 : i32
    %c0_i32_0 = arith.constant 0 : i32
    %c0_i32_1 = arith.constant 0 : i32
    return %c0_i32, %c0_i32_0 : i32, i32
  }
  func.func @transform_4(%arg0: i32) -> (i32, i32) {
    %c0_i32 = arith.constant 0 : i32
    %c0_i32_0 = arith.constant 0 : i32
    %c0_i32_1 = arith.constant 0 : i32
    return %c0_i32, %c0_i32_0 : i32, i32
  }
  func.func @transform_5(%arg0: i32) -> (i32, i32) {
    %c0_i32 = arith.constant 0 : i32
    %c0_i32_0 = arith.constant 0 : i32
    %c0_i32_1 = arith.constant 0 : i32
    return %c0_i32, %c0_i32_0 : i32, i32
  }
  func.func @transform_6(%arg0: i32) -> (i32, i32) {
    %c0_i32 = arith.constant 0 : i32
    %c0_i32_0 = arith.constant 0 : i32
    %c0_i32_1 = arith.constant 0 : i32
    return %c0_i32, %c0_i32_0 : i32, i32
  }
  func.func @transform_7(%arg0: i32) -> (i32, i32) {
    %c0_i32 = arith.constant 0 : i32
    %c0_i32_0 = arith.constant 0 : i32
    %c0_i32_1 = arith.constant 0 : i32
    return %c0_i32, %c0_i32_0 : i32, i32
  }
  func.func @transform_8(%arg0: i32) -> (i32, i32) {
    %c0_i32 = arith.constant 0 : i32
    %c0_i32_0 = arith.constant 0 : i32
    %c0_i32_1 = arith.constant 0 : i32
    return %c0_i32, %c0_i32_0 : i32, i32
  }
  func.func @transform_9(%arg0: i32) -> (i32, i32) {
    %c0_i32 = arith.constant 0 : i32
    %c0_i32_0 = arith.constant 0 : i32
    %c0_i32_1 = arith.constant 0 : i32
    return %c0_i32, %c0_i32_0 : i32, i32
  }
  func.func @transform_10(%arg0: i32) -> (i32, i32) {
    %c0_i32 = arith.constant 0 : i32
    %c0_i32_0 = arith.constant 0 : i32
    %c0_i32_1 = arith.constant 0 : i32
    return %c0_i32, %c0_i32_0 : i32, i32
  }
  func.func @transform_11(%arg0: i32) -> (i32, i32) {
    %c0_i32 = arith.constant 0 : i32
    %c0_i32_0 = arith.constant 0 : i32
    %c0_i32_1 = arith.constant 0 : i32
    return %c0_i32, %c0_i32_0 : i32, i32
  }
  func.func @transform_12(%arg0: i32) -> (i32, i32) {
    %c0_i32 = arith.constant 0 : i32
    %c0_i32_0 = arith.constant 0 : i32
    %c0_i32_1 = arith.constant 0 : i32
    return %c0_i32, %c0_i32_0 : i32, i32
  }
  func.func @transform_13(%arg0: i32) -> (i32, i32) {
    %c0_i32 = arith.constant 0 : i32
    %c0_i32_0 = arith.constant 0 : i32
    %c0_i32_1 = arith.constant 0 : i32
    return %c0_i32, %c0_i32_0 : i32, i32
  }
}

</mosaic_0001>

<llo_original>
// kernel: tpu_custom_call.1
$region0: #{tpu_custom_call.1}
  #allocation0 [shape = 'u32[]', space=smem, size = 0x4, offset = 0x4, fixed_abs, tag = 'smem constant byte address 0x4 - core index']
  #allocation1 [shape = 'u32[144,128]{1,0:T(1,128)}', space=vmem, size = 0x12000, scoped, tag = 'internal scratch']
  #allocation2 [shape = 'f32[8,768]{1,0:T(8,128)}', space=vmem, size = 0x6000, scoped, tag = 'scratch operand']
  #allocation3 [shape = 'f32[1,1]{1,0:T(1,128)S(1)}', space=vmem, size = 0x200, scoped, tag = 'scoped memory for tpu_custom_call.1']
  %s0 = inlined_call_operand.hbm [shape: bf16[8,4096], index: 0, kind: input, shape index: {}]
  %s1 = inlined_call_operand.hbm [shape: bf16[4096,768], index: 1, kind: input, shape index: {}]
  %s2 = inlined_call_operand.hbm [shape: f32[1,256], index: 2, kind: input, shape index: {}]
  %s3 = inlined_call_operand.hbm [shape: f32[1,256], index: 3, kind: input, shape index: {}]
  %s4 = inlined_call_operand.hbm [shape: f32[1,128], index: 4, kind: input, shape index: {}]
  %s5 = inlined_call_operand.hbm [shape: f32[1,128], index: 5, kind: input, shape index: {}]
  %s6 = inlined_call_operand.hbm [shape: f32[1,128], index: 6, kind: input, shape index: {}]
  %s7 = inlined_call_operand.hbm [shape: f32[1,128], index: 7, kind: input, shape index: {}]
  %s8 = inlined_call_operand.hbm [shape: f32[128,128], index: 8, kind: input, shape index: {}]
  %s9 = inlined_call_operand.hbm [shape: f32[128,128], index: 9, kind: input, shape index: {}]
  %s10 = inlined_call_operand.hbm [shape: f32[1,128], index: 10, kind: input, shape index: {}]
  %s11 = inlined_call_operand.hbm [shape: f32[1,128], index: 11, kind: input, shape index: {}]
  %s12 = inlined_call_operand.<no memory space> [shape: f32[1,1], index: 12, kind: input, shape index: {}]
  %s13 = inlined_call_operand.vmem [shape: f32[2,1], index: 13, kind: output, shape index: {}]
  %s14 = sld [smem:[#allocation0]]
  $region141: #{tpu_custom_call.1} parent=0
    _
  %s16 = ssub.s32 1, %s14
  %s17 = scalar_select 0, %s16, %s14
  %v18 = vstv %s12
  %19 = vst [vmem:[#allocation3] sm:$0x1] %v18
  $region1: #{tpu_custom_call.1} parent=0
    #allocation4 [shape = 'u8[32768]{0}', space=vmem, size = 0x8000, scoped, tag = 'input window, operand 0']
    #allocation5 [shape = 's32[2]{0}', space=sflag, size = 0x8, scoped, tag = 'scoped memory for tpu_custom_call.1']
    #allocation6 [shape = 'u8[3145728]{0}', space=vmem, size = 0x300000, scoped, tag = 'input window, operand 1']
    #allocation7 [shape = 's32[2]{0}', space=sflag, size = 0x8, scoped, tag = 'scoped memory for tpu_custom_call.1']
    #allocation8 [shape = 'u8[1024]{0}', space=vmem, size = 0x400, scoped, tag = 'input window, operand 2, single buffered']
    #allocation9 [shape = 'u8[1024]{0}', space=vmem, size = 0x400, scoped, tag = 'input window, operand 3, single buffered']
    #allocation10 [shape = 's32[1]{0}', space=sflag, size = 0x4, scoped, tag = 'scoped memory for tpu_custom_call.1']
    #allocation11 [shape = 'u8[512]{0}', space=vmem, size = 0x400, scoped, tag = 'input window, operand 4, single buffered']
    #allocation12 [shape = 'u8[512]{0}', space=vmem, size = 0x400, scoped, tag = 'input window, operand 5, single buffered']
    #allocation13 [shape = 's32[1]{0}', space=sflag, size = 0x4, scoped, tag = 'scoped memory for tpu_custom_call.1']
    #allocation14 [shape = 'u8[512]{0}', space=vmem, size = 0x400, scoped, tag = 'input window, operand 6, single buffered']
    #allocation15 [shape = 'u8[512]{0}', space=vmem, size = 0x400, scoped, tag = 'input window, operand 7, single buffered']
    #allocation16 [shape = 's32[1]{0}', space=sflag, size = 0x4, scoped, tag = 'scoped memory for tpu_custom_call.1']
    #allocation17 [shape = 'u8[65536]{0}', space=vmem, size = 0x10000, scoped, tag = 'input window, operand 8, single buffered']
    #allocation18 [shape = 'u8[65536]{0}', space=vmem, size = 0x10000, scoped, tag = 'input window, operand 9, single buffered']
    #allocation19 [shape = 's32[1]{0}', space=sflag, size = 0x4, scoped, tag = 'scoped memory for tpu_custom_call.1']
    #allocation20 [shape = 'u8[512]{0}', space=vmem, size = 0x400, scoped, tag = 'input window, operand 10, single buffered']
    #allocation21 [shape = 'u8[512]{0}', space=vmem, size = 0x400, scoped, tag = 'input window, operand 11, single buffered']
    #allocation22 [shape = 's32[1]{0}', space=sflag, size = 0x4, scoped, tag = 'scoped memory for tpu_custom_call.1']
    %20 = vsyncpa [#allocation5], 0
    %s21 = scalar_lea.sflag [#allocation5], 1
    %22 = vsyncpa %s21, 0
    %23 = vsyncpa [#allocation7], 0
    %s24 = scalar_lea.sflag [#allocation7], 1
    %25 = vsyncpa %s24, 0
    %26 = vsyncpa [#allocation10], 0
    %27 = vsyncpa [#allocation13], 0
    %28 = vsyncpa [#allocation16], 0
    %29 = vsyncpa [#allocation19], 0
    %30 = vsyncpa [#allocation22], 0
    loop: start=0, step=1, limit=6
    $region2: #{tpu_custom_call.1} parent=1 // loop_pre_header
      _
    $region3: #{tpu_custom_call.1} parent=1 // loop_header
      %s32 = sphi 0, %s36
      %p33 = scmp.ge.s32.totalorder %s32, 6
      %s42 = sphi 0, %s44
      %s45 = sphi 0, %s42
      %s46 = sphi 0, %s45
      %s62 = sphi 0, %s46
      %s68 = sphi 0, %s70
      %s71 = sphi 0, %s68
      %s72 = sphi 0, %s71
      %s88 = sphi 0, %s72
      %s92 = sphi 0, %s92
      %s94 = sphi 0, %s92
      %s95 = sphi 0, %s94
      %s109 = sphi 0, %s95
      %s113 = sphi 0, %s113
      %s115 = sphi 0, %s113
      %s116 = sphi 0, %s115
      %s130 = sphi 0, %s116
      %s134 = sphi 0, %s134
      %s136 = sphi 0, %s134
      %s137 = sphi 0, %s136
      %s151 = sphi 0, %s137
      %s155 = sphi 0, %s155
      %s157 = sphi 0, %s155
      %s158 = sphi 0, %s157
      %s172 = sphi 0, %s158
      %s176 = sphi 0, %s176
      %s178 = sphi 0, %s176
      %s179 = sphi 0, %s178
      %s193 = sphi 0, %s179
      %s197 = sphi 0, %s197
      %s199 = sphi 0, %s197
      %s200 = sphi 0, %s199
      %s214 = sphi 0, %s200
      %s218 = sphi 0, %s218
      %s220 = sphi 0, %s218
      %s221 = sphi 0, %s220
      %s235 = sphi 0, %s221
      %s239 = sphi 0, %s239
      %s241 = sphi 0, %s239
      %s242 = sphi 0, %s241
      %s256 = sphi 0, %s242
      %s260 = sphi 0, %s260
      %s262 = sphi 0, %s260
      %s263 = sphi 0, %s262
      %s277 = sphi 0, %s263
      %s281 = sphi 0, %s281
      %s283 = sphi 0, %s281
      %s284 = sphi 0, %s283
      %s298 = sphi 0, %s284
      %s302 = sphi 0, %s302
      %s304 = sphi 0, %s302
      %s305 = sphi 0, %s304
      %s319 = sphi 0, %s305
      %s323 = sphi 0, %s323
      %s325 = sphi 0, %s323
      %s326 = sphi 0, %s325
      %s340 = sphi 0, %s326
    $region4: #{tpu_custom_call.1} parent=1 // loop_header_branch
      %35 = sbr.rel (%p33) target = $region8
    $region5: #{tpu_custom_call.1} parent=1 // loop_body
      %s37 = ssub.s32 %s32, 1
      %s38 = ssub.s32 %s32, 2
      %s39 = sadd.s32 %s32, 1
      %s40 = ssub.s32 %s32, %s39
      %p41 = scmp.eq.s32.totalorder %s40, 0
      %s43 = sadd.s32 %s42, 1
      %s44 = scalar_select %p41, %s42, %s43
      %p47 = pneg %p41
      %p48 = scmp.eq.s32.totalorder %s32, 3
      %p49 = por %p47, %p48
      %p50 = scmp.ne.s32.totalorder %s42, %s45
      %p51 = scmp.eq.s32.totalorder %s32, 0
      %p52 = por %p50, %p51
      %p53 = scmp.ne.s32.totalorder %s42, %s45
      %p54 = scmp.eq.s32.totalorder %s37, 3
      %p55 = por %p53, %p54
      %p56 = scmp.ne.s32.totalorder %s45, %s46
      %p57 = scmp.eq.s32.totalorder %s37, 0
      %p58 = por %p56, %p57
      %p59 = scmp.ne.s32.totalorder %s45, %s46
      %p60 = scmp.eq.s32.totalorder %s38, 3
      %p61 = por %p59, %p60
      %p63 = scmp.ne.s32.totalorder %s46, %s62
      %p64 = scmp.eq.s32.totalorder %s38, 0
      %p65 = por %p63, %p64
      %s66 = ssub.s32 %s32, %s39
      %p67 = scmp.eq.s32.totalorder %s66, 0
      %s69 = sadd.s32 %s68, 1
      %s70 = scalar_select %p67, %s68, %s69
      %p73 = pneg %p67
      %p74 = scmp.eq.s32.totalorder %s32, 3
      %p75 = por %p73, %p74
      %p76 = scmp.ne.s32.totalorder %s68, %s71
      %p77 = scmp.eq.s32.totalorder %s32, 0
      %p78 = por %p76, %p77
      %p79 = scmp.ne.s32.totalorder %s68, %s71
      %p80 = scmp.eq.s32.totalorder %s37, 3
      %p81 = por %p79, %p80
      %p82 = scmp.ne.s32.totalorder %s71, %s72
      %p83 = scmp.eq.s32.totalorder %s37, 0
      %p84 = por %p82, %p83
      %p85 = scmp.ne.s32.totalorder %s71, %s72
      %p86 = scmp.eq.s32.totalorder %s38, 3
      %p87 = por %p85, %p86
      %p89 = scmp.ne.s32.totalorder %s72, %s88
      %p90 = scmp.eq.s32.totalorder %s38, 0
      %p91 = por %p89, %p90
      %s93 = sadd.s32 %s92, 1
      %p96 = scmp.eq.s32.totalorder %s32, 3
      %p97 = scmp.ne.s32.totalorder %s92, %s94
      %p98 = scmp.eq.s32.totalorder %s32, 0
      %p99 = por %p97, %p98
      %p100 = scmp.ne.s32.totalorder %s92, %s94
      %p101 = scmp.eq.s32.totalorder %s37, 3
      %p102 = por %p100, %p101
      %p103 = scmp.ne.s32.totalorder %s94, %s95
      %p104 = scmp.eq.s32.totalorder %s37, 0
      %p105 = por %p103, %p104
      %p106 = scmp.ne.s32.totalorder %s94, %s95
      %p107 = scmp.eq.s32.totalorder %s38, 3
      %p108 = por %p106, %p107
      %p110 = scmp.ne.s32.totalorder %s95, %s109
      %p111 = scmp.eq.s32.totalorder %s38, 0
      %p112 = por %p110, %p111
      %s114 = sadd.s32 %s113, 1
      %p117 = scmp.eq.s32.totalorder %s32, 3
      %p118 = scmp.ne.s32.totalorder %s113, %s115
      %p119 = scmp.eq.s32.totalorder %s32, 0
      %p120 = por %p118, %p119
      %p121 = scmp.ne.s32.totalorder %s113, %s115
      %p122 = scmp.eq.s32.totalorder %s37, 3
      %p123 = por %p121, %p122
      %p124 = scmp.ne.s32.totalorder %s115, %s116
      %p125 = scmp.eq.s32.totalorder %s37, 0
      %p126 = por %p124, %p125
      %p127 = scmp.ne.s32.totalorder %s115, %s116
      %p128 = scmp.eq.s32.totalorder %s38, 3
      %p129 = por %p127, %p128
      %p131 = scmp.ne.s32.totalorder %s116, %s130
      %p132 = scmp.eq.s32.totalorder %s38, 0
      %p133 = por %p131, %p132
      %s135 = sadd.s32 %s134, 1
      %p138 = scmp.eq.s32.totalorder %s32, 3
      %p139 = scmp.ne.s32.totalorder %s134, %s136
      %p140 = scmp.eq.s32.totalorder %s32, 0
      %p141 = por %p139, %p140
      %p142 = scmp.ne.s32.totalorder %s134, %s136
      %p143 = scmp.eq.s32.totalorder %s37, 3
      %p144 = por %p142, %p143
      %p145 = scmp.ne.s32.totalorder %s136, %s137
      %p146 = scmp.eq.s32.totalorder %s37, 0
      %p147 = por %p145, %p146
      %p148 = scmp.ne.s32.totalorder %s136, %s137
      %p149 = scmp.eq.s32.totalorder %s38, 3
      %p150 = por %p148, %p149
      %p152 = scmp.ne.s32.totalorder %s137, %s151
      %p153 = scmp.eq.s32.totalorder %s38, 0
      %p154 = por %p152, %p153
      %s156 = sadd.s32 %s155, 1
      %p159 = scmp.eq.s32.totalorder %s32, 3
      %p160 = scmp.ne.s32.totalorder %s155, %s157
      %p161 = scmp.eq.s32.totalorder %s32, 0
      %p162 = por %p160, %p161
      %p163 = scmp.ne.s32.totalorder %s155, %s157
      %p164 = scmp.eq.s32.totalorder %s37, 3
      %p165 = por %p163, %p164
      %p166 = scmp.ne.s32.totalorder %s157, %s158
      %p167 = scmp.eq.s32.totalorder %s37, 0
      %p168 = por %p166, %p167
      %p169 = scmp.ne.s32.totalorder %s157, %s158
      %p170 = scmp.eq.s32.totalorder %s38, 3
      %p171 = por %p169, %p170
      %p173 = scmp.ne.s32.totalorder %s158, %s172
      %p174 = scmp.eq.s32.totalorder %s38, 0
      %p175 = por %p173, %p174
      %s177 = sadd.s32 %s176, 1
      %p180 = scmp.eq.s32.totalorder %s32, 3
      %p181 = scmp.ne.s32.totalorder %s176, %s178
      %p182 = scmp.eq.s32.totalorder %s32, 0
      %p183 = por %p181, %p182
      %p184 = scmp.ne.s32.totalorder %s176, %s178
      %p185 = scmp.eq.s32.totalorder %s37, 3
      %p186 = por %p184, %p185
      %p187 = scmp.ne.s32.totalorder %s178, %s179
      %p188 = scmp.eq.s32.totalorder %s37, 0
      %p189 = por %p187, %p188
      %p190 = scmp.ne.s32.totalorder %s178, %s179
      %p191 = scmp.eq.s32.totalorder %s38, 3
      %p192 = por %p190, %p191
      %p194 = scmp.ne.s32.totalorder %s179, %s193
      %p195 = scmp.eq.s32.totalorder %s38, 0
      %p196 = por %p194, %p195
      %s198 = sadd.s32 %s197, 1
      %p201 = scmp.eq.s32.totalorder %s32, 3
      %p202 = scmp.ne.s32.totalorder %s197, %s199
      %p203 = scmp.eq.s32.totalorder %s32, 0
      %p204 = por %p202, %p203
      %p205 = scmp.ne.s32.totalorder %s197, %s199
      %p206 = scmp.eq.s32.totalorder %s37, 3
      %p207 = por %p205, %p206
      %p208 = scmp.ne.s32.totalorder %s199, %s200
      %p209 = scmp.eq.s32.totalorder %s37, 0
      %p210 = por %p208, %p209
      %p211 = scmp.ne.s32.totalorder %s199, %s200
      %p212 = scmp.eq.s32.totalorder %s38, 3
      %p213 = por %p211, %p212
      %p215 = scmp.ne.s32.totalorder %s200, %s214
      %p216 = scmp.eq.s32.totalorder %s38, 0
      %p217 = por %p215, %p216
      %s219 = sadd.s32 %s218, 1
      %p222 = scmp.eq.s32.totalorder %s32, 3
      %p223 = scmp.ne.s32.totalorder %s218, %s220
      %p224 = scmp.eq.s32.totalorder %s32, 0
      %p225 = por %p223, %p224
      %p226 = scmp.ne.s32.totalorder %s218, %s220
      %p227 = scmp.eq.s32.totalorder %s37, 3
      %p228 = por %p226, %p227
      %p229 = scmp.ne.s32.totalorder %s220, %s221
      %p230 = scmp.eq.s32.totalorder %s37, 0
      %p231 = por %p229, %p230
      %p232 = scmp.ne.s32.totalorder %s220, %s221
      %p233 = scmp.eq.s32.totalorder %s38, 3
      %p234 = por %p232, %p233
      %p236 = scmp.ne.s32.totalorder %s221, %s235
      %p237 = scmp.eq.s32.totalorder %s38, 0
      %p238 = por %p236, %p237
      %s240 = sadd.s32 %s239, 1
      %p243 = scmp.eq.s32.totalorder %s32, 3
      %p244 = scmp.ne.s32.totalorder %s239, %s241
      %p245 = scmp.eq.s32.totalorder %s32, 0
      %p246 = por %p244, %p245
      %p247 = scmp.ne.s32.totalorder %s239, %s241
      %p248 = scmp.eq.s32.totalorder %s37, 3
      %p249 = por %p247, %p248
      %p250 = scmp.ne.s32.totalorder %s241, %s242
      %p251 = scmp.eq.s32.totalorder %s37, 0
      %p252 = por %p250, %p251
      %p253 = scmp.ne.s32.totalorder %s241, %s242
      %p254 = scmp.eq.s32.totalorder %s38, 3
      %p255 = por %p253, %p254
      %p257 = scmp.ne.s32.totalorder %s242, %s256
      %p258 = scmp.eq.s32.totalorder %s38, 0
      %p259 = por %p257, %p258
      %s261 = sadd.s32 %s260, 1
      %p264 = scmp.eq.s32.totalorder %s32, 3
      %p265 = scmp.ne.s32.totalorder %s260, %s262
      %p266 = scmp.eq.s32.totalorder %s32, 0
      %p267 = por %p265, %p266
      %p268 = scmp.ne.s32.totalorder %s260, %s262
      %p269 = scmp.eq.s32.totalorder %s37, 3
      %p270 = por %p268, %p269
      %p271 = scmp.ne.s32.totalorder %s262, %s263
      %p272 = scmp.eq.s32.totalorder %s37, 0
      %p273 = por %p271, %p272
      %p274 = scmp.ne.s32.totalorder %s262, %s263
      %p275 = scmp.eq.s32.totalorder %s38, 3
      %p276 = por %p274, %p275
      %p278 = scmp.ne.s32.totalorder %s263, %s277
      %p279 = scmp.eq.s32.totalorder %s38, 0
      %p280 = por %p278, %p279
      %s282 = sadd.s32 %s281, 1
      %p285 = scmp.eq.s32.totalorder %s32, 3
      %p286 = scmp.ne.s32.totalorder %s281, %s283
      %p287 = scmp.eq.s32.totalorder %s32, 0
      %p288 = por %p286, %p287
      %p289 = scmp.ne.s32.totalorder %s281, %s283
      %p290 = scmp.eq.s32.totalorder %s37, 3
      %p291 = por %p289, %p290
      %p292 = scmp.ne.s32.totalorder %s283, %s284
      %p293 = scmp.eq.s32.totalorder %s37, 0
      %p294 = por %p292, %p293
      %p295 = scmp.ne.s32.totalorder %s283, %s284
      %p296 = scmp.eq.s32.totalorder %s38, 3
      %p297 = por %p295, %p296
      %p299 = scmp.ne.s32.totalorder %s284, %s298
      %p300 = scmp.eq.s32.totalorder %s38, 0
      %p301 = por %p299, %p300
      %s303 = sadd.s32 %s302, 1
      %p306 = scmp.eq.s32.totalorder %s32, 3
      %p307 = scmp.ne.s32.totalorder %s302, %s304
      %p308 = scmp.eq.s32.totalorder %s32, 0
      %p309 = por %p307, %p308
      %p310 = scmp.ne.s32.totalorder %s302, %s304
      %p311 = scmp.eq.s32.totalorder %s37, 3
      %p312 = por %p310, %p311
      %p313 = scmp.ne.s32.totalorder %s304, %s305
      %p314 = scmp.eq.s32.totalorder %s37, 0
      %p315 = por %p313, %p314
      %p316 = scmp.ne.s32.totalorder %s304, %s305
      %p317 = scmp.eq.s32.totalorder %s38, 3
      %p318 = por %p316, %p317
      %p320 = scmp.ne.s32.totalorder %s305, %s319
      %p321 = scmp.eq.s32.totalorder %s38, 0
      %p322 = por %p320, %p321
      %s324 = sadd.s32 %s323, 1
      %p327 = scmp.eq.s32.totalorder %s32, 3
      %p328 = scmp.ne.s32.totalorder %s323, %s325
      %p329 = scmp.eq.s32.totalorder %s32, 0
      %p330 = por %p328, %p329
      %p331 = scmp.ne.s32.totalorder %s323, %s325
      %p332 = scmp.eq.s32.totalorder %s37, 3
      %p333 = por %p331, %p332
      %p334 = scmp.ne.s32.totalorder %s325, %s326
      %p335 = scmp.eq.s32.totalorder %s37, 0
      %p336 = por %p334, %p335
      %p337 = scmp.ne.s32.totalorder %s325, %s326
      %p338 = scmp.eq.s32.totalorder %s38, 3
      %p339 = por %p337, %p338
      %p341 = scmp.ne.s32.totalorder %s326, %s340
      %p342 = scmp.eq.s32.totalorder %s38, 0
      %p343 = por %p341, %p342
      %p344 = scmp.le.s32.totalorder 1, %s32
      %p345 = scmp.lt.s32.totalorder %s32, 5
      %p346 = pnand %p344, %p345
      %p347 = pneg %p346
      // Predicated region
      $region9: #{tpu_custom_call.1} parent=5 // pred_check
        _
      $region10: #{tpu_custom_call.1} parent=5 // pred_check_branch
        %349 = sbr.rel (%p346) target = $region12
      $region11: #{tpu_custom_call.1} parent=5 // pred_region
        %s350 = ssub.s32 %s32, 1
        // Predicated region
        $region13: #{tpu_custom_call.1} parent=11 // pred_check
          %p351 = pneg %p105
        $region14: #{tpu_custom_call.1} parent=11 // pred_check_branch
          %353 = sbr.rel (%p351) target = $region16
        $region15: #{tpu_custom_call.1} parent=11 // pred_region
          %s355 = ssub.s32 32, 32
          %356 = vsyncadd [#allocation7], %s355
          %s358 = sshll.u32 [#allocation8], 4
          %s359 = int_to_ptr.vmem [resolvable:$true] %s358
          %361 = dma.hbm_to_vmem [thread:$0]  %s2, 32, %s359, [#allocation7]
        $region16: #{tpu_custom_call.1} parent=11 // pred_fallthru
          _
        // Predicated region
        $region17: #{tpu_custom_call.1} parent=11 // pred_check
          %p362 = pneg %p126
        $region18: #{tpu_custom_call.1} parent=11 // pred_check_branch
          %364 = sbr.rel (%p362) target = $region20
        $region19: #{tpu_custom_call.1} parent=11 // pred_region
          %s366 = ssub.s32 32, 32
          %367 = vsyncadd [#allocation10], %s366
          %s369 = sshll.u32 [#allocation9], 4
          %s370 = int_to_ptr.vmem [resolvable:$true] %s369
          %372 = dma.hbm_to_vmem [thread:$0]  %s3, 32, %s370, [#allocation10]
        $region20: #{tpu_custom_call.1} parent=11 // pred_fallthru
          _
        // Predicated region
        $region21: #{tpu_custom_call.1} parent=11 // pred_check
          %p373 = pneg %p147
        $region22: #{tpu_custom_call.1} parent=11 // pred_check_branch
          %375 = sbr.rel (%p373) target = $region24
        $region23: #{tpu_custom_call.1} parent=11 // pred_region
          %s377 = ssub.s32 16, 16
          %378 = vsyncadd [#allocation10], %s377
          %s380 = sshll.u32 [#allocation11], 4
          %s381 = int_to_ptr.vmem [resolvable:$true] %s380
          %383 = dma.hbm_to_vmem [thread:$0]  %s4, 16, %s381, [#allocation10]
        $region24: #{tpu_custom_call.1} parent=11 // pred_fallthru
          _
        // Predicated region
        $region25: #{tpu_custom_call.1} parent=11 // pred_check
          %p384 = pneg %p168
        $region26: #{tpu_custom_call.1} parent=11 // pred_check_branch
          %386 = sbr.rel (%p384) target = $region28
        $region27: #{tpu_custom_call.1} parent=11 // pred_region
          %s388 = ssub.s32 16, 16
          %389 = vsyncadd [#allocation13], %s388
          %s391 = sshll.u32 [#allocation12], 4
          %s392 = int_to_ptr.vmem [resolvable:$true] %s391
          %394 = dma.hbm_to_vmem [thread:$0]  %s5, 16, %s392, [#allocation13]
        $region28: #{tpu_custom_call.1} parent=11 // pred_fallthru
          _
        // Predicated region
        $region29: #{tpu_custom_call.1} parent=11 // pred_check
          %p395 = pneg %p189
        $region30: #{tpu_custom_call.1} parent=11 // pred_check_branch
          %397 = sbr.rel (%p395) target = $region32
        $region31: #{tpu_custom_call.1} parent=11 // pred_region
          %s399 = ssub.s32 16, 16
          %400 = vsyncadd [#allocation13], %s399
          %s402 = sshll.u32 [#allocation14], 4
          %s403 = int_to_ptr.vmem [resolvable:$true] %s402
          %405 = dma.hbm_to_vmem [thread:$0]  %s6, 16, %s403, [#allocation13]
        $region32: #{tpu_custom_call.1} parent=11 // pred_fallthru
          _
        // Predicated region
        $region33: #{tpu_custom_call.1} parent=11 // pred_check
          %p406 = pneg %p210
        $region34: #{tpu_custom_call.1} parent=11 // pred_check_branch
          %408 = sbr.rel (%p406) target = $region36
        $region35: #{tpu_custom_call.1} parent=11 // pred_region
          %s410 = ssub.s32 16, 16
          %411 = vsyncadd [#allocation16], %s410
          %s413 = sshll.u32 [#allocation15], 4
          %s414 = int_to_ptr.vmem [resolvable:$true] %s413
          %416 = dma.hbm_to_vmem [thread:$0]  %s7, 16, %s414, [#allocation16]
        $region36: #{tpu_custom_call.1} parent=11 // pred_fallthru
          _
        // Predicated region
        $region37: #{tpu_custom_call.1} parent=11 // pred_check
          %p417 = pneg %p231
        $region38: #{tpu_custom_call.1} parent=11 // pred_check_branch
          %419 = sbr.rel (%p417) target = $region40
        $region39: #{tpu_custom_call.1} parent=11 // pred_region
          %s421 = ssub.s32 2048, 2048
          %422 = vsyncadd [#allocation16], %s421
          %s423 = sshll.u32 [#allocation17], 4
          %s424 = int_to_ptr.vmem [resolvable:$true] %s423
          %429 = dma.hbm_to_vmem [thread:$0]  %s8, 2048, %s424, [#allocation16], 128, 128, 8
        $region40: #{tpu_custom_call.1} parent=11 // pred_fallthru
          _
        // Predicated region
        $region41: #{tpu_custom_call.1} parent=11 // pred_check
          %p430 = pneg %p252
        $region42: #{tpu_custom_call.1} parent=11 // pred_check_branch
          %432 = sbr.rel (%p430) target = $region44
        $region43: #{tpu_custom_call.1} parent=11 // pred_region
          %s434 = ssub.s32 2048, 2048
          %435 = vsyncadd [#allocation19], %s434
          %s436 = sshll.u32 [#allocation18], 4
          %s437 = int_to_ptr.vmem [resolvable:$true] %s436
          %442 = dma.hbm_to_vmem [thread:$0]  %s9, 2048, %s437, [#allocation19], 128, 128, 8
        $region44: #{tpu_custom_call.1} parent=11 // pred_fallthru
          _
        // Predicated region
        $region45: #{tpu_custom_call.1} parent=11 // pred_check
          %p443 = pneg %p273
        $region46: #{tpu_custom_call.1} parent=11 // pred_check_branch
          %445 = sbr.rel (%p443) target = $region48
        $region47: #{tpu_custom_call.1} parent=11 // pred_region
          %s447 = ssub.s32 16, 16
          %448 = vsyncadd [#allocation19], %s447
          %s450 = sshll.u32 [#allocation20], 4
          %s451 = int_to_ptr.vmem [resolvable:$true] %s450
          %453 = dma.hbm_to_vmem [thread:$0]  %s10, 16, %s451, [#allocation19]
        $region48: #{tpu_custom_call.1} parent=11 // pred_fallthru
          _
        // Predicated region
        $region49: #{tpu_custom_call.1} parent=11 // pred_check
          %p454 = pneg %p294
        $region50: #{tpu_custom_call.1} parent=11 // pred_check_branch
          %456 = sbr.rel (%p454) target = $region52
        $region51: #{tpu_custom_call.1} parent=11 // pred_region
          %s458 = ssub.s32 16, 16
          %459 = vsyncadd [#allocation22], %s458
          %s461 = sshll.u32 [#allocation21], 4
          %s462 = int_to_ptr.vmem [resolvable:$true] %s461
          %464 = dma.hbm_to_vmem [thread:$0]  %s11, 16, %s462, [#allocation22]
        $region52: #{tpu_custom_call.1} parent=11 // pred_fallthru
          _
        // Predicated region
        $region53: #{tpu_custom_call.1} parent=11 // pred_check
          %p465 = pneg %p315
        $region54: #{tpu_custom_call.1} parent=11 // pred_check_branch
          %467 = sbr.rel (%p465) target = $region56
        $region55: #{tpu_custom_call.1} parent=11 // pred_region
          _
        $region56: #{tpu_custom_call.1} parent=11 // pred_fallthru
          _
      $region12: #{tpu_custom_call.1} parent=5 // pred_fallthru
        _
      %p468 = scmp.lt.s32.totalorder %s32, 4
      // Predicated region
      $region57: #{tpu_custom_call.1} parent=5 // pred_check
        %p469 = pneg %p468
      $region58: #{tpu_custom_call.1} parent=5 // pred_check_branch
        %471 = sbr.rel (%p469) target = $region60
      $region59: #{tpu_custom_call.1} parent=5 // pred_region
        // Predicated region
        $region61: #{tpu_custom_call.1} parent=59 // pred_check
          %p472 = pneg %p52
        $region62: #{tpu_custom_call.1} parent=59 // pred_check_branch
          %474 = sbr.rel (%p472) target = $region64
        $region63: #{tpu_custom_call.1} parent=59 // pred_region
          %s475 = sand.u32 %s42, 1
          %s476 = scalar_lea.sflag [#allocation5], %s475
          %s477 = sand.u32 %s42, 1
          %s478 = smul.addr %s477, 32
          %s479 = scalar_lea.vmem [#allocation4], %s478
          %s480 = smul.u32 8, %s32
          %s482 = ssub.s32 512, 512
          %483 = vsyncadd %s476, %s482
          %s484 = smul.addr %s480, 64
          %s485 = scalar_lea.hbm %s0, %s484
          %s487 = sshll.u32 %s479, 4
          %s488 = int_to_ptr.vmem [resolvable:$true] %s487
          %490 = dma.hbm_to_vmem [thread:$0]  %s485, 512, %s488, %s476
        $region64: #{tpu_custom_call.1} parent=59 // pred_fallthru
          _
        // Predicated region
        $region65: #{tpu_custom_call.1} parent=59 // pred_check
          %p491 = pneg %p78
        $region66: #{tpu_custom_call.1} parent=59 // pred_check_branch
          %493 = sbr.rel (%p491) target = $region68
        $region67: #{tpu_custom_call.1} parent=59 // pred_region
          %s494 = sand.u32 %s32, 1
          %s495 = scalar_lea.sflag [#allocation7], %s494
          %s496 = sand.u32 %s68, 1
          %s497 = smul.addr %s496, 3072
          %s498 = scalar_lea.vmem [#allocation6], %s497
          %s499 = smul.u32 128, %s32
          %s501 = ssub.s32 49152, 49152
          %502 = vsyncadd %s495, %s501
          %s503 = smul.addr %s499, 6
          %s504 = smul.addr %s503, 64
          %s505 = scalar_lea.hbm %s1, %s504
          %s506 = sshll.u32 %s498, 4
          %s507 = int_to_ptr.vmem [resolvable:$true] %s506
          %512 = dma.hbm_to_vmem [thread:$0]  %s505, 49152, %s507, %s495, 384, 384, 24
        $region68: #{tpu_custom_call.1} parent=59 // pred_fallthru
          _
      $region60: #{tpu_custom_call.1} parent=5 // pred_fallthru
        _
      %p513 = scmp.le.s32.totalorder 1, %s32
      %p514 = scmp.lt.s32.totalorder %s32, 5
      %p515 = pnand %p513, %p514
      %p516 = pneg %p515
      // Predicated region
      $region69: #{tpu_custom_call.1} parent=5 // pred_check
        _
      $region70: #{tpu_custom_call.1} parent=5 // pred_check_branch
        %518 = sbr.rel (%p515) target = $region72
      $region71: #{tpu_custom_call.1} parent=5 // pred_region
        %s519 = ssub.s32 %s32, 1
        %s520 = sand.u32 %s45, 1
        %s521 = scalar_lea.sflag [#allocation5], %s520
        %s522 = sand.u32 %s45, 1
        %s523 = smul.addr %s522, 32
        %s524 = scalar_lea.vmem [#allocation4], %s523
        // Predicated region
        $region73: #{tpu_custom_call.1} parent=71 // pred_check
          %p525 = pneg %p58
        $region74: #{tpu_custom_call.1} parent=71 // pred_check_branch
          %527 = sbr.rel (%p525) target = $region76
        $region75: #{tpu_custom_call.1} parent=71 // pred_region
          %528 = dma.done %s521, 512
        $region76: #{tpu_custom_call.1} parent=71 // pred_fallthru
          _
        %s529 = sand.u32 %s37, 1
        %s530 = scalar_lea.sflag [#allocation7], %s529
        %s531 = sand.u32 %s71, 1
        %s532 = smul.addr %s531, 3072
        %s533 = scalar_lea.vmem [#allocation6], %s532
        // Predicated region
        $region77: #{tpu_custom_call.1} parent=71 // pred_check
          %p534 = pneg %p84
        $region78: #{tpu_custom_call.1} parent=71 // pred_check_branch
          %536 = sbr.rel (%p534) target = $region80
        $region79: #{tpu_custom_call.1} parent=71 // pred_region
          %537 = dma.done %s530, 49152
        $region80: #{tpu_custom_call.1} parent=71 // pred_fallthru
          _
        // Predicated region
        $region81: #{tpu_custom_call.1} parent=71 // pred_check
          %p538 = pneg %p105
        $region82: #{tpu_custom_call.1} parent=71 // pred_check_branch
          %540 = sbr.rel (%p538) target = $region84
        $region83: #{tpu_custom_call.1} parent=71 // pred_region
          %541 = dma.done [#allocation7], 32
        $region84: #{tpu_custom_call.1} parent=71 // pred_fallthru
          _
        // Predicated region
        $region85: #{tpu_custom_call.1} parent=71 // pred_check
          %p542 = pneg %p126
        $region86: #{tpu_custom_call.1} parent=71 // pred_check_branch
          %544 = sbr.rel (%p542) target = $region88
        $region87: #{tpu_custom_call.1} parent=71 // pred_region
          %545 = dma.done [#allocation10], 32
        $region88: #{tpu_custom_call.1} parent=71 // pred_fallthru
          _
        // Predicated region
        $region89: #{tpu_custom_call.1} parent=71 // pred_check
          %p546 = pneg %p147
        $region90: #{tpu_custom_call.1} parent=71 // pred_check_branch
          %548 = sbr.rel (%p546) target = $region92
        $region91: #{tpu_custom_call.1} parent=71 // pred_region
          %549 = dma.done [#allocation10], 16
        $region92: #{tpu_custom_call.1} parent=71 // pred_fallthru
          _
        // Predicated region
        $region93: #{tpu_custom_call.1} parent=71 // pred_check
          %p550 = pneg %p168
        $region94: #{tpu_custom_call.1} parent=71 // pred_check_branch
          %552 = sbr.rel (%p550) target = $region96
        $region95: #{tpu_custom_call.1} parent=71 // pred_region
          %553 = dma.done [#allocation13], 16
        $region96: #{tpu_custom_call.1} parent=71 // pred_fallthru
          _
        // Predicated region
        $region97: #{tpu_custom_call.1} parent=71 // pred_check
          %p554 = pneg %p189
        $region98: #{tpu_custom_call.1} parent=71 // pred_check_branch
          %556 = sbr.rel (%p554) target = $region100
        $region99: #{tpu_custom_call.1} parent=71 // pred_region
          %557 = dma.done [#allocation13], 16
        $region100: #{tpu_custom_call.1} parent=71 // pred_fallthru
          _
        // Predicated region
        $region101: #{tpu_custom_call.1} parent=71 // pred_check
          %p558 = pneg %p210
        $region102: #{tpu_custom_call.1} parent=71 // pred_check_branch
          %560 = sbr.rel (%p558) target = $region104
        $region103: #{tpu_custom_call.1} parent=71 // pred_region
          %561 = dma.done [#allocation16], 16
        $region104: #{tpu_custom_call.1} parent=71 // pred_fallthru
          _
        // Predicated region
        $region105: #{tpu_custom_call.1} parent=71 // pred_check
          %p562 = pneg %p231
        $region106: #{tpu_custom_call.1} parent=71 // pred_check_branch
          %564 = sbr.rel (%p562) target = $region108
        $region107: #{tpu_custom_call.1} parent=71 // pred_region
          %565 = dma.done [#allocation16], 2048
        $region108: #{tpu_custom_call.1} parent=71 // pred_fallthru
          _
        // Predicated region
        $region109: #{tpu_custom_call.1} parent=71 // pred_check
          %p566 = pneg %p252
        $region110: #{tpu_custom_call.1} parent=71 // pred_check_branch
          %568 = sbr.rel (%p566) target = $region112
        $region111: #{tpu_custom_call.1} parent=71 // pred_region
          %569 = dma.done [#allocation19], 2048
        $region112: #{tpu_custom_call.1} parent=71 // pred_fallthru
          _
        // Predicated region
        $region113: #{tpu_custom_call.1} parent=71 // pred_check
          %p570 = pneg %p273
        $region114: #{tpu_custom_call.1} parent=71 // pred_check_branch
          %572 = sbr.rel (%p570) target = $region116
        $region115: #{tpu_custom_call.1} parent=71 // pred_region
          %573 = dma.done [#allocation19], 16
        $region116: #{tpu_custom_call.1} parent=71 // pred_fallthru
          _
        // Predicated region
        $region117: #{tpu_custom_call.1} parent=71 // pred_check
          %p574 = pneg %p294
        $region118: #{tpu_custom_call.1} parent=71 // pred_check_branch
          %576 = sbr.rel (%p574) target = $region120
        $region119: #{tpu_custom_call.1} parent=71 // pred_region
          %577 = dma.done [#allocation22], 16
        $region120: #{tpu_custom_call.1} parent=71 // pred_fallthru
          _
        %s578 = sand.u32 %s45, 1
        %s579 = scalar_lea.sflag [#allocation5], %s578
        %s580 = sand.u32 %s45, 1
        %s581 = smul.addr %s580, 32
        %s582 = scalar_lea.vmem [#allocation4], %s581
        %p583 = pneg %p58
        %p584 = pneg %p55
        %s585 = sand.u32 %s37, 1
        %s586 = scalar_lea.sflag [#allocation7], %s585
        %s587 = sand.u32 %s71, 1
        %s588 = smul.addr %s587, 3072
        %s589 = scalar_lea.vmem [#allocation6], %s588
        %p590 = pneg %p84
        %p591 = pneg %p81
        %p592 = pneg %p105
        %p593 = pneg %p102
        %p594 = pneg %p126
        %p595 = pneg %p123
        %p596 = pneg %p147
        %p597 = pneg %p144
        %p598 = pneg %p168
        %p599 = pneg %p165
        %p600 = pneg %p189
        %p601 = pneg %p186
        %p602 = pneg %p210
        %p603 = pneg %p207
        %p604 = pneg %p231
        %p605 = pneg %p228
        %p606 = pneg %p252
        %p607 = pneg %p249
        %p608 = pneg %p273
        %p609 = pneg %p270
        %p610 = pneg %p294
        %p611 = pneg %p291
        %p612 = pneg %p315
        %p613 = pneg %p312
        %p614 = pneg %p336
        %p615 = pneg %p333
        %s616 = smul.u32 8, %s37
        %s617 = smul.u32 128, %s37
        %p618 = scmp.eq.s32.totalorder %s37, 0
        // Predicated region
        $region121: #{tpu_custom_call.1} parent=71 // pred_check
          %p619 = pneg %p618
        $region122: #{tpu_custom_call.1} parent=71 // pred_check_branch
          %621 = sbr.rel (%p619) target = $region124
        $region123: #{tpu_custom_call.1} parent=71 // pred_region
          %622 = vst [vmem:[#allocation2] sm:$0xff] 0.0
          %623 = vst [vmem:[#allocation2 + $0x8] sm:$0xff] 0.0
          %624 = vst [vmem:[#allocation2 + $0x10] sm:$0xff] 0.0
          %625 = vst [vmem:[#allocation2 + $0x18] sm:$0xff] 0.0
          %626 = vst [vmem:[#allocation2 + $0x20] sm:$0xff] 0.0
          %627 = vst [vmem:[#allocation2 + $0x28] sm:$0xff] 0.0
        $region124: #{tpu_custom_call.1} parent=71 // pred_fallthru
          _
        %v628 = vld [vmem:[#allocation2] sm:$0xff]
        %v629 = vld [vmem:[#allocation2 + $0x8] sm:$0xff]
        %v630 = vld [vmem:[#allocation2 + $0x10] sm:$0xff]
        %v631 = vld [vmem:[#allocation2 + $0x18] sm:$0xff]
        %v632 = vld [vmem:[#allocation2 + $0x20] sm:$0xff]
        %v633 = vld [vmem:[#allocation2 + $0x28] sm:$0xff]
        %v634 = vld [vmem:[%s524] sm:$0xff]
        %v635 = vld [vmem:[%s524 + $0x8] sm:$0xff]
        %v636 = vld [vmem:[%s524 + $0x10] sm:$0xff]
        %v637 = vld [vmem:[%s524 + $0x18] sm:$0xff]
        %v638 = vld [vmem:[%s533] sm:$0xff]
        %v639 = vld [vmem:[%s533 + $0x8] sm:$0xff]
        %v640 = vld [vmem:[%s533 + $0x10] sm:$0xff]
        %v641 = vld [vmem:[%s533 + $0x18] sm:$0xff]
        %v642 = vld [vmem:[%s533 + $0x20] sm:$0xff]
        %v643 = vld [vmem:[%s533 + $0x28] sm:$0xff]
        %v644 = vld [vmem:[%s533 + $0x30] sm:$0xff]
        %v645 = vld [vmem:[%s533 + $0x38] sm:$0xff]
        %v646 = vld [vmem:[%s533 + $0x40] sm:$0xff]
        %v647 = vld [vmem:[%s533 + $0x48] sm:$0xff]
        %v648 = vld [vmem:[%s533 + $0x50] sm:$0xff]
        %v649 = vld [vmem:[%s533 + $0x58] sm:$0xff]
        %v650 = vld [vmem:[%s533 + $0x60] sm:$0xff]
        %v651 = vld [vmem:[%s533 + $0x68] sm:$0xff]
        %v652 = vld [vmem:[%s533 + $0x70] sm:$0xff]
        %v653 = vld [vmem:[%s533 + $0x78] sm:$0xff]
        %v654 = vld [vmem:[%s533 + $0x80] sm:$0xff]
        %v655 = vld [vmem:[%s533 + $0x88] sm:$0xff]
        %v656 = vld [vmem:[%s533 + $0x90] sm:$0xff]
        %v657 = vld [vmem:[%s533 + $0x98] sm:$0xff]
        %v658 = vld [vmem:[%s533 + $0xa0] sm:$0xff]
        %v659 = vld [vmem:[%s533 + $0xa8] sm:$0xff]
        %v660 = vld [vmem:[%s533 + $0xb0] sm:$0xff]
        %v661 = vld [vmem:[%s533 + $0xb8] sm:$0xff]
        %v662 = vld [vmem:[%s533 + $0xc0] sm:$0xff]
        %v663 = vld [vmem:[%s533 + $0xc8] sm:$0xff]
        %v664 = vld [vmem:[%s533 + $0xd0] sm:$0xff]
        %v665 = vld [vmem:[%s533 + $0xd8] sm:$0xff]
        %v666 = vld [vmem:[%s533 + $0xe0] sm:$0xff]
        %v667 = vld [vmem:[%s533 + $0xe8] sm:$0xff]
        %v668 = vld [vmem:[%s533 + $0xf0] sm:$0xff]
        %v669 = vld [vmem:[%s533 + $0xf8] sm:$0xff]
        %v670 = vld [vmem:[%s533 + $0x100] sm:$0xff]
        %v671 = vld [vmem:[%s533 + $0x108] sm:$0xff]
        %v672 = vld [vmem:[%s533 + $0x110] sm:$0xff]
        %v673 = vld [vmem:[%s533 + $0x118] sm:$0xff]
        %v674 = vld [vmem:[%s533 + $0x120] sm:$0xff]
        %v675 = vld [vmem:[%s533 + $0x128] sm:$0xff]
        %v676 = vld [vmem:[%s533 + $0x130] sm:$0xff]
        %v677 = vld [vmem:[%s533 + $0x138] sm:$0xff]
        %v678 = vld [vmem:[%s533 + $0x140] sm:$0xff]
        %v679 = vld [vmem:[%s533 + $0x148] sm:$0xff]
        %v680 = vld [vmem:[%s533 + $0x150] sm:$0xff]
        %v681 = vld [vmem:[%s533 + $0x158] sm:$0xff]
        %v682 = vld [vmem:[%s533 + $0x160] sm:$0xff]
        %v683 = vld [vmem:[%s533 + $0x168] sm:$0xff]
        %v684 = vld [vmem:[%s533 + $0x170] sm:$0xff]
        %v685 = vld [vmem:[%s533 + $0x178] sm:$0xff]
        %v686 = vld [vmem:[%s533 + $0x180] sm:$0xff]
        %v687 = vld [vmem:[%s533 + $0x188] sm:$0xff]
        %v688 = vld [vmem:[%s533 + $0x190] sm:$0xff]
        %v689 = vld [vmem:[%s533 + $0x198] sm:$0xff]
        %v690 = vld [vmem:[%s533 + $0x1a0] sm:$0xff]
        %v691 = vld [vmem:[%s533 + $0x1a8] sm:$0xff]
        %v692 = vld [vmem:[%s533 + $0x1b0] sm:$0xff]
        %v693 = vld [vmem:[%s533 + $0x1b8] sm:$0xff]
        %v694 = vld [vmem:[%s533 + $0x1c0] sm:$0xff]
        %v695 = vld [vmem:[%s533 + $0x1c8] sm:$0xff]
        %v696 = vld [vmem:[%s533 + $0x1d0] sm:$0xff]
        %v697 = vld [vmem:[%s533 + $0x1d8] sm:$0xff]
        %v698 = vld [vmem:[%s533 + $0x1e0] sm:$0xff]
        %v699 = vld [vmem:[%s533 + $0x1e8] sm:$0xff]
        %v700 = vld [vmem:[%s533 + $0x1f0] sm:$0xff]
        %v701 = vld [vmem:[%s533 + $0x1f8] sm:$0xff]
        %v702 = vld [vmem:[%s533 + $0x200] sm:$0xff]
        %v703 = vld [vmem:[%s533 + $0x208] sm:$0xff]
        %v704 = vld [vmem:[%s533 + $0x210] sm:$0xff]
        %v705 = vld [vmem:[%s533 + $0x218] sm:$0xff]
        %v706 = vld [vmem:[%s533 + $0x220] sm:$0xff]
        %v707 = vld [vmem:[%s533 + $0x228] sm:$0xff]
        %v708 = vld [vmem:[%s533 + $0x230] sm:$0xff]
        %v709 = vld [vmem:[%s533 + $0x238] sm:$0xff]
        %v710 = vld [vmem:[%s533 + $0x240] sm:$0xff]
        %v711 = vld [vmem:[%s533 + $0x248] sm:$0xff]
        %v712 = vld [vmem:[%s533 + $0x250] sm:$0xff]
        %v713 = vld [vmem:[%s533 + $0x258] sm:$0xff]
        %v714 = vld [vmem:[%s533 + $0x260] sm:$0xff]
        %v715 = vld [vmem:[%s533 + $0x268] sm:$0xff]
        %v716 = vld [vmem:[%s533 + $0x270] sm:$0xff]
        %v717 = vld [vmem:[%s533 + $0x278] sm:$0xff]
        %v718 = vld [vmem:[%s533 + $0x280] sm:$0xff]
        %v719 = vld [vmem:[%s533 + $0x288] sm:$0xff]
        %v720 = vld [vmem:[%s533 + $0x290] sm:$0xff]
        %v721 = vld [vmem:[%s533 + $0x298] sm:$0xff]
        %v722 = vld [vmem:[%s533 + $0x2a0] sm:$0xff]
        %v723 = vld [vmem:[%s533 + $0x2a8] sm:$0xff]
        %v724 = vld [vmem:[%s533 + $0x2b0] sm:$0xff]
        %v725 = vld [vmem:[%s533 + $0x2b8] sm:$0xff]
        %v726 = vld [vmem:[%s533 + $0x2c0] sm:$0xff]
        %v727 = vld [vmem:[%s533 + $0x2c8] sm:$0xff]
        %v728 = vld [vmem:[%s533 + $0x2d0] sm:$0xff]
        %v729 = vld [vmem:[%s533 + $0x2d8] sm:$0xff]
        %v730 = vld [vmem:[%s533 + $0x2e0] sm:$0xff]
        %v731 = vld [vmem:[%s533 + $0x2e8] sm:$0xff]
        %v732 = vld [vmem:[%s533 + $0x2f0] sm:$0xff]
        %v733 = vld [vmem:[%s533 + $0x2f8] sm:$0xff]
        %v734 = vld [vmem:[%s533 + $0x300] sm:$0xff]
        %v735 = vld [vmem:[%s533 + $0x308] sm:$0xff]
        %v736 = vld [vmem:[%s533 + $0x310] sm:$0xff]
        %v737 = vld [vmem:[%s533 + $0x318] sm:$0xff]
        %v738 = vld [vmem:[%s533 + $0x320] sm:$0xff]
        %v739 = vld [vmem:[%s533 + $0x328] sm:$0xff]
        %v740 = vld [vmem:[%s533 + $0x330] sm:$0xff]
        %v741 = vld [vmem:[%s533 + $0x338] sm:$0xff]
        %v742 = vld [vmem:[%s533 + $0x340] sm:$0xff]
        %v743 = vld [vmem:[%s533 + $0x348] sm:$0xff]
        %v744 = vld [vmem:[%s533 + $0x350] sm:$0xff]
        %v745 = vld [vmem:[%s533 + $0x358] sm:$0xff]
        %v746 = vld [vmem:[%s533 + $0x360] sm:$0xff]
        %v747 = vld [vmem:[%s533 + $0x368] sm:$0xff]
        %v748 = vld [vmem:[%s533 + $0x370] sm:$0xff]
        %v749 = vld [vmem:[%s533 + $0x378] sm:$0xff]
        %v750 = vld [vmem:[%s533 + $0x380] sm:$0xff]
        %v751 = vld [vmem:[%s533 + $0x388] sm:$0xff]
        %v752 = vld [vmem:[%s533 + $0x390] sm:$0xff]
        %v753 = vld [vmem:[%s533 + $0x398] sm:$0xff]
        %v754 = vld [vmem:[%s533 + $0x3a0] sm:$0xff]
        %v755 = vld [vmem:[%s533 + $0x3a8] sm:$0xff]
        %v756 = vld [vmem:[%s533 + $0x3b0] sm:$0xff]
        %v757 = vld [vmem:[%s533 + $0x3b8] sm:$0xff]
        %v758 = vld [vmem:[%s533 + $0x3c0] sm:$0xff]
        %v759 = vld [vmem:[%s533 + $0x3c8] sm:$0xff]
        %v760 = vld [vmem:[%s533 + $0x3d0] sm:$0xff]
        %v761 = vld [vmem:[%s533 + $0x3d8] sm:$0xff]
        %v762 = vld [vmem:[%s533 + $0x3e0] sm:$0xff]
        %v763 = vld [vmem:[%s533 + $0x3e8] sm:$0xff]
        %v764 = vld [vmem:[%s533 + $0x3f0] sm:$0xff]
        %v765 = vld [vmem:[%s533 + $0x3f8] sm:$0xff]
        %v766 = vld [vmem:[%s533 + $0x400] sm:$0xff]
        %v767 = vld [vmem:[%s533 + $0x408] sm:$0xff]
        %v768 = vld [vmem:[%s533 + $0x410] sm:$0xff]
        %v769 = vld [vmem:[%s533 + $0x418] sm:$0xff]
        %v770 = vld [vmem:[%s533 + $0x420] sm:$0xff]
        %v771 = vld [vmem:[%s533 + $0x428] sm:$0xff]
        %v772 = vld [vmem:[%s533 + $0x430] sm:$0xff]
        %v773 = vld [vmem:[%s533 + $0x438] sm:$0xff]
        %v774 = vld [vmem:[%s533 + $0x440] sm:$0xff]
        %v775 = vld [vmem:[%s533 + $0x448] sm:$0xff]
        %v776 = vld [vmem:[%s533 + $0x450] sm:$0xff]
        %v777 = vld [vmem:[%s533 + $0x458] sm:$0xff]
        %v778 = vld [vmem:[%s533 + $0x460] sm:$0xff]
        %v779 = vld [vmem:[%s533 + $0x468] sm:$0xff]
        %v780 = vld [vmem:[%s533 + $0x470] sm:$0xff]
        %v781 = vld [vmem:[%s533 + $0x478] sm:$0xff]
        %v782 = vld [vmem:[%s533 + $0x480] sm:$0xff]
        %v783 = vld [vmem:[%s533 + $0x488] sm:$0xff]
        %v784 = vld [vmem:[%s533 + $0x490] sm:$0xff]
        %v785 = vld [vmem:[%s533 + $0x498] sm:$0xff]
        %v786 = vld [vmem:[%s533 + $0x4a0] sm:$0xff]
        %v787 = vld [vmem:[%s533 + $0x4a8] sm:$0xff]
        %v788 = vld [vmem:[%s533 + $0x4b0] sm:$0xff]
        %v789 = vld [vmem:[%s533 + $0x4b8] sm:$0xff]
        %v790 = vld [vmem:[%s533 + $0x4c0] sm:$0xff]
        %v791 = vld [vmem:[%s533 + $0x4c8] sm:$0xff]
        %v792 = vld [vmem:[%s533 + $0x4d0] sm:$0xff]
        %v793 = vld [vmem:[%s533 + $0x4d8] sm:$0xff]
        %v794 = vld [vmem:[%s533 + $0x4e0] sm:$0xff]
        %v795 = vld [vmem:[%s533 + $0x4e8] sm:$0xff]
        %v796 = vld [vmem:[%s533 + $0x4f0] sm:$0xff]
        %v797 = vld [vmem:[%s533 + $0x4f8] sm:$0xff]
        %v798 = vld [vmem:[%s533 + $0x500] sm:$0xff]
        %v799 = vld [vmem:[%s533 + $0x508] sm:$0xff]
        %v800 = vld [vmem:[%s533 + $0x510] sm:$0xff]
        %v801 = vld [vmem:[%s533 + $0x518] sm:$0xff]
        %v802 = vld [vmem:[%s533 + $0x520] sm:$0xff]
        %v803 = vld [vmem:[%s533 + $0x528] sm:$0xff]
        %v804 = vld [vmem:[%s533 + $0x530] sm:$0xff]
        %v805 = vld [vmem:[%s533 + $0x538] sm:$0xff]
        %v806 = vld [vmem:[%s533 + $0x540] sm:$0xff]
        %v807 = vld [vmem:[%s533 + $0x548] sm:$0xff]
        %v808 = vld [vmem:[%s533 + $0x550] sm:$0xff]
        %v809 = vld [vmem:[%s533 + $0x558] sm:$0xff]
        %v810 = vld [vmem:[%s533 + $0x560] sm:$0xff]
        %v811 = vld [vmem:[%s533 + $0x568] sm:$0xff]
        %v812 = vld [vmem:[%s533 + $0x570] sm:$0xff]
        %v813 = vld [vmem:[%s533 + $0x578] sm:$0xff]
        %v814 = vld [vmem:[%s533 + $0x580] sm:$0xff]
        %v815 = vld [vmem:[%s533 + $0x588] sm:$0xff]
        %v816 = vld [vmem:[%s533 + $0x590] sm:$0xff]
        %v817 = vld [vmem:[%s533 + $0x598] sm:$0xff]
        %v818 = vld [vmem:[%s533 + $0x5a0] sm:$0xff]
        %v819 = vld [vmem:[%s533 + $0x5a8] sm:$0xff]
        %v820 = vld [vmem:[%s533 + $0x5b0] sm:$0xff]
        %v821 = vld [vmem:[%s533 + $0x5b8] sm:$0xff]
        %v822 = vld [vmem:[%s533 + $0x5c0] sm:$0xff]
        %v823 = vld [vmem:[%s533 + $0x5c8] sm:$0xff]
        %v824 = vld [vmem:[%s533 + $0x5d0] sm:$0xff]
        %v825 = vld [vmem:[%s533 + $0x5d8] sm:$0xff]
        %v826 = vld [vmem:[%s533 + $0x5e0] sm:$0xff]
        %v827 = vld [vmem:[%s533 + $0x5e8] sm:$0xff]
        %v828 = vld [vmem:[%s533 + $0x5f0] sm:$0xff]
        %v829 = vld [vmem:[%s533 + $0x5f8] sm:$0xff]
        %v830 = vld [vmem:[%s533 + $0x600] sm:$0xff]
        %v831 = vld [vmem:[%s533 + $0x608] sm:$0xff]
        %v832 = vld [vmem:[%s533 + $0x610] sm:$0xff]
        %v833 = vld [vmem:[%s533 + $0x618] sm:$0xff]
        %v834 = vld [vmem:[%s533 + $0x620] sm:$0xff]
        %v835 = vld [vmem:[%s533 + $0x628] sm:$0xff]
        %v836 = vld [vmem:[%s533 + $0x630] sm:$0xff]
        %v837 = vld [vmem:[%s533 + $0x638] sm:$0xff]
        %v838 = vld [vmem:[%s533 + $0x640] sm:$0xff]
        %v839 = vld [vmem:[%s533 + $0x648] sm:$0xff]
        %v840 = vld [vmem:[%s533 + $0x650] sm:$0xff]
        %v841 = vld [vmem:[%s533 + $0x658] sm:$0xff]
        %v842 = vld [vmem:[%s533 + $0x660] sm:$0xff]
        %v843 = vld [vmem:[%s533 + $0x668] sm:$0xff]
        %v844 = vld [vmem:[%s533 + $0x670] sm:$0xff]
        %v845 = vld [vmem:[%s533 + $0x678] sm:$0xff]
        %v846 = vld [vmem:[%s533 + $0x680] sm:$0xff]
        %v847 = vld [vmem:[%s533 + $0x688] sm:$0xff]
        %v848 = vld [vmem:[%s533 + $0x690] sm:$0xff]
        %v849 = vld [vmem:[%s533 + $0x698] sm:$0xff]
        %v850 = vld [vmem:[%s533 + $0x6a0] sm:$0xff]
        %v851 = vld [vmem:[%s533 + $0x6a8] sm:$0xff]
        %v852 = vld [vmem:[%s533 + $0x6b0] sm:$0xff]
        %v853 = vld [vmem:[%s533 + $0x6b8] sm:$0xff]
        %v854 = vld [vmem:[%s533 + $0x6c0] sm:$0xff]
        %v855 = vld [vmem:[%s533 + $0x6c8] sm:$0xff]
        %v856 = vld [vmem:[%s533 + $0x6d0] sm:$0xff]
        %v857 = vld [vmem:[%s533 + $0x6d8] sm:$0xff]
        %v858 = vld [vmem:[%s533 + $0x6e0] sm:$0xff]
        %v859 = vld [vmem:[%s533 + $0x6e8] sm:$0xff]
        %v860 = vld [vmem:[%s533 + $0x6f0] sm:$0xff]
        %v861 = vld [vmem:[%s533 + $0x6f8] sm:$0xff]
        %v862 = vld [vmem:[%s533 + $0x700] sm:$0xff]
        %v863 = vld [vmem:[%s533 + $0x708] sm:$0xff]
        %v864 = vld [vmem:[%s533 + $0x710] sm:$0xff]
        %v865 = vld [vmem:[%s533 + $0x718] sm:$0xff]
        %v866 = vld [vmem:[%s533 + $0x720] sm:$0xff]
        %v867 = vld [vmem:[%s533 + $0x728] sm:$0xff]
        %v868 = vld [vmem:[%s533 + $0x730] sm:$0xff]
        %v869 = vld [vmem:[%s533 + $0x738] sm:$0xff]
        %v870 = vld [vmem:[%s533 + $0x740] sm:$0xff]
        %v871 = vld [vmem:[%s533 + $0x748] sm:$0xff]
        %v872 = vld [vmem:[%s533 + $0x750] sm:$0xff]
        %v873 = vld [vmem:[%s533 + $0x758] sm:$0xff]
        %v874 = vld [vmem:[%s533 + $0x760] sm:$0xff]
        %v875 = vld [vmem:[%s533 + $0x768] sm:$0xff]
        %v876 = vld [vmem:[%s533 + $0x770] sm:$0xff]
        %v877 = vld [vmem:[%s533 + $0x778] sm:$0xff]
        %v878 = vld [vmem:[%s533 + $0x780] sm:$0xff]
        %v879 = vld [vmem:[%s533 + $0x788] sm:$0xff]
        %v880 = vld [vmem:[%s533 + $0x790] sm:$0xff]
        %v881 = vld [vmem:[%s533 + $0x798] sm:$0xff]
        %v882 = vld [vmem:[%s533 + $0x7a0] sm:$0xff]
        %v883 = vld [vmem:[%s533 + $0x7a8] sm:$0xff]
        %v884 = vld [vmem:[%s533 + $0x7b0] sm:$0xff]
        %v885 = vld [vmem:[%s533 + $0x7b8] sm:$0xff]
        %v886 = vld [vmem:[%s533 + $0x7c0] sm:$0xff]
        %v887 = vld [vmem:[%s533 + $0x7c8] sm:$0xff]
        %v888 = vld [vmem:[%s533 + $0x7d0] sm:$0xff]
        %v889 = vld [vmem:[%s533 + $0x7d8] sm:$0xff]
        %v890 = vld [vmem:[%s533 + $0x7e0] sm:$0xff]
        %v891 = vld [vmem:[%s533 + $0x7e8] sm:$0xff]
        %v892 = vld [vmem:[%s533 + $0x7f0] sm:$0xff]
        %v893 = vld [vmem:[%s533 + $0x7f8] sm:$0xff]
        %v894 = vld [vmem:[%s533 + $0x800] sm:$0xff]
        %v895 = vld [vmem:[%s533 + $0x808] sm:$0xff]
        %v896 = vld [vmem:[%s533 + $0x810] sm:$0xff]
        %v897 = vld [vmem:[%s533 + $0x818] sm:$0xff]
        %v898 = vld [vmem:[%s533 + $0x820] sm:$0xff]
        %v899 = vld [vmem:[%s533 + $0x828] sm:$0xff]
        %v900 = vld [vmem:[%s533 + $0x830] sm:$0xff]
        %v901 = vld [vmem:[%s533 + $0x838] sm:$0xff]
        %v902 = vld [vmem:[%s533 + $0x840] sm:$0xff]
        %v903 = vld [vmem:[%s533 + $0x848] sm:$0xff]
        %v904 = vld [vmem:[%s533 + $0x850] sm:$0xff]
        %v905 = vld [vmem:[%s533 + $0x858] sm:$0xff]
        %v906 = vld [vmem:[%s533 + $0x860] sm:$0xff]
        %v907 = vld [vmem:[%s533 + $0x868] sm:$0xff]
        %v908 = vld [vmem:[%s533 + $0x870] sm:$0xff]
        %v909 = vld [vmem:[%s533 + $0x878] sm:$0xff]
        %v910 = vld [vmem:[%s533 + $0x880] sm:$0xff]
        %v911 = vld [vmem:[%s533 + $0x888] sm:$0xff]
        %v912 = vld [vmem:[%s533 + $0x890] sm:$0xff]
        %v913 = vld [vmem:[%s533 + $0x898] sm:$0xff]
        %v914 = vld [vmem:[%s533 + $0x8a0] sm:$0xff]
        %v915 = vld [vmem:[%s533 + $0x8a8] sm:$0xff]
        %v916 = vld [vmem:[%s533 + $0x8b0] sm:$0xff]
        %v917 = vld [vmem:[%s533 + $0x8b8] sm:$0xff]
        %v918 = vld [vmem:[%s533 + $0x8c0] sm:$0xff]
        %v919 = vld [vmem:[%s533 + $0x8c8] sm:$0xff]
        %v920 = vld [vmem:[%s533 + $0x8d0] sm:$0xff]
        %v921 = vld [vmem:[%s533 + $0x8d8] sm:$0xff]
        %v922 = vld [vmem:[%s533 + $0x8e0] sm:$0xff]
        %v923 = vld [vmem:[%s533 + $0x8e8] sm:$0xff]
        %v924 = vld [vmem:[%s533 + $0x8f0] sm:$0xff]
        %v925 = vld [vmem:[%s533 + $0x8f8] sm:$0xff]
        %v926 = vld [vmem:[%s533 + $0x900] sm:$0xff]
        %v927 = vld [vmem:[%s533 + $0x908] sm:$0xff]
        %v928 = vld [vmem:[%s533 + $0x910] sm:$0xff]
        %v929 = vld [vmem:[%s533 + $0x918] sm:$0xff]
        %v930 = vld [vmem:[%s533 + $0x920] sm:$0xff]
        %v931 = vld [vmem:[%s533 + $0x928] sm:$0xff]
        %v932 = vld [vmem:[%s533 + $0x930] sm:$0xff]
        %v933 = vld [vmem:[%s533 + $0x938] sm:$0xff]
        %v934 = vld [vmem:[%s533 + $0x940] sm:$0xff]
        %v935 = vld [vmem:[%s533 + $0x948] sm:$0xff]
        %v936 = vld [vmem:[%s533 + $0x950] sm:$0xff]
        %v937 = vld [vmem:[%s533 + $0x958] sm:$0xff]
        %v938 = vld [vmem:[%s533 + $0x960] sm:$0xff]
        %v939 = vld [vmem:[%s533 + $0x968] sm:$0xff]
        %v940 = vld [vmem:[%s533 + $0x970] sm:$0xff]
        %v941 = vld [vmem:[%s533 + $0x978] sm:$0xff]
        %v942 = vld [vmem:[%s533 + $0x980] sm:$0xff]
        %v943 = vld [vmem:[%s533 + $0x988] sm:$0xff]
        %v944 = vld [vmem:[%s533 + $0x990] sm:$0xff]
        %v945 = vld [vmem:[%s533 + $0x998] sm:$0xff]
        %v946 = vld [vmem:[%s533 + $0x9a0] sm:$0xff]
        %v947 = vld [vmem:[%s533 + $0x9a8] sm:$0xff]
        %v948 = vld [vmem:[%s533 + $0x9b0] sm:$0xff]
        %v949 = vld [vmem:[%s533 + $0x9b8] sm:$0xff]
        %v950 = vld [vmem:[%s533 + $0x9c0] sm:$0xff]
        %v951 = vld [vmem:[%s533 + $0x9c8] sm:$0xff]
        %v952 = vld [vmem:[%s533 + $0x9d0] sm:$0xff]
        %v953 = vld [vmem:[%s533 + $0x9d8] sm:$0xff]
        %v954 = vld [vmem:[%s533 + $0x9e0] sm:$0xff]
        %v955 = vld [vmem:[%s533 + $0x9e8] sm:$0xff]
        %v956 = vld [vmem:[%s533 + $0x9f0] sm:$0xff]
        %v957 = vld [vmem:[%s533 + $0x9f8] sm:$0xff]
        %v958 = vld [vmem:[%s533 + $0xa00] sm:$0xff]
        %v959 = vld [vmem:[%s533 + $0xa08] sm:$0xff]
        %v960 = vld [vmem:[%s533 + $0xa10] sm:$0xff]
        %v961 = vld [vmem:[%s533 + $0xa18] sm:$0xff]
        %v962 = vld [vmem:[%s533 + $0xa20] sm:$0xff]
        %v963 = vld [vmem:[%s533 + $0xa28] sm:$0xff]
        %v964 = vld [vmem:[%s533 + $0xa30] sm:$0xff]
        %v965 = vld [vmem:[%s533 + $0xa38] sm:$0xff]
        %v966 = vld [vmem:[%s533 + $0xa40] sm:$0xff]
        %v967 = vld [vmem:[%s533 + $0xa48] sm:$0xff]
        %v968 = vld [vmem:[%s533 + $0xa50] sm:$0xff]
        %v969 = vld [vmem:[%s533 + $0xa58] sm:$0xff]
        %v970 = vld [vmem:[%s533 + $0xa60] sm:$0xff]
        %v971 = vld [vmem:[%s533 + $0xa68] sm:$0xff]
        %v972 = vld [vmem:[%s533 + $0xa70] sm:$0xff]
        %v973 = vld [vmem:[%s533 + $0xa78] sm:$0xff]
        %v974 = vld [vmem:[%s533 + $0xa80] sm:$0xff]
        %v975 = vld [vmem:[%s533 + $0xa88] sm:$0xff]
        %v976 = vld [vmem:[%s533 + $0xa90] sm:$0xff]
        %v977 = vld [vmem:[%s533 + $0xa98] sm:$0xff]
        %v978 = vld [vmem:[%s533 + $0xaa0] sm:$0xff]
        %v979 = vld [vmem:[%s533 + $0xaa8] sm:$0xff]
        %v980 = vld [vmem:[%s533 + $0xab0] sm:$0xff]
        %v981 = vld [vmem:[%s533 + $0xab8] sm:$0xff]
        %v982 = vld [vmem:[%s533 + $0xac0] sm:$0xff]
        %v983 = vld [vmem:[%s533 + $0xac8] sm:$0xff]
        %v984 = vld [vmem:[%s533 + $0xad0] sm:$0xff]
        %v985 = vld [vmem:[%s533 + $0xad8] sm:$0xff]
        %v986 = vld [vmem:[%s533 + $0xae0] sm:$0xff]
        %v987 = vld [vmem:[%s533 + $0xae8] sm:$0xff]
        %v988 = vld [vmem:[%s533 + $0xaf0] sm:$0xff]
        %v989 = vld [vmem:[%s533 + $0xaf8] sm:$0xff]
        %v990 = vld [vmem:[%s533 + $0xb00] sm:$0xff]
        %v991 = vld [vmem:[%s533 + $0xb08] sm:$0xff]
        %v992 = vld [vmem:[%s533 + $0xb10] sm:$0xff]
        %v993 = vld [vmem:[%s533 + $0xb18] sm:$0xff]
        %v994 = vld [vmem:[%s533 + $0xb20] sm:$0xff]
        %v995 = vld [vmem:[%s533 + $0xb28] sm:$0xff]
        %v996 = vld [vmem:[%s533 + $0xb30] sm:$0xff]
        %v997 = vld [vmem:[%s533 + $0xb38] sm:$0xff]
        %v998 = vld [vmem:[%s533 + $0xb40] sm:$0xff]
        %v999 = vld [vmem:[%s533 + $0xb48] sm:$0xff]
        %v1000 = vld [vmem:[%s533 + $0xb50] sm:$0xff]
        %v1001 = vld [vmem:[%s533 + $0xb58] sm:$0xff]
        %v1002 = vld [vmem:[%s533 + $0xb60] sm:$0xff]
        %v1003 = vld [vmem:[%s533 + $0xb68] sm:$0xff]
        %v1004 = vld [vmem:[%s533 + $0xb70] sm:$0xff]
        %v1005 = vld [vmem:[%s533 + $0xb78] sm:$0xff]
        %v1006 = vld [vmem:[%s533 + $0xb80] sm:$0xff]
        %v1007 = vld [vmem:[%s533 + $0xb88] sm:$0xff]
        %v1008 = vld [vmem:[%s533 + $0xb90] sm:$0xff]
        %v1009 = vld [vmem:[%s533 + $0xb98] sm:$0xff]
        %v1010 = vld [vmem:[%s533 + $0xba0] sm:$0xff]
        %v1011 = vld [vmem:[%s533 + $0xba8] sm:$0xff]
        %v1012 = vld [vmem:[%s533 + $0xbb0] sm:$0xff]
        %v1013 = vld [vmem:[%s533 + $0xbb8] sm:$0xff]
        %v1014 = vld [vmem:[%s533 + $0xbc0] sm:$0xff]
        %v1015 = vld [vmem:[%s533 + $0xbc8] sm:$0xff]
        %v1016 = vld [vmem:[%s533 + $0xbd0] sm:$0xff]
        %v1017 = vld [vmem:[%s533 + $0xbd8] sm:$0xff]
        %v1018 = vld [vmem:[%s533 + $0xbe0] sm:$0xff]
        %v1019 = vld [vmem:[%s533 + $0xbe8] sm:$0xff]
        %v1020 = vld [vmem:[%s533 + $0xbf0] sm:$0xff]
        %v1021 = vld [vmem:[%s533 + $0xbf8] sm:$0xff]
        %v1026 = vunpack.c.l.b16 %v634
        %v1027 = vunpack.c.h.b16 %v634
        %v1028 = vunpack.c.l.b16 %v635
        %v1029 = vunpack.c.h.b16 %v635
        %v1030 = vunpack.c.l.b16 %v636
        %v1031 = vunpack.c.h.b16 %v636
        %v1032 = vunpack.c.l.b16 %v637
        %v1033 = vunpack.c.h.b16 %v637
        %v1034 = vpack.c.b16 %v1026, %v1026
        %v1035 = vpack.c.b16 %v1027, %v1027
        %v1036 = vpack.c.b16 %v1028, %v1028
        %v1037 = vpack.c.b16 %v1029, %v1029
        %v1038 = vpack.c.b16 %v1030, %v1030
        %v1039 = vpack.c.b16 %v1031, %v1031
        %v1040 = vpack.c.b16 %v1032, %v1032
        %v1041 = vpack.c.b16 %v1033, %v1033
        %v1434 = vunpack.c.l.b16 %v638
        %v1435 = vunpack.c.h.b16 %v638
        %v1436 = vunpack.c.l.b16 %v639
        %v1437 = vunpack.c.h.b16 %v639
        %v1438 = vunpack.c.l.b16 %v640
        %v1439 = vunpack.c.h.b16 %v640
        %v1440 = vunpack.c.l.b16 %v641
        %v1441 = vunpack.c.h.b16 %v641
        %v1442 = vunpack.c.l.b16 %v642
        %v1443 = vunpack.c.h.b16 %v642
        %v1444 = vunpack.c.l.b16 %v643
        %v1445 = vunpack.c.h.b16 %v643
        %v1446 = vunpack.c.l.b16 %v644
        %v1447 = vunpack.c.h.b16 %v644
        %v1448 = vunpack.c.l.b16 %v645
        %v1449 = vunpack.c.h.b16 %v645
        %v1450 = vunpack.c.l.b16 %v646
        %v1451 = vunpack.c.h.b16 %v646
        %v1452 = vunpack.c.l.b16 %v647
        %v1453 = vunpack.c.h.b16 %v647
        %v1454 = vunpack.c.l.b16 %v648
        %v1455 = vunpack.c.h.b16 %v648
        %v1456 = vunpack.c.l.b16 %v649
        %v1457 = vunpack.c.h.b16 %v649
        %v1458 = vunpack.c.l.b16 %v650
        %v1459 = vunpack.c.h.b16 %v650
        %v1460 = vunpack.c.l.b16 %v651
        %v1461 = vunpack.c.h.b16 %v651
        %v1462 = vunpack.c.l.b16 %v652
        %v1463 = vunpack.c.h.b16 %v652
        %v1464 = vunpack.c.l.b16 %v653
        %v1465 = vunpack.c.h.b16 %v653
        %v1466 = vunpack.c.l.b16 %v654
        %v1467 = vunpack.c.h.b16 %v654
        %v1468 = vunpack.c.l.b16 %v655
        %v1469 = vunpack.c.h.b16 %v655
        %v1470 = vunpack.c.l.b16 %v656
        %v1471 = vunpack.c.h.b16 %v656
        %v1472 = vunpack.c.l.b16 %v657
        %v1473 = vunpack.c.h.b16 %v657
        %v1474 = vunpack.c.l.b16 %v658
        %v1475 = vunpack.c.h.b16 %v658
        %v1476 = vunpack.c.l.b16 %v659
        %v1477 = vunpack.c.h.b16 %v659
        %v1478 = vunpack.c.l.b16 %v660
        %v1479 = vunpack.c.h.b16 %v660
        %v1480 = vunpack.c.l.b16 %v661
        %v1481 = vunpack.c.h.b16 %v661
        %v1482 = vunpack.c.l.b16 %v662
        %v1483 = vunpack.c.h.b16 %v662
        %v1484 = vunpack.c.l.b16 %v663
        %v1485 = vunpack.c.h.b16 %v663
        %v1486 = vunpack.c.l.b16 %v664
        %v1487 = vunpack.c.h.b16 %v664
        %v1488 = vunpack.c.l.b16 %v665
        %v1489 = vunpack.c.h.b16 %v665
        %v1490 = vunpack.c.l.b16 %v666
        %v1491 = vunpack.c.h.b16 %v666
        %v1492 = vunpack.c.l.b16 %v667
        %v1493 = vunpack.c.h.b16 %v667
        %v1494 = vunpack.c.l.b16 %v668
        %v1495 = vunpack.c.h.b16 %v668
        %v1496 = vunpack.c.l.b16 %v669
        %v1497 = vunpack.c.h.b16 %v669
        %v1498 = vunpack.c.l.b16 %v670
        %v1499 = vunpack.c.h.b16 %v670
        %v1500 = vunpack.c.l.b16 %v671
        %v1501 = vunpack.c.h.b16 %v671
        %v1502 = vunpack.c.l.b16 %v672
        %v1503 = vunpack.c.h.b16 %v672
        %v1504 = vunpack.c.l.b16 %v673
        %v1505 = vunpack.c.h.b16 %v673
        %v1506 = vunpack.c.l.b16 %v674
        %v1507 = vunpack.c.h.b16 %v674
        %v1508 = vunpack.c.l.b16 %v675
        %v1509 = vunpack.c.h.b16 %v675
        %v1510 = vunpack.c.l.b16 %v676
        %v1511 = vunpack.c.h.b16 %v676
        %v1512 = vunpack.c.l.b16 %v677
        %v1513 = vunpack.c.h.b16 %v677
        %v1514 = vunpack.c.l.b16 %v678
        %v1515 = vunpack.c.h.b16 %v678
        %v1516 = vunpack.c.l.b16 %v679
        %v1517 = vunpack.c.h.b16 %v679
        %v1518 = vunpack.c.l.b16 %v680
        %v1519 = vunpack.c.h.b16 %v680
        %v1520 = vunpack.c.l.b16 %v681
        %v1521 = vunpack.c.h.b16 %v681
        %v1522 = vunpack.c.l.b16 %v682
        %v1523 = vunpack.c.h.b16 %v682
        %v1524 = vunpack.c.l.b16 %v683
        %v1525 = vunpack.c.h.b16 %v683
        %v1526 = vunpack.c.l.b16 %v684
        %v1527 = vunpack.c.h.b16 %v684
        %v1528 = vunpack.c.l.b16 %v685
        %v1529 = vunpack.c.h.b16 %v685
        %v1530 = vunpack.c.l.b16 %v686
        %v1531 = vunpack.c.h.b16 %v686
        %v1532 = vunpack.c.l.b16 %v687
        %v1533 = vunpack.c.h.b16 %v687
        %v1534 = vunpack.c.l.b16 %v688
        %v1535 = vunpack.c.h.b16 %v688
        %v1536 = vunpack.c.l.b16 %v689
        %v1537 = vunpack.c.h.b16 %v689
        %v1538 = vunpack.c.l.b16 %v690
        %v1539 = vunpack.c.h.b16 %v690
        %v1540 = vunpack.c.l.b16 %v691
        %v1541 = vunpack.c.h.b16 %v691
        %v1542 = vunpack.c.l.b16 %v692
        %v1543 = vunpack.c.h.b16 %v692
        %v1544 = vunpack.c.l.b16 %v693
        %v1545 = vunpack.c.h.b16 %v693
        %v1546 = vunpack.c.l.b16 %v694
        %v1547 = vunpack.c.h.b16 %v694
        %v1548 = vunpack.c.l.b16 %v695
        %v1549 = vunpack.c.h.b16 %v695
        %v1550 = vunpack.c.l.b16 %v696
        %v1551 = vunpack.c.h.b16 %v696
        %v1552 = vunpack.c.l.b16 %v697
        %v1553 = vunpack.c.h.b16 %v697
        %v1554 = vunpack.c.l.b16 %v698
        %v1555 = vunpack.c.h.b16 %v698
        %v1556 = vunpack.c.l.b16 %v699
        %v1557 = vunpack.c.h.b16 %v699
        %v1558 = vunpack.c.l.b16 %v700
        %v1559 = vunpack.c.h.b16 %v700
        %v1560 = vunpack.c.l.b16 %v701
        %v1561 = vunpack.c.h.b16 %v701
        %v1562 = vunpack.c.l.b16 %v702
        %v1563 = vunpack.c.h.b16 %v702
        %v1564 = vunpack.c.l.b16 %v703
        %v1565 = vunpack.c.h.b16 %v703
        %v1566 = vunpack.c.l.b16 %v704
        %v1567 = vunpack.c.h.b16 %v704
        %v1568 = vunpack.c.l.b16 %v705
        %v1569 = vunpack.c.h.b16 %v705
        %v1570 = vunpack.c.l.b16 %v706
        %v1571 = vunpack.c.h.b16 %v706
        %v1572 = vunpack.c.l.b16 %v707
        %v1573 = vunpack.c.h.b16 %v707
        %v1574 = vunpack.c.l.b16 %v708
        %v1575 = vunpack.c.h.b16 %v708
        %v1576 = vunpack.c.l.b16 %v709
        %v1577 = vunpack.c.h.b16 %v709
        %v1578 = vunpack.c.l.b16 %v710
        %v1579 = vunpack.c.h.b16 %v710
        %v1580 = vunpack.c.l.b16 %v711
        %v1581 = vunpack.c.h.b16 %v711
        %v1582 = vunpack.c.l.b16 %v712
        %v1583 = vunpack.c.h.b16 %v712
        %v1584 = vunpack.c.l.b16 %v713
        %v1585 = vunpack.c.h.b16 %v713
        %v1586 = vunpack.c.l.b16 %v714
        %v1587 = vunpack.c.h.b16 %v714
        %v1588 = vunpack.c.l.b16 %v715
        %v1589 = vunpack.c.h.b16 %v715
        %v1590 = vunpack.c.l.b16 %v716
        %v1591 = vunpack.c.h.b16 %v716
        %v1592 = vunpack.c.l.b16 %v717
        %v1593 = vunpack.c.h.b16 %v717
        %v1594 = vunpack.c.l.b16 %v718
        %v1595 = vunpack.c.h.b16 %v718
        %v1596 = vunpack.c.l.b16 %v719
        %v1597 = vunpack.c.h.b16 %v719
        %v1598 = vunpack.c.l.b16 %v720
        %v1599 = vunpack.c.h.b16 %v720
        %v1600 = vunpack.c.l.b16 %v721
        %v1601 = vunpack.c.h.b16 %v721
        %v1602 = vunpack.c.l.b16 %v722
        %v1603 = vunpack.c.h.b16 %v722
        %v1604 = vunpack.c.l.b16 %v723
        %v1605 = vunpack.c.h.b16 %v723
        %v1606 = vunpack.c.l.b16 %v724
        %v1607 = vunpack.c.h.b16 %v724
        %v1608 = vunpack.c.l.b16 %v725
        %v1609 = vunpack.c.h.b16 %v725
        %v1610 = vunpack.c.l.b16 %v726
        %v1611 = vunpack.c.h.b16 %v726
        %v1612 = vunpack.c.l.b16 %v727
        %v1613 = vunpack.c.h.b16 %v727
        %v1614 = vunpack.c.l.b16 %v728
        %v1615 = vunpack.c.h.b16 %v728
        %v1616 = vunpack.c.l.b16 %v729
        %v1617 = vunpack.c.h.b16 %v729
        %v1618 = vunpack.c.l.b16 %v730
        %v1619 = vunpack.c.h.b16 %v730
        %v1620 = vunpack.c.l.b16 %v731
        %v1621 = vunpack.c.h.b16 %v731
        %v1622 = vunpack.c.l.b16 %v732
        %v1623 = vunpack.c.h.b16 %v732
        %v1624 = vunpack.c.l.b16 %v733
        %v1625 = vunpack.c.h.b16 %v733
        %v1626 = vunpack.c.l.b16 %v734
        %v1627 = vunpack.c.h.b16 %v734
        %v1628 = vunpack.c.l.b16 %v735
        %v1629 = vunpack.c.h.b16 %v735
        %v1630 = vunpack.c.l.b16 %v736
        %v1631 = vunpack.c.h.b16 %v736
        %v1632 = vunpack.c.l.b16 %v737
        %v1633 = vunpack.c.h.b16 %v737
        %v1634 = vunpack.c.l.b16 %v738
        %v1635 = vunpack.c.h.b16 %v738
        %v1636 = vunpack.c.l.b16 %v739
        %v1637 = vunpack.c.h.b16 %v739
        %v1638 = vunpack.c.l.b16 %v740
        %v1639 = vunpack.c.h.b16 %v740
        %v1640 = vunpack.c.l.b16 %v741
        %v1641 = vunpack.c.h.b16 %v741
        %v1642 = vunpack.c.l.b16 %v742
        %v1643 = vunpack.c.h.b16 %v742
        %v1644 = vunpack.c.l.b16 %v743
        %v1645 = vunpack.c.h.b16 %v743
        %v1646 = vunpack.c.l.b16 %v744
        %v1647 = vunpack.c.h.b16 %v744
        %v1648 = vunpack.c.l.b16 %v745
        %v1649 = vunpack.c.h.b16 %v745
        %v1650 = vunpack.c.l.b16 %v746
        %v1651 = vunpack.c.h.b16 %v746
        %v1652 = vunpack.c.l.b16 %v747
        %v1653 = vunpack.c.h.b16 %v747
        %v1654 = vunpack.c.l.b16 %v748
        %v1655 = vunpack.c.h.b16 %v748
        %v1656 = vunpack.c.l.b16 %v749
        %v1657 = vunpack.c.h.b16 %v749
        %v1658 = vunpack.c.l.b16 %v750
        %v1659 = vunpack.c.h.b16 %v750
        %v1660 = vunpack.c.l.b16 %v751
        %v1661 = vunpack.c.h.b16 %v751
        %v1662 = vunpack.c.l.b16 %v752
        %v1663 = vunpack.c.h.b16 %v752
        %v1664 = vunpack.c.l.b16 %v753
        %v1665 = vunpack.c.h.b16 %v753
        %v1666 = vunpack.c.l.b16 %v754
        %v1667 = vunpack.c.h.b16 %v754
        %v1668 = vunpack.c.l.b16 %v755
        %v1669 = vunpack.c.h.b16 %v755
        %v1670 = vunpack.c.l.b16 %v756
        %v1671 = vunpack.c.h.b16 %v756
        %v1672 = vunpack.c.l.b16 %v757
        %v1673 = vunpack.c.h.b16 %v757
        %v1674 = vunpack.c.l.b16 %v758
        %v1675 = vunpack.c.h.b16 %v758
        %v1676 = vunpack.c.l.b16 %v759
        %v1677 = vunpack.c.h.b16 %v759
        %v1678 = vunpack.c.l.b16 %v760
        %v1679 = vunpack.c.h.b16 %v760
        %v1680 = vunpack.c.l.b16 %v761
        %v1681 = vunpack.c.h.b16 %v761
        %v1682 = vunpack.c.l.b16 %v762
        %v1683 = vunpack.c.h.b16 %v762
        %v1684 = vunpack.c.l.b16 %v763
        %v1685 = vunpack.c.h.b16 %v763
        %v1686 = vunpack.c.l.b16 %v764
        %v1687 = vunpack.c.h.b16 %v764
        %v1688 = vunpack.c.l.b16 %v765
        %v1689 = vunpack.c.h.b16 %v765
        %v1690 = vunpack.c.l.b16 %v766
        %v1691 = vunpack.c.h.b16 %v766
        %v1692 = vunpack.c.l.b16 %v767
        %v1693 = vunpack.c.h.b16 %v767
        %v1694 = vunpack.c.l.b16 %v768
        %v1695 = vunpack.c.h.b16 %v768
        %v1696 = vunpack.c.l.b16 %v769
        %v1697 = vunpack.c.h.b16 %v769
        %v1698 = vunpack.c.l.b16 %v770
        %v1699 = vunpack.c.h.b16 %v770
        %v1700 = vunpack.c.l.b16 %v771
        %v1701 = vunpack.c.h.b16 %v771
        %v1702 = vunpack.c.l.b16 %v772
        %v1703 = vunpack.c.h.b16 %v772
        %v1704 = vunpack.c.l.b16 %v773
        %v1705 = vunpack.c.h.b16 %v773
        %v1706 = vunpack.c.l.b16 %v774
        %v1707 = vunpack.c.h.b16 %v774
        %v1708 = vunpack.c.l.b16 %v775
        %v1709 = vunpack.c.h.b16 %v775
        %v1710 = vunpack.c.l.b16 %v776
        %v1711 = vunpack.c.h.b16 %v776
        %v1712 = vunpack.c.l.b16 %v777
        %v1713 = vunpack.c.h.b16 %v777
        %v1714 = vunpack.c.l.b16 %v778
        %v1715 = vunpack.c.h.b16 %v778
        %v1716 = vunpack.c.l.b16 %v779
        %v1717 = vunpack.c.h.b16 %v779
        %v1718 = vunpack.c.l.b16 %v780
        %v1719 = vunpack.c.h.b16 %v780
        %v1720 = vunpack.c.l.b16 %v781
        %v1721 = vunpack.c.h.b16 %v781
        %v1722 = vunpack.c.l.b16 %v782
        %v1723 = vunpack.c.h.b16 %v782
        %v1724 = vunpack.c.l.b16 %v783
        %v1725 = vunpack.c.h.b16 %v783
        %v1726 = vunpack.c.l.b16 %v784
        %v1727 = vunpack.c.h.b16 %v784
        %v1728 = vunpack.c.l.b16 %v785
        %v1729 = vunpack.c.h.b16 %v785
        %v1730 = vunpack.c.l.b16 %v786
        %v1731 = vunpack.c.h.b16 %v786
        %v1732 = vunpack.c.l.b16 %v787
        %v1733 = vunpack.c.h.b16 %v787
        %v1734 = vunpack.c.l.b16 %v788
        %v1735 = vunpack.c.h.b16 %v788
        %v1736 = vunpack.c.l.b16 %v789
        %v1737 = vunpack.c.h.b16 %v789
        %v1738 = vunpack.c.l.b16 %v790
        %v1739 = vunpack.c.h.b16 %v790
        %v1740 = vunpack.c.l.b16 %v791
        %v1741 = vunpack.c.h.b16 %v791
        %v1742 = vunpack.c.l.b16 %v792
        %v1743 = vunpack.c.h.b16 %v792
        %v1744 = vunpack.c.l.b16 %v793
        %v1745 = vunpack.c.h.b16 %v793
        %v1746 = vunpack.c.l.b16 %v794
        %v1747 = vunpack.c.h.b16 %v794
        %v1748 = vunpack.c.l.b16 %v795
        %v1749 = vunpack.c.h.b16 %v795
        %v1750 = vunpack.c.l.b16 %v796
        %v1751 = vunpack.c.h.b16 %v796
        %v1752 = vunpack.c.l.b16 %v797
        %v1753 = vunpack.c.h.b16 %v797
        %v1754 = vunpack.c.l.b16 %v798
        %v1755 = vunpack.c.h.b16 %v798
        %v1756 = vunpack.c.l.b16 %v799
        %v1757 = vunpack.c.h.b16 %v799
        %v1758 = vunpack.c.l.b16 %v800
        %v1759 = vunpack.c.h.b16 %v800
        %v1760 = vunpack.c.l.b16 %v801
        %v1761 = vunpack.c.h.b16 %v801
        %v1762 = vunpack.c.l.b16 %v802
        %v1763 = vunpack.c.h.b16 %v802
        %v1764 = vunpack.c.l.b16 %v803
        %v1765 = vunpack.c.h.b16 %v803
        %v1766 = vunpack.c.l.b16 %v804
        %v1767 = vunpack.c.h.b16 %v804
        %v1768 = vunpack.c.l.b16 %v805
        %v1769 = vunpack.c.h.b16 %v805
        %v1770 = vunpack.c.l.b16 %v806
        %v1771 = vunpack.c.h.b16 %v806
        %v1772 = vunpack.c.l.b16 %v807
        %v1773 = vunpack.c.h.b16 %v807
        %v1774 = vunpack.c.l.b16 %v808
        %v1775 = vunpack.c.h.b16 %v808
        %v1776 = vunpack.c.l.b16 %v809
        %v1777 = vunpack.c.h.b16 %v809
        %v1778 = vunpack.c.l.b16 %v810
        %v1779 = vunpack.c.h.b16 %v810
        %v1780 = vunpack.c.l.b16 %v811
        %v1781 = vunpack.c.h.b16 %v811
        %v1782 = vunpack.c.l.b16 %v812
        %v1783 = vunpack.c.h.b16 %v812
        %v1784 = vunpack.c.l.b16 %v813
        %v1785 = vunpack.c.h.b16 %v813
        %v1786 = vunpack.c.l.b16 %v814
        %v1787 = vunpack.c.h.b16 %v814
        %v1788 = vunpack.c.l.b16 %v815
        %v1789 = vunpack.c.h.b16 %v815
        %v1790 = vunpack.c.l.b16 %v816
        %v1791 = vunpack.c.h.b16 %v816
        %v1792 = vunpack.c.l.b16 %v817
        %v1793 = vunpack.c.h.b16 %v817
        %v1794 = vunpack.c.l.b16 %v818
        %v1795 = vunpack.c.h.b16 %v818
        %v1796 = vunpack.c.l.b16 %v819
        %v1797 = vunpack.c.h.b16 %v819
        %v1798 = vunpack.c.l.b16 %v820
        %v1799 = vunpack.c.h.b16 %v820
        %v1800 = vunpack.c.l.b16 %v821
        %v1801 = vunpack.c.h.b16 %v821
        %v1802 = vunpack.c.l.b16 %v822
        %v1803 = vunpack.c.h.b16 %v822
        %v1804 = vunpack.c.l.b16 %v823
        %v1805 = vunpack.c.h.b16 %v823
        %v1806 = vunpack.c.l.b16 %v824
        %v1807 = vunpack.c.h.b16 %v824
        %v1808 = vunpack.c.l.b16 %v825
        %v1809 = vunpack.c.h.b16 %v825
        %v1810 = vunpack.c.l.b16 %v826
        %v1811 = vunpack.c.h.b16 %v826
        %v1812 = vunpack.c.l.b16 %v827
        %v1813 = vunpack.c.h.b16 %v827
        %v1814 = vunpack.c.l.b16 %v828
        %v1815 = vunpack.c.h.b16 %v828
        %v1816 = vunpack.c.l.b16 %v829
        %v1817 = vunpack.c.h.b16 %v829
        %v1818 = vunpack.c.l.b16 %v830
        %v1819 = vunpack.c.h.b16 %v830
        %v1820 = vunpack.c.l.b16 %v831
        %v1821 = vunpack.c.h.b16 %v831
        %v1822 = vunpack.c.l.b16 %v832
        %v1823 = vunpack.c.h.b16 %v832
        %v1824 = vunpack.c.l.b16 %v833
        %v1825 = vunpack.c.h.b16 %v833
        %v1826 = vunpack.c.l.b16 %v834
        %v1827 = vunpack.c.h.b16 %v834
        %v1828 = vunpack.c.l.b16 %v835
        %v1829 = vunpack.c.h.b16 %v835
        %v1830 = vunpack.c.l.b16 %v836
        %v1831 = vunpack.c.h.b16 %v836
        %v1832 = vunpack.c.l.b16 %v837
        %v1833 = vunpack.c.h.b16 %v837
        %v1834 = vunpack.c.l.b16 %v838
        %v1835 = vunpack.c.h.b16 %v838
        %v1836 = vunpack.c.l.b16 %v839
        %v1837 = vunpack.c.h.b16 %v839
        %v1838 = vunpack.c.l.b16 %v840
        %v1839 = vunpack.c.h.b16 %v840
        %v1840 = vunpack.c.l.b16 %v841
        %v1841 = vunpack.c.h.b16 %v841
        %v1842 = vunpack.c.l.b16 %v842
        %v1843 = vunpack.c.h.b16 %v842
        %v1844 = vunpack.c.l.b16 %v843
        %v1845 = vunpack.c.h.b16 %v843
        %v1846 = vunpack.c.l.b16 %v844
        %v1847 = vunpack.c.h.b16 %v844
        %v1848 = vunpack.c.l.b16 %v845
        %v1849 = vunpack.c.h.b16 %v845
        %v1850 = vunpack.c.l.b16 %v846
        %v1851 = vunpack.c.h.b16 %v846
        %v1852 = vunpack.c.l.b16 %v847
        %v1853 = vunpack.c.h.b16 %v847
        %v1854 = vunpack.c.l.b16 %v848
        %v1855 = vunpack.c.h.b16 %v848
        %v1856 = vunpack.c.l.b16 %v849
        %v1857 = vunpack.c.h.b16 %v849
        %v1858 = vunpack.c.l.b16 %v850
        %v1859 = vunpack.c.h.b16 %v850
        %v1860 = vunpack.c.l.b16 %v851
        %v1861 = vunpack.c.h.b16 %v851
        %v1862 = vunpack.c.l.b16 %v852
        %v1863 = vunpack.c.h.b16 %v852
        %v1864 = vunpack.c.l.b16 %v853
        %v1865 = vunpack.c.h.b16 %v853
        %v1866 = vunpack.c.l.b16 %v854
        %v1867 = vunpack.c.h.b16 %v854
        %v1868 = vunpack.c.l.b16 %v855
        %v1869 = vunpack.c.h.b16 %v855
        %v1870 = vunpack.c.l.b16 %v856
        %v1871 = vunpack.c.h.b16 %v856
        %v1872 = vunpack.c.l.b16 %v857
        %v1873 = vunpack.c.h.b16 %v857
        %v1874 = vunpack.c.l.b16 %v858
        %v1875 = vunpack.c.h.b16 %v858
        %v1876 = vunpack.c.l.b16 %v859
        %v1877 = vunpack.c.h.b16 %v859
        %v1878 = vunpack.c.l.b16 %v860
        %v1879 = vunpack.c.h.b16 %v860
        %v1880 = vunpack.c.l.b16 %v861
        %v1881 = vunpack.c.h.b16 %v861
        %v1882 = vunpack.c.l.b16 %v862
        %v1883 = vunpack.c.h.b16 %v862
        %v1884 = vunpack.c.l.b16 %v863
        %v1885 = vunpack.c.h.b16 %v863
        %v1886 = vunpack.c.l.b16 %v864
        %v1887 = vunpack.c.h.b16 %v864
        %v1888 = vunpack.c.l.b16 %v865
        %v1889 = vunpack.c.h.b16 %v865
        %v1890 = vunpack.c.l.b16 %v866
        %v1891 = vunpack.c.h.b16 %v866
        %v1892 = vunpack.c.l.b16 %v867
        %v1893 = vunpack.c.h.b16 %v867
        %v1894 = vunpack.c.l.b16 %v868
        %v1895 = vunpack.c.h.b16 %v868
        %v1896 = vunpack.c.l.b16 %v869
        %v1897 = vunpack.c.h.b16 %v869
        %v1898 = vunpack.c.l.b16 %v870
        %v1899 = vunpack.c.h.b16 %v870
        %v1900 = vunpack.c.l.b16 %v871
        %v1901 = vunpack.c.h.b16 %v871
        %v1902 = vunpack.c.l.b16 %v872
        %v1903 = vunpack.c.h.b16 %v872
        %v1904 = vunpack.c.l.b16 %v873
        %v1905 = vunpack.c.h.b16 %v873
        %v1906 = vunpack.c.l.b16 %v874
        %v1907 = vunpack.c.h.b16 %v874
        %v1908 = vunpack.c.l.b16 %v875
        %v1909 = vunpack.c.h.b16 %v875
        %v1910 = vunpack.c.l.b16 %v876
        %v1911 = vunpack.c.h.b16 %v876
        %v1912 = vunpack.c.l.b16 %v877
        %v1913 = vunpack.c.h.b16 %v877
        %v1914 = vunpack.c.l.b16 %v878
        %v1915 = vunpack.c.h.b16 %v878
        %v1916 = vunpack.c.l.b16 %v879
        %v1917 = vunpack.c.h.b16 %v879
        %v1918 = vunpack.c.l.b16 %v880
        %v1919 = vunpack.c.h.b16 %v880
        %v1920 = vunpack.c.l.b16 %v881
        %v1921 = vunpack.c.h.b16 %v881
        %v1922 = vunpack.c.l.b16 %v882
        %v1923 = vunpack.c.h.b16 %v882
        %v1924 = vunpack.c.l.b16 %v883
        %v1925 = vunpack.c.h.b16 %v883
        %v1926 = vunpack.c.l.b16 %v884
        %v1927 = vunpack.c.h.b16 %v884
        %v1928 = vunpack.c.l.b16 %v885
        %v1929 = vunpack.c.h.b16 %v885
        %v1930 = vunpack.c.l.b16 %v886
        %v1931 = vunpack.c.h.b16 %v886
        %v1932 = vunpack.c.l.b16 %v887
        %v1933 = vunpack.c.h.b16 %v887
        %v1934 = vunpack.c.l.b16 %v888
        %v1935 = vunpack.c.h.b16 %v888
        %v1936 = vunpack.c.l.b16 %v889
        %v1937 = vunpack.c.h.b16 %v889
        %v1938 = vunpack.c.l.b16 %v890
        %v1939 = vunpack.c.h.b16 %v890
        %v1940 = vunpack.c.l.b16 %v891
        %v1941 = vunpack.c.h.b16 %v891
        %v1942 = vunpack.c.l.b16 %v892
        %v1943 = vunpack.c.h.b16 %v892
        %v1944 = vunpack.c.l.b16 %v893
        %v1945 = vunpack.c.h.b16 %v893
        %v1946 = vunpack.c.l.b16 %v894
        %v1947 = vunpack.c.h.b16 %v894
        %v1948 = vunpack.c.l.b16 %v895
        %v1949 = vunpack.c.h.b16 %v895
        %v1950 = vunpack.c.l.b16 %v896
        %v1951 = vunpack.c.h.b16 %v896
        %v1952 = vunpack.c.l.b16 %v897
        %v1953 = vunpack.c.h.b16 %v897
        %v1954 = vunpack.c.l.b16 %v898
        %v1955 = vunpack.c.h.b16 %v898
        %v1956 = vunpack.c.l.b16 %v899
        %v1957 = vunpack.c.h.b16 %v899
        %v1958 = vunpack.c.l.b16 %v900
        %v1959 = vunpack.c.h.b16 %v900
        %v1960 = vunpack.c.l.b16 %v901
        %v1961 = vunpack.c.h.b16 %v901
        %v1962 = vunpack.c.l.b16 %v902
        %v1963 = vunpack.c.h.b16 %v902
        %v1964 = vunpack.c.l.b16 %v903
        %v1965 = vunpack.c.h.b16 %v903
        %v1966 = vunpack.c.l.b16 %v904
        %v1967 = vunpack.c.h.b16 %v904
        %v1968 = vunpack.c.l.b16 %v905
        %v1969 = vunpack.c.h.b16 %v905
        %v1970 = vunpack.c.l.b16 %v906
        %v1971 = vunpack.c.h.b16 %v906
        %v1972 = vunpack.c.l.b16 %v907
        %v1973 = vunpack.c.h.b16 %v907
        %v1974 = vunpack.c.l.b16 %v908
        %v1975 = vunpack.c.h.b16 %v908
        %v1976 = vunpack.c.l.b16 %v909
        %v1977 = vunpack.c.h.b16 %v909
        %v1978 = vunpack.c.l.b16 %v910
        %v1979 = vunpack.c.h.b16 %v910
        %v1980 = vunpack.c.l.b16 %v911
        %v1981 = vunpack.c.h.b16 %v911
        %v1982 = vunpack.c.l.b16 %v912
        %v1983 = vunpack.c.h.b16 %v912
        %v1984 = vunpack.c.l.b16 %v913
        %v1985 = vunpack.c.h.b16 %v913
        %v1986 = vunpack.c.l.b16 %v914
        %v1987 = vunpack.c.h.b16 %v914
        %v1988 = vunpack.c.l.b16 %v915
        %v1989 = vunpack.c.h.b16 %v915
        %v1990 = vunpack.c.l.b16 %v916
        %v1991 = vunpack.c.h.b16 %v916
        %v1992 = vunpack.c.l.b16 %v917
        %v1993 = vunpack.c.h.b16 %v917
        %v1994 = vunpack.c.l.b16 %v918
        %v1995 = vunpack.c.h.b16 %v918
        %v1996 = vunpack.c.l.b16 %v919
        %v1997 = vunpack.c.h.b16 %v919
        %v1998 = vunpack.c.l.b16 %v920
        %v1999 = vunpack.c.h.b16 %v920
        %v2000 = vunpack.c.l.b16 %v921
        %v2001 = vunpack.c.h.b16 %v921
        %v2002 = vunpack.c.l.b16 %v922
        %v2003 = vunpack.c.h.b16 %v922
        %v2004 = vunpack.c.l.b16 %v923
        %v2005 = vunpack.c.h.b16 %v923
        %v2006 = vunpack.c.l.b16 %v924
        %v2007 = vunpack.c.h.b16 %v924
        %v2008 = vunpack.c.l.b16 %v925
        %v2009 = vunpack.c.h.b16 %v925
        %v2010 = vunpack.c.l.b16 %v926
        %v2011 = vunpack.c.h.b16 %v926
        %v2012 = vunpack.c.l.b16 %v927
        %v2013 = vunpack.c.h.b16 %v927
        %v2014 = vunpack.c.l.b16 %v928
        %v2015 = vunpack.c.h.b16 %v928
        %v2016 = vunpack.c.l.b16 %v929
        %v2017 = vunpack.c.h.b16 %v929
        %v2018 = vunpack.c.l.b16 %v930
        %v2019 = vunpack.c.h.b16 %v930
        %v2020 = vunpack.c.l.b16 %v931
        %v2021 = vunpack.c.h.b16 %v931
        %v2022 = vunpack.c.l.b16 %v932
        %v2023 = vunpack.c.h.b16 %v932
        %v2024 = vunpack.c.l.b16 %v933
        %v2025 = vunpack.c.h.b16 %v933
        %v2026 = vunpack.c.l.b16 %v934
        %v2027 = vunpack.c.h.b16 %v934
        %v2028 = vunpack.c.l.b16 %v935
        %v2029 = vunpack.c.h.b16 %v935
        %v2030 = vunpack.c.l.b16 %v936
        %v2031 = vunpack.c.h.b16 %v936
        %v2032 = vunpack.c.l.b16 %v937
        %v2033 = vunpack.c.h.b16 %v937
        %v2034 = vunpack.c.l.b16 %v938
        %v2035 = vunpack.c.h.b16 %v938
        %v2036 = vunpack.c.l.b16 %v939
        %v2037 = vunpack.c.h.b16 %v939
        %v2038 = vunpack.c.l.b16 %v940
        %v2039 = vunpack.c.h.b16 %v940
        %v2040 = vunpack.c.l.b16 %v941
        %v2041 = vunpack.c.h.b16 %v941
        %v2042 = vunpack.c.l.b16 %v942
        %v2043 = vunpack.c.h.b16 %v942
        %v2044 = vunpack.c.l.b16 %v943
        %v2045 = vunpack.c.h.b16 %v943
        %v2046 = vunpack.c.l.b16 %v944
        %v2047 = vunpack.c.h.b16 %v944
        %v2048 = vunpack.c.l.b16 %v945
        %v2049 = vunpack.c.h.b16 %v945
        %v2050 = vunpack.c.l.b16 %v946
        %v2051 = vunpack.c.h.b16 %v946
        %v2052 = vunpack.c.l.b16 %v947
        %v2053 = vunpack.c.h.b16 %v947
        %v2054 = vunpack.c.l.b16 %v948
        %v2055 = vunpack.c.h.b16 %v948
        %v2056 = vunpack.c.l.b16 %v949
        %v2057 = vunpack.c.h.b16 %v949
        %v2058 = vunpack.c.l.b16 %v950
        %v2059 = vunpack.c.h.b16 %v950
        %v2060 = vunpack.c.l.b16 %v951
        %v2061 = vunpack.c.h.b16 %v951
        %v2062 = vunpack.c.l.b16 %v952
        %v2063 = vunpack.c.h.b16 %v952
        %v2064 = vunpack.c.l.b16 %v953
        %v2065 = vunpack.c.h.b16 %v953
        %v2066 = vunpack.c.l.b16 %v954
        %v2067 = vunpack.c.h.b16 %v954
        %v2068 = vunpack.c.l.b16 %v955
        %v2069 = vunpack.c.h.b16 %v955
        %v2070 = vunpack.c.l.b16 %v956
        %v2071 = vunpack.c.h.b16 %v956
        %v2072 = vunpack.c.l.b16 %v957
        %v2073 = vunpack.c.h.b16 %v957
        %v2074 = vunpack.c.l.b16 %v958
        %v2075 = vunpack.c.h.b16 %v958
        %v2076 = vunpack.c.l.b16 %v959
        %v2077 = vunpack.c.h.b16 %v959
        %v2078 = vunpack.c.l.b16 %v960
        %v2079 = vunpack.c.h.b16 %v960
        %v2080 = vunpack.c.l.b16 %v961
        %v2081 = vunpack.c.h.b16 %v961
        %v2082 = vunpack.c.l.b16 %v962
        %v2083 = vunpack.c.h.b16 %v962
        %v2084 = vunpack.c.l.b16 %v963
        %v2085 = vunpack.c.h.b16 %v963
        %v2086 = vunpack.c.l.b16 %v964
        %v2087 = vunpack.c.h.b16 %v964
        %v2088 = vunpack.c.l.b16 %v965
        %v2089 = vunpack.c.h.b16 %v965
        %v2090 = vunpack.c.l.b16 %v966
        %v2091 = vunpack.c.h.b16 %v966
        %v2092 = vunpack.c.l.b16 %v967
        %v2093 = vunpack.c.h.b16 %v967
        %v2094 = vunpack.c.l.b16 %v968
        %v2095 = vunpack.c.h.b16 %v968
        %v2096 = vunpack.c.l.b16 %v969
        %v2097 = vunpack.c.h.b16 %v969
        %v2098 = vunpack.c.l.b16 %v970
        %v2099 = vunpack.c.h.b16 %v970
        %v2100 = vunpack.c.l.b16 %v971
        %v2101 = vunpack.c.h.b16 %v971
        %v2102 = vunpack.c.l.b16 %v972
        %v2103 = vunpack.c.h.b16 %v972
        %v2104 = vunpack.c.l.b16 %v973
        %v2105 = vunpack.c.h.b16 %v973
        %v2106 = vunpack.c.l.b16 %v974
        %v2107 = vunpack.c.h.b16 %v974
        %v2108 = vunpack.c.l.b16 %v975
        %v2109 = vunpack.c.h.b16 %v975
        %v2110 = vunpack.c.l.b16 %v976
        %v2111 = vunpack.c.h.b16 %v976
        %v2112 = vunpack.c.l.b16 %v977
        %v2113 = vunpack.c.h.b16 %v977
        %v2114 = vunpack.c.l.b16 %v978
        %v2115 = vunpack.c.h.b16 %v978
        %v2116 = vunpack.c.l.b16 %v979
        %v2117 = vunpack.c.h.b16 %v979
        %v2118 = vunpack.c.l.b16 %v980
        %v2119 = vunpack.c.h.b16 %v980
        %v2120 = vunpack.c.l.b16 %v981
        %v2121 = vunpack.c.h.b16 %v981
        %v2122 = vunpack.c.l.b16 %v982
        %v2123 = vunpack.c.h.b16 %v982
        %v2124 = vunpack.c.l.b16 %v983
        %v2125 = vunpack.c.h.b16 %v983
        %v2126 = vunpack.c.l.b16 %v984
        %v2127 = vunpack.c.h.b16 %v984
        %v2128 = vunpack.c.l.b16 %v985
        %v2129 = vunpack.c.h.b16 %v985
        %v2130 = vunpack.c.l.b16 %v986
        %v2131 = vunpack.c.h.b16 %v986
        %v2132 = vunpack.c.l.b16 %v987
        %v2133 = vunpack.c.h.b16 %v987
        %v2134 = vunpack.c.l.b16 %v988
        %v2135 = vunpack.c.h.b16 %v988
        %v2136 = vunpack.c.l.b16 %v989
        %v2137 = vunpack.c.h.b16 %v989
        %v2138 = vunpack.c.l.b16 %v990
        %v2139 = vunpack.c.h.b16 %v990
        %v2140 = vunpack.c.l.b16 %v991
        %v2141 = vunpack.c.h.b16 %v991
        %v2142 = vunpack.c.l.b16 %v992
        %v2143 = vunpack.c.h.b16 %v992
        %v2144 = vunpack.c.l.b16 %v993
        %v2145 = vunpack.c.h.b16 %v993
        %v2146 = vunpack.c.l.b16 %v994
        %v2147 = vunpack.c.h.b16 %v994
        %v2148 = vunpack.c.l.b16 %v995
        %v2149 = vunpack.c.h.b16 %v995
        %v2150 = vunpack.c.l.b16 %v996
        %v2151 = vunpack.c.h.b16 %v996
        %v2152 = vunpack.c.l.b16 %v997
        %v2153 = vunpack.c.h.b16 %v997
        %v2154 = vunpack.c.l.b16 %v998
        %v2155 = vunpack.c.h.b16 %v998
        %v2156 = vunpack.c.l.b16 %v999
        %v2157 = vunpack.c.h.b16 %v999
        %v2158 = vunpack.c.l.b16 %v1000
        %v2159 = vunpack.c.h.b16 %v1000
        %v2160 = vunpack.c.l.b16 %v1001
        %v2161 = vunpack.c.h.b16 %v1001
        %v2162 = vunpack.c.l.b16 %v1002
        %v2163 = vunpack.c.h.b16 %v1002
        %v2164 = vunpack.c.l.b16 %v1003
        %v2165 = vunpack.c.h.b16 %v1003
        %v2166 = vunpack.c.l.b16 %v1004
        %v2167 = vunpack.c.h.b16 %v1004
        %v2168 = vunpack.c.l.b16 %v1005
        %v2169 = vunpack.c.h.b16 %v1005
        %v2170 = vunpack.c.l.b16 %v1006
        %v2171 = vunpack.c.h.b16 %v1006
        %v2172 = vunpack.c.l.b16 %v1007
        %v2173 = vunpack.c.h.b16 %v1007
        %v2174 = vunpack.c.l.b16 %v1008
        %v2175 = vunpack.c.h.b16 %v1008
        %v2176 = vunpack.c.l.b16 %v1009
        %v2177 = vunpack.c.h.b16 %v1009
        %v2178 = vunpack.c.l.b16 %v1010
        %v2179 = vunpack.c.h.b16 %v1010
        %v2180 = vunpack.c.l.b16 %v1011
        %v2181 = vunpack.c.h.b16 %v1011
        %v2182 = vunpack.c.l.b16 %v1012
        %v2183 = vunpack.c.h.b16 %v1012
        %v2184 = vunpack.c.l.b16 %v1013
        %v2185 = vunpack.c.h.b16 %v1013
        %v2186 = vunpack.c.l.b16 %v1014
        %v2187 = vunpack.c.h.b16 %v1014
        %v2188 = vunpack.c.l.b16 %v1015
        %v2189 = vunpack.c.h.b16 %v1015
        %v2190 = vunpack.c.l.b16 %v1016
        %v2191 = vunpack.c.h.b16 %v1016
        %v2192 = vunpack.c.l.b16 %v1017
        %v2193 = vunpack.c.h.b16 %v1017
        %v2194 = vunpack.c.l.b16 %v1018
        %v2195 = vunpack.c.h.b16 %v1018
        %v2196 = vunpack.c.l.b16 %v1019
        %v2197 = vunpack.c.h.b16 %v1019
        %v2198 = vunpack.c.l.b16 %v1020
        %v2199 = vunpack.c.h.b16 %v1020
        %v2200 = vunpack.c.l.b16 %v1021
        %v2201 = vunpack.c.h.b16 %v1021
        %v2202 = vpack.c.b16 %v1440, %v1434
        %v2203 = vpack.c.b16 %v1441, %v1435
        %v2204 = vpack.c.b16 %v1442, %v1436
        %v2205 = vpack.c.b16 %v1443, %v1437
        %v2206 = vpack.c.b16 %v1444, %v1438
        %v2207 = vpack.c.b16 %v1445, %v1439
        %v2208 = vpack.c.b16 %v1452, %v1446
        %v2209 = vpack.c.b16 %v1453, %v1447
        %v2210 = vpack.c.b16 %v1454, %v1448
        %v2211 = vpack.c.b16 %v1455, %v1449
        %v2212 = vpack.c.b16 %v1456, %v1450
        %v2213 = vpack.c.b16 %v1457, %v1451
        %v2214 = vpack.c.b16 %v1464, %v1458
        %v2215 = vpack.c.b16 %v1465, %v1459
        %v2216 = vpack.c.b16 %v1466, %v1460
        %v2217 = vpack.c.b16 %v1467, %v1461
        %v2218 = vpack.c.b16 %v1468, %v1462
        %v2219 = vpack.c.b16 %v1469, %v1463
        %v2220 = vpack.c.b16 %v1476, %v1470
        %v2221 = vpack.c.b16 %v1477, %v1471
        %v2222 = vpack.c.b16 %v1478, %v1472
        %v2223 = vpack.c.b16 %v1479, %v1473
        %v2224 = vpack.c.b16 %v1480, %v1474
        %v2225 = vpack.c.b16 %v1481, %v1475
        %v2226 = vpack.c.b16 %v1488, %v1482
        %v2227 = vpack.c.b16 %v1489, %v1483
        %v2228 = vpack.c.b16 %v1490, %v1484
        %v2229 = vpack.c.b16 %v1491, %v1485
        %v2230 = vpack.c.b16 %v1492, %v1486
        %v2231 = vpack.c.b16 %v1493, %v1487
        %v2232 = vpack.c.b16 %v1500, %v1494
        %v2233 = vpack.c.b16 %v1501, %v1495
        %v2234 = vpack.c.b16 %v1502, %v1496
        %v2235 = vpack.c.b16 %v1503, %v1497
        %v2236 = vpack.c.b16 %v1504, %v1498
        %v2237 = vpack.c.b16 %v1505, %v1499
        %v2238 = vpack.c.b16 %v1512, %v1506
        %v2239 = vpack.c.b16 %v1513, %v1507
        %v2240 = vpack.c.b16 %v1514, %v1508
        %v2241 = vpack.c.b16 %v1515, %v1509
        %v2242 = vpack.c.b16 %v1516, %v1510
        %v2243 = vpack.c.b16 %v1517, %v1511
        %v2244 = vpack.c.b16 %v1524, %v1518
        %v2245 = vpack.c.b16 %v1525, %v1519
        %v2246 = vpack.c.b16 %v1526, %v1520
        %v2247 = vpack.c.b16 %v1527, %v1521
        %v2248 = vpack.c.b16 %v1528, %v1522
        %v2249 = vpack.c.b16 %v1529, %v1523
        %v2250 = vpack.c.b16 %v1536, %v1530
        %v2251 = vpack.c.b16 %v1537, %v1531
        %v2252 = vpack.c.b16 %v1538, %v1532
        %v2253 = vpack.c.b16 %v1539, %v1533
        %v2254 = vpack.c.b16 %v1540, %v1534
        %v2255 = vpack.c.b16 %v1541, %v1535
        %v2256 = vpack.c.b16 %v1548, %v1542
        %v2257 = vpack.c.b16 %v1549, %v1543
        %v2258 = vpack.c.b16 %v1550, %v1544
        %v2259 = vpack.c.b16 %v1551, %v1545
        %v2260 = vpack.c.b16 %v1552, %v1546
        %v2261 = vpack.c.b16 %v1553, %v1547
        %v2262 = vpack.c.b16 %v1560, %v1554
        %v2263 = vpack.c.b16 %v1561, %v1555
        %v2264 = vpack.c.b16 %v1562, %v1556
        %v2265 = vpack.c.b16 %v1563, %v1557
        %v2266 = vpack.c.b16 %v1564, %v1558
        %v2267 = vpack.c.b16 %v1565, %v1559
        %v2268 = vpack.c.b16 %v1572, %v1566
        %v2269 = vpack.c.b16 %v1573, %v1567
        %v2270 = vpack.c.b16 %v1574, %v1568
        %v2271 = vpack.c.b16 %v1575, %v1569
        %v2272 = vpack.c.b16 %v1576, %v1570
        %v2273 = vpack.c.b16 %v1577, %v1571
        %v2274 = vpack.c.b16 %v1584, %v1578
        %v2275 = vpack.c.b16 %v1585, %v1579
        %v2276 = vpack.c.b16 %v1586, %v1580
        %v2277 = vpack.c.b16 %v1587, %v1581
        %v2278 = vpack.c.b16 %v1588, %v1582
        %v2279 = vpack.c.b16 %v1589, %v1583
        %v2280 = vpack.c.b16 %v1596, %v1590
        %v2281 = vpack.c.b16 %v1597, %v1591
        %v2282 = vpack.c.b16 %v1598, %v1592
        %v2283 = vpack.c.b16 %v1599, %v1593
        %v2284 = vpack.c.b16 %v1600, %v1594
        %v2285 = vpack.c.b16 %v1601, %v1595
        %v2286 = vpack.c.b16 %v1608, %v1602
        %v2287 = vpack.c.b16 %v1609, %v1603
        %v2288 = vpack.c.b16 %v1610, %v1604
        %v2289 = vpack.c.b16 %v1611, %v1605
        %v2290 = vpack.c.b16 %v1612, %v1606
        %v2291 = vpack.c.b16 %v1613, %v1607
        %v2292 = vpack.c.b16 %v1620, %v1614
        %v2293 = vpack.c.b16 %v1621, %v1615
        %v2294 = vpack.c.b16 %v1622, %v1616
        %v2295 = vpack.c.b16 %v1623, %v1617
        %v2296 = vpack.c.b16 %v1624, %v1618
        %v2297 = vpack.c.b16 %v1625, %v1619
        %v2298 = vpack.c.b16 %v1632, %v1626
        %v2299 = vpack.c.b16 %v1633, %v1627
        %v2300 = vpack.c.b16 %v1634, %v1628
        %v2301 = vpack.c.b16 %v1635, %v1629
        %v2302 = vpack.c.b16 %v1636, %v1630
        %v2303 = vpack.c.b16 %v1637, %v1631
        %v2304 = vpack.c.b16 %v1644, %v1638
        %v2305 = vpack.c.b16 %v1645, %v1639
        %v2306 = vpack.c.b16 %v1646, %v1640
        %v2307 = vpack.c.b16 %v1647, %v1641
        %v2308 = vpack.c.b16 %v1648, %v1642
        %v2309 = vpack.c.b16 %v1649, %v1643
        %v2310 = vpack.c.b16 %v1656, %v1650
        %v2311 = vpack.c.b16 %v1657, %v1651
        %v2312 = vpack.c.b16 %v1658, %v1652
        %v2313 = vpack.c.b16 %v1659, %v1653
        %v2314 = vpack.c.b16 %v1660, %v1654
        %v2315 = vpack.c.b16 %v1661, %v1655
        %v2316 = vpack.c.b16 %v1668, %v1662
        %v2317 = vpack.c.b16 %v1669, %v1663
        %v2318 = vpack.c.b16 %v1670, %v1664
        %v2319 = vpack.c.b16 %v1671, %v1665
        %v2320 = vpack.c.b16 %v1672, %v1666
        %v2321 = vpack.c.b16 %v1673, %v1667
        %v2322 = vpack.c.b16 %v1680, %v1674
        %v2323 = vpack.c.b16 %v1681, %v1675
        %v2324 = vpack.c.b16 %v1682, %v1676
        %v2325 = vpack.c.b16 %v1683, %v1677
        %v2326 = vpack.c.b16 %v1684, %v1678
        %v2327 = vpack.c.b16 %v1685, %v1679
        %v2328 = vpack.c.b16 %v1692, %v1686
        %v2329 = vpack.c.b16 %v1693, %v1687
        %v2330 = vpack.c.b16 %v1694, %v1688
        %v2331 = vpack.c.b16 %v1695, %v1689
        %v2332 = vpack.c.b16 %v1696, %v1690
        %v2333 = vpack.c.b16 %v1697, %v1691
        %v2334 = vpack.c.b16 %v1704, %v1698
        %v2335 = vpack.c.b16 %v1705, %v1699
        %v2336 = vpack.c.b16 %v1706, %v1700
        %v2337 = vpack.c.b16 %v1707, %v1701
        %v2338 = vpack.c.b16 %v1708, %v1702
        %v2339 = vpack.c.b16 %v1709, %v1703
        %v2340 = vpack.c.b16 %v1716, %v1710
        %v2341 = vpack.c.b16 %v1717, %v1711
        %v2342 = vpack.c.b16 %v1718, %v1712
        %v2343 = vpack.c.b16 %v1719, %v1713
        %v2344 = vpack.c.b16 %v1720, %v1714
        %v2345 = vpack.c.b16 %v1721, %v1715
        %v2346 = vpack.c.b16 %v1728, %v1722
        %v2347 = vpack.c.b16 %v1729, %v1723
        %v2348 = vpack.c.b16 %v1730, %v1724
        %v2349 = vpack.c.b16 %v1731, %v1725
        %v2350 = vpack.c.b16 %v1732, %v1726
        %v2351 = vpack.c.b16 %v1733, %v1727
        %v2352 = vpack.c.b16 %v1740, %v1734
        %v2353 = vpack.c.b16 %v1741, %v1735
        %v2354 = vpack.c.b16 %v1742, %v1736
        %v2355 = vpack.c.b16 %v1743, %v1737
        %v2356 = vpack.c.b16 %v1744, %v1738
        %v2357 = vpack.c.b16 %v1745, %v1739
        %v2358 = vpack.c.b16 %v1752, %v1746
        %v2359 = vpack.c.b16 %v1753, %v1747
        %v2360 = vpack.c.b16 %v1754, %v1748
        %v2361 = vpack.c.b16 %v1755, %v1749
        %v2362 = vpack.c.b16 %v1756, %v1750
        %v2363 = vpack.c.b16 %v1757, %v1751
        %v2364 = vpack.c.b16 %v1764, %v1758
        %v2365 = vpack.c.b16 %v1765, %v1759
        %v2366 = vpack.c.b16 %v1766, %v1760
        %v2367 = vpack.c.b16 %v1767, %v1761
        %v2368 = vpack.c.b16 %v1768, %v1762
        %v2369 = vpack.c.b16 %v1769, %v1763
        %v2370 = vpack.c.b16 %v1776, %v1770
        %v2371 = vpack.c.b16 %v1777, %v1771
        %v2372 = vpack.c.b16 %v1778, %v1772
        %v2373 = vpack.c.b16 %v1779, %v1773
        %v2374 = vpack.c.b16 %v1780, %v1774
        %v2375 = vpack.c.b16 %v1781, %v1775
        %v2376 = vpack.c.b16 %v1788, %v1782
        %v2377 = vpack.c.b16 %v1789, %v1783
        %v2378 = vpack.c.b16 %v1790, %v1784
        %v2379 = vpack.c.b16 %v1791, %v1785
        %v2380 = vpack.c.b16 %v1792, %v1786
        %v2381 = vpack.c.b16 %v1793, %v1787
        %v2382 = vpack.c.b16 %v1800, %v1794
        %v2383 = vpack.c.b16 %v1801, %v1795
        %v2384 = vpack.c.b16 %v1802, %v1796
        %v2385 = vpack.c.b16 %v1803, %v1797
        %v2386 = vpack.c.b16 %v1804, %v1798
        %v2387 = vpack.c.b16 %v1805, %v1799
        %v2388 = vpack.c.b16 %v1812, %v1806
        %v2389 = vpack.c.b16 %v1813, %v1807
        %v2390 = vpack.c.b16 %v1814, %v1808
        %v2391 = vpack.c.b16 %v1815, %v1809
        %v2392 = vpack.c.b16 %v1816, %v1810
        %v2393 = vpack.c.b16 %v1817, %v1811
        %v2394 = vpack.c.b16 %v1824, %v1818
        %v2395 = vpack.c.b16 %v1825, %v1819
        %v2396 = vpack.c.b16 %v1826, %v1820
        %v2397 = vpack.c.b16 %v1827, %v1821
        %v2398 = vpack.c.b16 %v1828, %v1822
        %v2399 = vpack.c.b16 %v1829, %v1823
        %v2400 = vpack.c.b16 %v1836, %v1830
        %v2401 = vpack.c.b16 %v1837, %v1831
        %v2402 = vpack.c.b16 %v1838, %v1832
        %v2403 = vpack.c.b16 %v1839, %v1833
        %v2404 = vpack.c.b16 %v1840, %v1834
        %v2405 = vpack.c.b16 %v1841, %v1835
        %v2406 = vpack.c.b16 %v1848, %v1842
        %v2407 = vpack.c.b16 %v1849, %v1843
        %v2408 = vpack.c.b16 %v1850, %v1844
        %v2409 = vpack.c.b16 %v1851, %v1845
        %v2410 = vpack.c.b16 %v1852, %v1846
        %v2411 = vpack.c.b16 %v1853, %v1847
        %v2412 = vpack.c.b16 %v1860, %v1854
        %v2413 = vpack.c.b16 %v1861, %v1855
        %v2414 = vpack.c.b16 %v1862, %v1856
        %v2415 = vpack.c.b16 %v1863, %v1857
        %v2416 = vpack.c.b16 %v1864, %v1858
        %v2417 = vpack.c.b16 %v1865, %v1859
        %v2418 = vpack.c.b16 %v1872, %v1866
        %v2419 = vpack.c.b16 %v1873, %v1867
        %v2420 = vpack.c.b16 %v1874, %v1868
        %v2421 = vpack.c.b16 %v1875, %v1869
        %v2422 = vpack.c.b16 %v1876, %v1870
        %v2423 = vpack.c.b16 %v1877, %v1871
        %v2424 = vpack.c.b16 %v1884, %v1878
        %v2425 = vpack.c.b16 %v1885, %v1879
        %v2426 = vpack.c.b16 %v1886, %v1880
        %v2427 = vpack.c.b16 %v1887, %v1881
        %v2428 = vpack.c.b16 %v1888, %v1882
        %v2429 = vpack.c.b16 %v1889, %v1883
        %v2430 = vpack.c.b16 %v1896, %v1890
        %v2431 = vpack.c.b16 %v1897, %v1891
        %v2432 = vpack.c.b16 %v1898, %v1892
        %v2433 = vpack.c.b16 %v1899, %v1893
        %v2434 = vpack.c.b16 %v1900, %v1894
        %v2435 = vpack.c.b16 %v1901, %v1895
        %v2436 = vpack.c.b16 %v1908, %v1902
        %v2437 = vpack.c.b16 %v1909, %v1903
        %v2438 = vpack.c.b16 %v1910, %v1904
        %v2439 = vpack.c.b16 %v1911, %v1905
        %v2440 = vpack.c.b16 %v1912, %v1906
        %v2441 = vpack.c.b16 %v1913, %v1907
        %v2442 = vpack.c.b16 %v1920, %v1914
        %v2443 = vpack.c.b16 %v1921, %v1915
        %v2444 = vpack.c.b16 %v1922, %v1916
        %v2445 = vpack.c.b16 %v1923, %v1917
        %v2446 = vpack.c.b16 %v1924, %v1918
        %v2447 = vpack.c.b16 %v1925, %v1919
        %v2448 = vpack.c.b16 %v1932, %v1926
        %v2449 = vpack.c.b16 %v1933, %v1927
        %v2450 = vpack.c.b16 %v1934, %v1928
        %v2451 = vpack.c.b16 %v1935, %v1929
        %v2452 = vpack.c.b16 %v1936, %v1930
        %v2453 = vpack.c.b16 %v1937, %v1931
        %v2454 = vpack.c.b16 %v1944, %v1938
        %v2455 = vpack.c.b16 %v1945, %v1939
        %v2456 = vpack.c.b16 %v1946, %v1940
        %v2457 = vpack.c.b16 %v1947, %v1941
        %v2458 = vpack.c.b16 %v1948, %v1942
        %v2459 = vpack.c.b16 %v1949, %v1943
        %v2460 = vpack.c.b16 %v1956, %v1950
        %v2461 = vpack.c.b16 %v1957, %v1951
        %v2462 = vpack.c.b16 %v1958, %v1952
        %v2463 = vpack.c.b16 %v1959, %v1953
        %v2464 = vpack.c.b16 %v1960, %v1954
        %v2465 = vpack.c.b16 %v1961, %v1955
        %v2466 = vpack.c.b16 %v1968, %v1962
        %v2467 = vpack.c.b16 %v1969, %v1963
        %v2468 = vpack.c.b16 %v1970, %v1964
        %v2469 = vpack.c.b16 %v1971, %v1965
        %v2470 = vpack.c.b16 %v1972, %v1966
        %v2471 = vpack.c.b16 %v1973, %v1967
        %v2472 = vpack.c.b16 %v1980, %v1974
        %v2473 = vpack.c.b16 %v1981, %v1975
        %v2474 = vpack.c.b16 %v1982, %v1976
        %v2475 = vpack.c.b16 %v1983, %v1977
        %v2476 = vpack.c.b16 %v1984, %v1978
        %v2477 = vpack.c.b16 %v1985, %v1979
        %v2478 = vpack.c.b16 %v1992, %v1986
        %v2479 = vpack.c.b16 %v1993, %v1987
        %v2480 = vpack.c.b16 %v1994, %v1988
        %v2481 = vpack.c.b16 %v1995, %v1989
        %v2482 = vpack.c.b16 %v1996, %v1990
        %v2483 = vpack.c.b16 %v1997, %v1991
        %v2484 = vpack.c.b16 %v2004, %v1998
        %v2485 = vpack.c.b16 %v2005, %v1999
        %v2486 = vpack.c.b16 %v2006, %v2000
        %v2487 = vpack.c.b16 %v2007, %v2001
        %v2488 = vpack.c.b16 %v2008, %v2002
        %v2489 = vpack.c.b16 %v2009, %v2003
        %v2490 = vpack.c.b16 %v2016, %v2010
        %v2491 = vpack.c.b16 %v2017, %v2011
        %v2492 = vpack.c.b16 %v2018, %v2012
        %v2493 = vpack.c.b16 %v2019, %v2013
        %v2494 = vpack.c.b16 %v2020, %v2014
        %v2495 = vpack.c.b16 %v2021, %v2015
        %v2496 = vpack.c.b16 %v2028, %v2022
        %v2497 = vpack.c.b16 %v2029, %v2023
        %v2498 = vpack.c.b16 %v2030, %v2024
        %v2499 = vpack.c.b16 %v2031, %v2025
        %v2500 = vpack.c.b16 %v2032, %v2026
        %v2501 = vpack.c.b16 %v2033, %v2027
        %v2502 = vpack.c.b16 %v2040, %v2034
        %v2503 = vpack.c.b16 %v2041, %v2035
        %v2504 = vpack.c.b16 %v2042, %v2036
        %v2505 = vpack.c.b16 %v2043, %v2037
        %v2506 = vpack.c.b16 %v2044, %v2038
        %v2507 = vpack.c.b16 %v2045, %v2039
        %v2508 = vpack.c.b16 %v2052, %v2046
        %v2509 = vpack.c.b16 %v2053, %v2047
        %v2510 = vpack.c.b16 %v2054, %v2048
        %v2511 = vpack.c.b16 %v2055, %v2049
        %v2512 = vpack.c.b16 %v2056, %v2050
        %v2513 = vpack.c.b16 %v2057, %v2051
        %v2514 = vpack.c.b16 %v2064, %v2058
        %v2515 = vpack.c.b16 %v2065, %v2059
        %v2516 = vpack.c.b16 %v2066, %v2060
        %v2517 = vpack.c.b16 %v2067, %v2061
        %v2518 = vpack.c.b16 %v2068, %v2062
        %v2519 = vpack.c.b16 %v2069, %v2063
        %v2520 = vpack.c.b16 %v2076, %v2070
        %v2521 = vpack.c.b16 %v2077, %v2071
        %v2522 = vpack.c.b16 %v2078, %v2072
        %v2523 = vpack.c.b16 %v2079, %v2073
        %v2524 = vpack.c.b16 %v2080, %v2074
        %v2525 = vpack.c.b16 %v2081, %v2075
        %v2526 = vpack.c.b16 %v2088, %v2082
        %v2527 = vpack.c.b16 %v2089, %v2083
        %v2528 = vpack.c.b16 %v2090, %v2084
        %v2529 = vpack.c.b16 %v2091, %v2085
        %v2530 = vpack.c.b16 %v2092, %v2086
        %v2531 = vpack.c.b16 %v2093, %v2087
        %v2532 = vpack.c.b16 %v2100, %v2094
        %v2533 = vpack.c.b16 %v2101, %v2095
        %v2534 = vpack.c.b16 %v2102, %v2096
        %v2535 = vpack.c.b16 %v2103, %v2097
        %v2536 = vpack.c.b16 %v2104, %v2098
        %v2537 = vpack.c.b16 %v2105, %v2099
        %v2538 = vpack.c.b16 %v2112, %v2106
        %v2539 = vpack.c.b16 %v2113, %v2107
        %v2540 = vpack.c.b16 %v2114, %v2108
        %v2541 = vpack.c.b16 %v2115, %v2109
        %v2542 = vpack.c.b16 %v2116, %v2110
        %v2543 = vpack.c.b16 %v2117, %v2111
        %v2544 = vpack.c.b16 %v2124, %v2118
        %v2545 = vpack.c.b16 %v2125, %v2119
        %v2546 = vpack.c.b16 %v2126, %v2120
        %v2547 = vpack.c.b16 %v2127, %v2121
        %v2548 = vpack.c.b16 %v2128, %v2122
        %v2549 = vpack.c.b16 %v2129, %v2123
        %v2550 = vpack.c.b16 %v2136, %v2130
        %v2551 = vpack.c.b16 %v2137, %v2131
        %v2552 = vpack.c.b16 %v2138, %v2132
        %v2553 = vpack.c.b16 %v2139, %v2133
        %v2554 = vpack.c.b16 %v2140, %v2134
        %v2555 = vpack.c.b16 %v2141, %v2135
        %v2556 = vpack.c.b16 %v2148, %v2142
        %v2557 = vpack.c.b16 %v2149, %v2143
        %v2558 = vpack.c.b16 %v2150, %v2144
        %v2559 = vpack.c.b16 %v2151, %v2145
        %v2560 = vpack.c.b16 %v2152, %v2146
        %v2561 = vpack.c.b16 %v2153, %v2147
        %v2562 = vpack.c.b16 %v2160, %v2154
        %v2563 = vpack.c.b16 %v2161, %v2155
        %v2564 = vpack.c.b16 %v2162, %v2156
        %v2565 = vpack.c.b16 %v2163, %v2157
        %v2566 = vpack.c.b16 %v2164, %v2158
        %v2567 = vpack.c.b16 %v2165, %v2159
        %v2568 = vpack.c.b16 %v2172, %v2166
        %v2569 = vpack.c.b16 %v2173, %v2167
        %v2570 = vpack.c.b16 %v2174, %v2168
        %v2571 = vpack.c.b16 %v2175, %v2169
        %v2572 = vpack.c.b16 %v2176, %v2170
        %v2573 = vpack.c.b16 %v2177, %v2171
        %v2574 = vpack.c.b16 %v2184, %v2178
        %v2575 = vpack.c.b16 %v2185, %v2179
        %v2576 = vpack.c.b16 %v2186, %v2180
        %v2577 = vpack.c.b16 %v2187, %v2181
        %v2578 = vpack.c.b16 %v2188, %v2182
        %v2579 = vpack.c.b16 %v2189, %v2183
        %v2580 = vpack.c.b16 %v2196, %v2190
        %v2581 = vpack.c.b16 %v2197, %v2191
        %v2582 = vpack.c.b16 %v2198, %v2192
        %v2583 = vpack.c.b16 %v2199, %v2193
        %v2584 = vpack.c.b16 %v2200, %v2194
        %v2585 = vpack.c.b16 %v2201, %v2195
        %2970 = vmatprep.subr.bf16.mxu0 %v2245
        %2971 = vmatpush1.bf16.msra.mxu0 %v2244
        %2972 = vmatprep.subr.bf16.mxu0 %v2239
        %2973 = vmatpush1.bf16.msra.mxu0 %v2238
        %2974 = vmatprep.subr.bf16.mxu0 %v2233
        %2975 = vmatpush1.bf16.msra.mxu0 %v2232
        %2976 = vmatprep.subr.bf16.mxu0 %v2227
        %2977 = vmatpush1.bf16.msra.mxu0 %v2226
        %2978 = vmatprep.subr.bf16.mxu0 %v2221
        %2979 = vmatpush1.bf16.msra.mxu0 %v2220
        %2980 = vmatprep.subr.bf16.mxu0 %v2215
        %2981 = vmatpush1.bf16.msra.mxu0 %v2214
        %2982 = vmatprep.subr.bf16.mxu0 %v2209
        %2983 = vmatpush1.bf16.msra.mxu0 %v2208
        %2984 = vmatprep.subr.bf16.mxu0 %v2203
        %2985 = vmatpush1.bf16.msra.mxu0 %v2202
        %2986 = vmatprep.subr.bf16.mxu0 %v2293
        %2987 = vmatpush2.bf16.msra.mxu0 %v2292
        %2988 = vmatprep.subr.bf16.mxu0 %v2287
        %2989 = vmatpush2.bf16.msra.mxu0 %v2286
        %2990 = vmatprep.subr.bf16.mxu0 %v2281
        %2991 = vmatpush2.bf16.msra.mxu0 %v2280
        %2992 = vmatprep.subr.bf16.mxu0 %v2275
        %2993 = vmatpush2.bf16.msra.mxu0 %v2274
        %2994 = vmatprep.subr.bf16.mxu0 %v2269
        %2995 = vmatpush2.bf16.msra.mxu0 %v2268
        %2996 = vmatprep.subr.bf16.mxu0 %v2263
        %2997 = vmatpush2.bf16.msra.mxu0 %v2262
        %2998 = vmatprep.subr.bf16.mxu0 %v2257
        %2999 = vmatpush2.bf16.msra.mxu0 %v2256
        %3000 = vmatprep.subr.bf16.mxu0 %v2251
        %3001 = vmatpush2.bf16.msra.mxu0 %v2250
        %3002 = vmatprep.mubr.bf16.mxu0 %v1035
        %3003 = vmatmul.mubr.bf16.gmra.mxu0 %v1034
        %v3004 = vpop.f32.mrf.mxu0
        %v3005 = vadd.f32 0.0, %v3004
        %v3006 = vpop.f32.mrf.mxu0
        %v3007 = vadd.f32 0.0, %v3006
        %v3008 = vpop.f32.mrf.mxu0
        %v3009 = vpop.f32.mrf.mxu0
        %3010 = vdwg.mxu0
        %3011 = vmatprep.subr.bf16.mxu0 %v2341
        %3012 = vmatpush1.bf16.msra.mxu0 %v2340
        %3013 = vmatprep.subr.bf16.mxu0 %v2335
        %3014 = vmatpush1.bf16.msra.mxu0 %v2334
        %3015 = vmatprep.subr.bf16.mxu0 %v2329
        %3016 = vmatpush1.bf16.msra.mxu0 %v2328
        %3017 = vmatprep.subr.bf16.mxu0 %v2323
        %3018 = vmatpush1.bf16.msra.mxu0 %v2322
        %3019 = vmatprep.subr.bf16.mxu0 %v2317
        %3020 = vmatpush1.bf16.msra.mxu0 %v2316
        %3021 = vmatprep.subr.bf16.mxu0 %v2311
        %3022 = vmatpush1.bf16.msra.mxu0 %v2310
        %3023 = vmatprep.subr.bf16.mxu0 %v2305
        %3024 = vmatpush1.bf16.msra.mxu0 %v2304
        %3025 = vmatprep.subr.bf16.mxu0 %v2299
        %3026 = vmatpush1.bf16.msra.mxu0 %v2298
        %3027 = vmatprep.subr.bf16.mxu0 %v2389
        %3028 = vmatpush2.bf16.msra.mxu0 %v2388
        %3029 = vmatprep.subr.bf16.mxu0 %v2383
        %3030 = vmatpush2.bf16.msra.mxu0 %v2382
        %3031 = vmatprep.subr.bf16.mxu0 %v2377
        %3032 = vmatpush2.bf16.msra.mxu0 %v2376
        %3033 = vmatprep.subr.bf16.mxu0 %v2371
        %3034 = vmatpush2.bf16.msra.mxu0 %v2370
        %3035 = vmatprep.subr.bf16.mxu0 %v2365
        %3036 = vmatpush2.bf16.msra.mxu0 %v2364
        %3037 = vmatprep.subr.bf16.mxu0 %v2359
        %3038 = vmatpush2.bf16.msra.mxu0 %v2358
        %3039 = vmatprep.subr.bf16.mxu0 %v2353
        %3040 = vmatpush2.bf16.msra.mxu0 %v2352
        %3041 = vmatprep.subr.bf16.mxu0 %v2347
        %3042 = vmatpush2.bf16.msra.mxu0 %v2346
        %3043 = vmatprep.mubr.bf16.mxu0 %v1037
        %3044 = vmatmul.mubr.bf16.gmra.mxu0 %v1036
        %v3045 = vpop.f32.mrf.mxu0
        %v3046 = vadd.f32 %v3005, %v3045
        %v3047 = vpop.f32.mrf.mxu0
        %v3048 = vadd.f32 %v3007, %v3047
        %v3049 = vpop.f32.mrf.mxu0
        %v3050 = vpop.f32.mrf.mxu0
        %3051 = vdwg.mxu0
        %3052 = vmatprep.subr.bf16.mxu0 %v2437
        %3053 = vmatpush1.bf16.msra.mxu0 %v2436
        %3054 = vmatprep.subr.bf16.mxu0 %v2431
        %3055 = vmatpush1.bf16.msra.mxu0 %v2430
        %3056 = vmatprep.subr.bf16.mxu0 %v2425
        %3057 = vmatpush1.bf16.msra.mxu0 %v2424
        %3058 = vmatprep.subr.bf16.mxu0 %v2419
        %3059 = vmatpush1.bf16.msra.mxu0 %v2418
        %3060 = vmatprep.subr.bf16.mxu0 %v2413
        %3061 = vmatpush1.bf16.msra.mxu0 %v2412
        %3062 = vmatprep.subr.bf16.mxu0 %v2407
        %3063 = vmatpush1.bf16.msra.mxu0 %v2406
        %3064 = vmatprep.subr.bf16.mxu0 %v2401
        %3065 = vmatpush1.bf16.msra.mxu0 %v2400
        %3066 = vmatprep.subr.bf16.mxu0 %v2395
        %3067 = vmatpush1.bf16.msra.mxu0 %v2394
        %3068 = vmatprep.subr.bf16.mxu0 %v2485
        %3069 = vmatpush2.bf16.msra.mxu0 %v2484
        %3070 = vmatprep.subr.bf16.mxu0 %v2479
        %3071 = vmatpush2.bf16.msra.mxu0 %v2478
        %3072 = vmatprep.subr.bf16.mxu0 %v2473
        %3073 = vmatpush2.bf16.msra.mxu0 %v2472
        %3074 = vmatprep.subr.bf16.mxu0 %v2467
        %3075 = vmatpush2.bf16.msra.mxu0 %v2466
        %3076 = vmatprep.subr.bf16.mxu0 %v2461
        %3077 = vmatpush2.bf16.msra.mxu0 %v2460
        %3078 = vmatprep.subr.bf16.mxu0 %v2455
        %3079 = vmatpush2.bf16.msra.mxu0 %v2454
        %3080 = vmatprep.subr.bf16.mxu0 %v2449
        %3081 = vmatpush2.bf16.msra.mxu0 %v2448
        %3082 = vmatprep.subr.bf16.mxu0 %v2443
        %3083 = vmatpush2.bf16.msra.mxu0 %v2442
        %3084 = vmatprep.mubr.bf16.mxu0 %v1039
        %3085 = vmatmul.mubr.bf16.gmra.mxu0 %v1038
        %v3086 = vpop.f32.mrf.mxu0
        %v3087 = vadd.f32 %v3046, %v3086
        %v3088 = vpop.f32.mrf.mxu0
        %v3089 = vadd.f32 %v3048, %v3088
        %v3090 = vpop.f32.mrf.mxu0
        %v3091 = vpop.f32.mrf.mxu0
        %3092 = vdwg.mxu0
        %3093 = vmatprep.subr.bf16.mxu0 %v2533
        %3094 = vmatpush1.bf16.msra.mxu0 %v2532
        %3095 = vmatprep.subr.bf16.mxu0 %v2527
        %3096 = vmatpush1.bf16.msra.mxu0 %v2526
        %3097 = vmatprep.subr.bf16.mxu0 %v2521
        %3098 = vmatpush1.bf16.msra.mxu0 %v2520
        %3099 = vmatprep.subr.bf16.mxu0 %v2515
        %3100 = vmatpush1.bf16.msra.mxu0 %v2514
        %3101 = vmatprep.subr.bf16.mxu0 %v2509
        %3102 = vmatpush1.bf16.msra.mxu0 %v2508
        %3103 = vmatprep.subr.bf16.mxu0 %v2503
        %3104 = vmatpush1.bf16.msra.mxu0 %v2502
        %3105 = vmatprep.subr.bf16.mxu0 %v2497
        %3106 = vmatpush1.bf16.msra.mxu0 %v2496
        %3107 = vmatprep.subr.bf16.mxu0 %v2491
        %3108 = vmatpush1.bf16.msra.mxu0 %v2490
        %3109 = vmatprep.subr.bf16.mxu0 %v2581
        %3110 = vmatpush2.bf16.msra.mxu0 %v2580
        %3111 = vmatprep.subr.bf16.mxu0 %v2575
        %3112 = vmatpush2.bf16.msra.mxu0 %v2574
        %3113 = vmatprep.subr.bf16.mxu0 %v2569
        %3114 = vmatpush2.bf16.msra.mxu0 %v2568
        %3115 = vmatprep.subr.bf16.mxu0 %v2563
        %3116 = vmatpush2.bf16.msra.mxu0 %v2562
        %3117 = vmatprep.subr.bf16.mxu0 %v2557
        %3118 = vmatpush2.bf16.msra.mxu0 %v2556
        %3119 = vmatprep.subr.bf16.mxu0 %v2551
        %3120 = vmatpush2.bf16.msra.mxu0 %v2550
        %3121 = vmatprep.subr.bf16.mxu0 %v2545
        %3122 = vmatpush2.bf16.msra.mxu0 %v2544
        %3123 = vmatprep.subr.bf16.mxu0 %v2539
        %3124 = vmatpush2.bf16.msra.mxu0 %v2538
        %3125 = vmatprep.mubr.bf16.mxu0 %v1041
        %3126 = vmatmul.mubr.bf16.gmra.mxu0 %v1040
        %v3127 = vpop.f32.mrf.mxu0
        %v3128 = vadd.f32 %v3087, %v3127
        %v3129 = vpop.f32.mrf.mxu0
        %v3130 = vadd.f32 %v3089, %v3129
        %v3131 = vpop.f32.mrf.mxu0
        %v3132 = vpop.f32.mrf.mxu0
        %3133 = vdwg.mxu0
        %3134 = vmatprep.subr.bf16.mxu0 %v2247
        %3135 = vmatpush1.bf16.msra.mxu0 %v2246
        %3136 = vmatprep.subr.bf16.mxu0 %v2241
        %3137 = vmatpush1.bf16.msra.mxu0 %v2240
        %3138 = vmatprep.subr.bf16.mxu0 %v2235
        %3139 = vmatpush1.bf16.msra.mxu0 %v2234
        %3140 = vmatprep.subr.bf16.mxu0 %v2229
        %3141 = vmatpush1.bf16.msra.mxu0 %v2228
        %3142 = vmatprep.subr.bf16.mxu0 %v2223
        %3143 = vmatpush1.bf16.msra.mxu0 %v2222
        %3144 = vmatprep.subr.bf16.mxu0 %v2217
        %3145 = vmatpush1.bf16.msra.mxu0 %v2216
        %3146 = vmatprep.subr.bf16.mxu0 %v2211
        %3147 = vmatpush1.bf16.msra.mxu0 %v2210
        %3148 = vmatprep.subr.bf16.mxu0 %v2205
        %3149 = vmatpush1.bf16.msra.mxu0 %v2204
        %3150 = vmatprep.subr.bf16.mxu0 %v2295
        %3151 = vmatpush2.bf16.msra.mxu0 %v2294
        %3152 = vmatprep.subr.bf16.mxu0 %v2289
        %3153 = vmatpush2.bf16.msra.mxu0 %v2288
        %3154 = vmatprep.subr.bf16.mxu0 %v2283
        %3155 = vmatpush2.bf16.msra.mxu0 %v2282
        %3156 = vmatprep.subr.bf16.mxu0 %v2277
        %3157 = vmatpush2.bf16.msra.mxu0 %v2276
        %3158 = vmatprep.subr.bf16.mxu0 %v2271
        %3159 = vmatpush2.bf16.msra.mxu0 %v2270
        %3160 = vmatprep.subr.bf16.mxu0 %v2265
        %3161 = vmatpush2.bf16.msra.mxu0 %v2264
        %3162 = vmatprep.subr.bf16.mxu0 %v2259
        %3163 = vmatpush2.bf16.msra.mxu0 %v2258
        %3164 = vmatprep.subr.bf16.mxu0 %v2253
        %3165 = vmatpush2.bf16.msra.mxu0 %v2252
        %3166 = vmatprep.mubr.bf16.mxu0 %v1035
        %3167 = vmatmul.mubr.bf16.gmra.mxu0 %v1034
        %v3168 = vpop.f32.mrf.mxu0
        %v3169 = vadd.f32 0.0, %v3168
        %v3170 = vpop.f32.mrf.mxu0
        %v3171 = vadd.f32 0.0, %v3170
        %v3172 = vpop.f32.mrf.mxu0
        %v3173 = vpop.f32.mrf.mxu0
        %3174 = vdwg.mxu0
        %3175 = vmatprep.subr.bf16.mxu0 %v2343
        %3176 = vmatpush1.bf16.msra.mxu0 %v2342
        %3177 = vmatprep.subr.bf16.mxu0 %v2337
        %3178 = vmatpush1.bf16.msra.mxu0 %v2336
        %3179 = vmatprep.subr.bf16.mxu0 %v2331
        %3180 = vmatpush1.bf16.msra.mxu0 %v2330
        %3181 = vmatprep.subr.bf16.mxu0 %v2325
        %3182 = vmatpush1.bf16.msra.mxu0 %v2324
        %3183 = vmatprep.subr.bf16.mxu0 %v2319
        %3184 = vmatpush1.bf16.msra.mxu0 %v2318
        %3185 = vmatprep.subr.bf16.mxu0 %v2313
        %3186 = vmatpush1.bf16.msra.mxu0 %v2312
        %3187 = vmatprep.subr.bf16.mxu0 %v2307
        %3188 = vmatpush1.bf16.msra.mxu0 %v2306
        %3189 = vmatprep.subr.bf16.mxu0 %v2301
        %3190 = vmatpush1.bf16.msra.mxu0 %v2300
        %3191 = vmatprep.subr.bf16.mxu0 %v2391
        %3192 = vmatpush2.bf16.msra.mxu0 %v2390
        %3193 = vmatprep.subr.bf16.mxu0 %v2385
        %3194 = vmatpush2.bf16.msra.mxu0 %v2384
        %3195 = vmatprep.subr.bf16.mxu0 %v2379
        %3196 = vmatpush2.bf16.msra.mxu0 %v2378
        %3197 = vmatprep.subr.bf16.mxu0 %v2373
        %3198 = vmatpush2.bf16.msra.mxu0 %v2372
        %3199 = vmatprep.subr.bf16.mxu0 %v2367
        %3200 = vmatpush2.bf16.msra.mxu0 %v2366
        %3201 = vmatprep.subr.bf16.mxu0 %v2361
        %3202 = vmatpush2.bf16.msra.mxu0 %v2360
        %3203 = vmatprep.subr.bf16.mxu0 %v2355
        %3204 = vmatpush2.bf16.msra.mxu0 %v2354
        %3205 = vmatprep.subr.bf16.mxu0 %v2349
        %3206 = vmatpush2.bf16.msra.mxu0 %v2348
        %3207 = vmatprep.mubr.bf16.mxu0 %v1037
        %3208 = vmatmul.mubr.bf16.gmra.mxu0 %v1036
        %v3209 = vpop.f32.mrf.mxu0
        %v3210 = vadd.f32 %v3169, %v3209
        %v3211 = vpop.f32.mrf.mxu0
        %v3212 = vadd.f32 %v3171, %v3211
        %v3213 = vpop.f32.mrf.mxu0
        %v3214 = vpop.f32.mrf.mxu0
        %3215 = vdwg.mxu0
        %3216 = vmatprep.subr.bf16.mxu0 %v2439
        %3217 = vmatpush1.bf16.msra.mxu0 %v2438
        %3218 = vmatprep.subr.bf16.mxu0 %v2433
        %3219 = vmatpush1.bf16.msra.mxu0 %v2432
        %3220 = vmatprep.subr.bf16.mxu0 %v2427
        %3221 = vmatpush1.bf16.msra.mxu0 %v2426
        %3222 = vmatprep.subr.bf16.mxu0 %v2421
        %3223 = vmatpush1.bf16.msra.mxu0 %v2420
        %3224 = vmatprep.subr.bf16.mxu0 %v2415
        %3225 = vmatpush1.bf16.msra.mxu0 %v2414
        %3226 = vmatprep.subr.bf16.mxu0 %v2409
        %3227 = vmatpush1.bf16.msra.mxu0 %v2408
        %3228 = vmatprep.subr.bf16.mxu0 %v2403
        %3229 = vmatpush1.bf16.msra.mxu0 %v2402
        %3230 = vmatprep.subr.bf16.mxu0 %v2397
        %3231 = vmatpush1.bf16.msra.mxu0 %v2396
        %3232 = vmatprep.subr.bf16.mxu0 %v2487
        %3233 = vmatpush2.bf16.msra.mxu0 %v2486
        %3234 = vmatprep.subr.bf16.mxu0 %v2481
        %3235 = vmatpush2.bf16.msra.mxu0 %v2480
        %3236 = vmatprep.subr.bf16.mxu0 %v2475
        %3237 = vmatpush2.bf16.msra.mxu0 %v2474
        %3238 = vmatprep.subr.bf16.mxu0 %v2469
        %3239 = vmatpush2.bf16.msra.mxu0 %v2468
        %3240 = vmatprep.subr.bf16.mxu0 %v2463
        %3241 = vmatpush2.bf16.msra.mxu0 %v2462
        %3242 = vmatprep.subr.bf16.mxu0 %v2457
        %3243 = vmatpush2.bf16.msra.mxu0 %v2456
        %3244 = vmatprep.subr.bf16.mxu0 %v2451
        %3245 = vmatpush2.bf16.msra.mxu0 %v2450
        %3246 = vmatprep.subr.bf16.mxu0 %v2445
        %3247 = vmatpush2.bf16.msra.mxu0 %v2444
        %3248 = vmatprep.mubr.bf16.mxu0 %v1039
        %3249 = vmatmul.mubr.bf16.gmra.mxu0 %v1038
        %v3250 = vpop.f32.mrf.mxu0
        %v3251 = vadd.f32 %v3210, %v3250
        %v3252 = vpop.f32.mrf.mxu0
        %v3253 = vadd.f32 %v3212, %v3252
        %v3254 = vpop.f32.mrf.mxu0
        %v3255 = vpop.f32.mrf.mxu0
        %3256 = vdwg.mxu0
        %3257 = vmatprep.subr.bf16.mxu0 %v2535
        %3258 = vmatpush1.bf16.msra.mxu0 %v2534
        %3259 = vmatprep.subr.bf16.mxu0 %v2529
        %3260 = vmatpush1.bf16.msra.mxu0 %v2528
        %3261 = vmatprep.subr.bf16.mxu0 %v2523
        %3262 = vmatpush1.bf16.msra.mxu0 %v2522
        %3263 = vmatprep.subr.bf16.mxu0 %v2517
        %3264 = vmatpush1.bf16.msra.mxu0 %v2516
        %3265 = vmatprep.subr.bf16.mxu0 %v2511
        %3266 = vmatpush1.bf16.msra.mxu0 %v2510
        %3267 = vmatprep.subr.bf16.mxu0 %v2505
        %3268 = vmatpush1.bf16.msra.mxu0 %v2504
        %3269 = vmatprep.subr.bf16.mxu0 %v2499
        %3270 = vmatpush1.bf16.msra.mxu0 %v2498
        %3271 = vmatprep.subr.bf16.mxu0 %v2493
        %3272 = vmatpush1.bf16.msra.mxu0 %v2492
        %3273 = vmatprep.subr.bf16.mxu0 %v2583
        %3274 = vmatpush2.bf16.msra.mxu0 %v2582
        %3275 = vmatprep.subr.bf16.mxu0 %v2577
        %3276 = vmatpush2.bf16.msra.mxu0 %v2576
        %3277 = vmatprep.subr.bf16.mxu0 %v2571
        %3278 = vmatpush2.bf16.msra.mxu0 %v2570
        %3279 = vmatprep.subr.bf16.mxu0 %v2565
        %3280 = vmatpush2.bf16.msra.mxu0 %v2564
        %3281 = vmatprep.subr.bf16.mxu0 %v2559
        %3282 = vmatpush2.bf16.msra.mxu0 %v2558
        %3283 = vmatprep.subr.bf16.mxu0 %v2553
        %3284 = vmatpush2.bf16.msra.mxu0 %v2552
        %3285 = vmatprep.subr.bf16.mxu0 %v2547
        %3286 = vmatpush2.bf16.msra.mxu0 %v2546
        %3287 = vmatprep.subr.bf16.mxu0 %v2541
        %3288 = vmatpush2.bf16.msra.mxu0 %v2540
        %3289 = vmatprep.mubr.bf16.mxu0 %v1041
        %3290 = vmatmul.mubr.bf16.gmra.mxu0 %v1040
        %v3291 = vpop.f32.mrf.mxu0
        %v3292 = vadd.f32 %v3251, %v3291
        %v3293 = vpop.f32.mrf.mxu0
        %v3294 = vadd.f32 %v3253, %v3293
        %v3295 = vpop.f32.mrf.mxu0
        %v3296 = vpop.f32.mrf.mxu0
        %3297 = vdwg.mxu0
        %3298 = vmatprep.subr.bf16.mxu0 %v2249
        %3299 = vmatpush1.bf16.msra.mxu0 %v2248
        %3300 = vmatprep.subr.bf16.mxu0 %v2243
        %3301 = vmatpush1.bf16.msra.mxu0 %v2242
        %3302 = vmatprep.subr.bf16.mxu0 %v2237
        %3303 = vmatpush1.bf16.msra.mxu0 %v2236
        %3304 = vmatprep.subr.bf16.mxu0 %v2231
        %3305 = vmatpush1.bf16.msra.mxu0 %v2230
        %3306 = vmatprep.subr.bf16.mxu0 %v2225
        %3307 = vmatpush1.bf16.msra.mxu0 %v2224
        %3308 = vmatprep.subr.bf16.mxu0 %v2219
        %3309 = vmatpush1.bf16.msra.mxu0 %v2218
        %3310 = vmatprep.subr.bf16.mxu0 %v2213
        %3311 = vmatpush1.bf16.msra.mxu0 %v2212
        %3312 = vmatprep.subr.bf16.mxu0 %v2207
        %3313 = vmatpush1.bf16.msra.mxu0 %v2206
        %3314 = vmatprep.subr.bf16.mxu0 %v2297
        %3315 = vmatpush2.bf16.msra.mxu0 %v2296
        %3316 = vmatprep.subr.bf16.mxu0 %v2291
        %3317 = vmatpush2.bf16.msra.mxu0 %v2290
        %3318 = vmatprep.subr.bf16.mxu0 %v2285
        %3319 = vmatpush2.bf16.msra.mxu0 %v2284
        %3320 = vmatprep.subr.bf16.mxu0 %v2279
        %3321 = vmatpush2.bf16.msra.mxu0 %v2278
        %3322 = vmatprep.subr.bf16.mxu0 %v2273
        %3323 = vmatpush2.bf16.msra.mxu0 %v2272
        %3324 = vmatprep.subr.bf16.mxu0 %v2267
        %3325 = vmatpush2.bf16.msra.mxu0 %v2266
        %3326 = vmatprep.subr.bf16.mxu0 %v2261
        %3327 = vmatpush2.bf16.msra.mxu0 %v2260
        %3328 = vmatprep.subr.bf16.mxu0 %v2255
        %3329 = vmatpush2.bf16.msra.mxu0 %v2254
        %3330 = vmatprep.mubr.bf16.mxu0 %v1035
        %3331 = vmatmul.mubr.bf16.gmra.mxu0 %v1034
        %v3332 = vpop.f32.mrf.mxu0
        %v3333 = vadd.f32 0.0, %v3332
        %v3334 = vpop.f32.mrf.mxu0
        %v3335 = vadd.f32 0.0, %v3334
        %v3336 = vpop.f32.mrf.mxu0
        %v3337 = vpop.f32.mrf.mxu0
        %3338 = vdwg.mxu0
        %3339 = vmatprep.subr.bf16.mxu0 %v2345
        %3340 = vmatpush1.bf16.msra.mxu0 %v2344
        %3341 = vmatprep.subr.bf16.mxu0 %v2339
        %3342 = vmatpush1.bf16.msra.mxu0 %v2338
        %3343 = vmatprep.subr.bf16.mxu0 %v2333
        %3344 = vmatpush1.bf16.msra.mxu0 %v2332
        %3345 = vmatprep.subr.bf16.mxu0 %v2327
        %3346 = vmatpush1.bf16.msra.mxu0 %v2326
        %3347 = vmatprep.subr.bf16.mxu0 %v2321
        %3348 = vmatpush1.bf16.msra.mxu0 %v2320
        %3349 = vmatprep.subr.bf16.mxu0 %v2315
        %3350 = vmatpush1.bf16.msra.mxu0 %v2314
        %3351 = vmatprep.subr.bf16.mxu0 %v2309
        %3352 = vmatpush1.bf16.msra.mxu0 %v2308
        %3353 = vmatprep.subr.bf16.mxu0 %v2303
        %3354 = vmatpush1.bf16.msra.mxu0 %v2302
        %3355 = vmatprep.subr.bf16.mxu0 %v2393
        %3356 = vmatpush2.bf16.msra.mxu0 %v2392
        %3357 = vmatprep.subr.bf16.mxu0 %v2387
        %3358 = vmatpush2.bf16.msra.mxu0 %v2386
        %3359 = vmatprep.subr.bf16.mxu0 %v2381
        %3360 = vmatpush2.bf16.msra.mxu0 %v2380
        %3361 = vmatprep.subr.bf16.mxu0 %v2375
        %3362 = vmatpush2.bf16.msra.mxu0 %v2374
        %3363 = vmatprep.subr.bf16.mxu0 %v2369
        %3364 = vmatpush2.bf16.msra.mxu0 %v2368
        %3365 = vmatprep.subr.bf16.mxu0 %v2363
        %3366 = vmatpush2.bf16.msra.mxu0 %v2362
        %3367 = vmatprep.subr.bf16.mxu0 %v2357
        %3368 = vmatpush2.bf16.msra.mxu0 %v2356
        %3369 = vmatprep.subr.bf16.mxu0 %v2351
        %3370 = vmatpush2.bf16.msra.mxu0 %v2350
        %3371 = vmatprep.mubr.bf16.mxu0 %v1037
        %3372 = vmatmul.mubr.bf16.gmra.mxu0 %v1036
        %v3373 = vpop.f32.mrf.mxu0
        %v3374 = vadd.f32 %v3333, %v3373
        %v3375 = vpop.f32.mrf.mxu0
        %v3376 = vadd.f32 %v3335, %v3375
        %v3377 = vpop.f32.mrf.mxu0
        %v3378 = vpop.f32.mrf.mxu0
        %3379 = vdwg.mxu0
        %3380 = vmatprep.subr.bf16.mxu0 %v2441
        %3381 = vmatpush1.bf16.msra.mxu0 %v2440
        %3382 = vmatprep.subr.bf16.mxu0 %v2435
        %3383 = vmatpush1.bf16.msra.mxu0 %v2434
        %3384 = vmatprep.subr.bf16.mxu0 %v2429
        %3385 = vmatpush1.bf16.msra.mxu0 %v2428
        %3386 = vmatprep.subr.bf16.mxu0 %v2423
        %3387 = vmatpush1.bf16.msra.mxu0 %v2422
        %3388 = vmatprep.subr.bf16.mxu0 %v2417
        %3389 = vmatpush1.bf16.msra.mxu0 %v2416
        %3390 = vmatprep.subr.bf16.mxu0 %v2411
        %3391 = vmatpush1.bf16.msra.mxu0 %v2410
        %3392 = vmatprep.subr.bf16.mxu0 %v2405
        %3393 = vmatpush1.bf16.msra.mxu0 %v2404
        %3394 = vmatprep.subr.bf16.mxu0 %v2399
        %3395 = vmatpush1.bf16.msra.mxu0 %v2398
        %3396 = vmatprep.subr.bf16.mxu0 %v2489
        %3397 = vmatpush2.bf16.msra.mxu0 %v2488
        %3398 = vmatprep.subr.bf16.mxu0 %v2483
        %3399 = vmatpush2.bf16.msra.mxu0 %v2482
        %3400 = vmatprep.subr.bf16.mxu0 %v2477
        %3401 = vmatpush2.bf16.msra.mxu0 %v2476
        %3402 = vmatprep.subr.bf16.mxu0 %v2471
        %3403 = vmatpush2.bf16.msra.mxu0 %v2470
        %3404 = vmatprep.subr.bf16.mxu0 %v2465
        %3405 = vmatpush2.bf16.msra.mxu0 %v2464
        %3406 = vmatprep.subr.bf16.mxu0 %v2459
        %3407 = vmatpush2.bf16.msra.mxu0 %v2458
        %3408 = vmatprep.subr.bf16.mxu0 %v2453
        %3409 = vmatpush2.bf16.msra.mxu0 %v2452
        %3410 = vmatprep.subr.bf16.mxu0 %v2447
        %3411 = vmatpush2.bf16.msra.mxu0 %v2446
        %3412 = vmatprep.mubr.bf16.mxu0 %v1039
        %3413 = vmatmul.mubr.bf16.gmra.mxu0 %v1038
        %v3414 = vpop.f32.mrf.mxu0
        %v3415 = vadd.f32 %v3374, %v3414
        %v3416 = vpop.f32.mrf.mxu0
        %v3417 = vadd.f32 %v3376, %v3416
        %v3418 = vpop.f32.mrf.mxu0
        %v3419 = vpop.f32.mrf.mxu0
        %3420 = vdwg.mxu0
        %3421 = vmatprep.subr.bf16.mxu0 %v2537
        %3422 = vmatpush1.bf16.msra.mxu0 %v2536
        %3423 = vmatprep.subr.bf16.mxu0 %v2531
        %3424 = vmatpush1.bf16.msra.mxu0 %v2530
        %3425 = vmatprep.subr.bf16.mxu0 %v2525
        %3426 = vmatpush1.bf16.msra.mxu0 %v2524
        %3427 = vmatprep.subr.bf16.mxu0 %v2519
        %3428 = vmatpush1.bf16.msra.mxu0 %v2518
        %3429 = vmatprep.subr.bf16.mxu0 %v2513
        %3430 = vmatpush1.bf16.msra.mxu0 %v2512
        %3431 = vmatprep.subr.bf16.mxu0 %v2507
        %3432 = vmatpush1.bf16.msra.mxu0 %v2506
        %3433 = vmatprep.subr.bf16.mxu0 %v2501
        %3434 = vmatpush1.bf16.msra.mxu0 %v2500
        %3435 = vmatprep.subr.bf16.mxu0 %v2495
        %3436 = vmatpush1.bf16.msra.mxu0 %v2494
        %3437 = vmatprep.subr.bf16.mxu0 %v2585
        %3438 = vmatpush2.bf16.msra.mxu0 %v2584
        %3439 = vmatprep.subr.bf16.mxu0 %v2579
        %3440 = vmatpush2.bf16.msra.mxu0 %v2578
        %3441 = vmatprep.subr.bf16.mxu0 %v2573
        %3442 = vmatpush2.bf16.msra.mxu0 %v2572
        %3443 = vmatprep.subr.bf16.mxu0 %v2567
        %3444 = vmatpush2.bf16.msra.mxu0 %v2566
        %3445 = vmatprep.subr.bf16.mxu0 %v2561
        %3446 = vmatpush2.bf16.msra.mxu0 %v2560
        %3447 = vmatprep.subr.bf16.mxu0 %v2555
        %3448 = vmatpush2.bf16.msra.mxu0 %v2554
        %3449 = vmatprep.subr.bf16.mxu0 %v2549
        %3450 = vmatpush2.bf16.msra.mxu0 %v2548
        %3451 = vmatprep.subr.bf16.mxu0 %v2543
        %3452 = vmatpush2.bf16.msra.mxu0 %v2542
        %3453 = vmatprep.mubr.bf16.mxu0 %v1041
        %3454 = vmatmul.mubr.bf16.gmra.mxu0 %v1040
        %v3455 = vpop.f32.mrf.mxu0
        %v3456 = vadd.f32 %v3415, %v3455
        %v3457 = vpop.f32.mrf.mxu0
        %v3458 = vadd.f32 %v3417, %v3457
        %v3459 = vpop.f32.mrf.mxu0
        %v3460 = vpop.f32.mrf.mxu0
        %3461 = vdwg.mxu0
        %v3462 = vadd.f32 %v628, %v3128
        %v3463 = vadd.f32 %v629, %v3130
        %v3464 = vadd.f32 %v630, %v3292
        %v3465 = vadd.f32 %v631, %v3294
        %v3466 = vadd.f32 %v632, %v3456
        %v3467 = vadd.f32 %v633, %v3458
        %3468 = vst [vmem:[#allocation2] sm:$0xff] %v3462
        %3469 = vst [vmem:[#allocation2 + $0x8] sm:$0xff] %v3463
        %3470 = vst [vmem:[#allocation2 + $0x10] sm:$0xff] %v3464
        %3471 = vst [vmem:[#allocation2 + $0x18] sm:$0xff] %v3465
        %3472 = vst [vmem:[#allocation2 + $0x20] sm:$0xff] %v3466
        %3473 = vst [vmem:[#allocation2 + $0x28] sm:$0xff] %v3467
        %p3474 = scmp.eq.s32.totalorder %s37, 3
        // Predicated region
        $region125: #{tpu_custom_call.1} parent=71 // pred_check
          %p3475 = pneg %p3474
        $region126: #{tpu_custom_call.1} parent=71 // pred_check_branch
          %3477 = sbr.rel (%p3475) target = $region128
        $region127: #{tpu_custom_call.1} parent=71 // pred_region
          %v3478 = vld [vmem:[#allocation2] sm:$0xff]
          %v3479 = vld [vmem:[#allocation2 + $0x8] sm:$0xff]
          %v3480 = vld [vmem:[#allocation2 + $0x10] sm:$0xff]
          %v3481 = vld [vmem:[#allocation2 + $0x18] sm:$0xff]
          %v3482 = vld [vmem:[#allocation2 + $0x20] sm:$0xff]
          %v3483 = vld [vmem:[#allocation2 + $0x28] sm:$0xff]
          %v3484 = vld [vmem:[#allocation8] sm:$0x3]
          %v3486 = vlaneseq
          %v3487 = vshrl.u32 %v3486, 7
          %v3488 = vsub.s32 0, %v3487
          %v3489 = vrot.slane %v3484, %v3488
          %v3490 = vlaneseq
          %v3491 = vshrl.u32 %v3490, 7
          %v3492 = vsub.s32 1, %v3491
          %v3493 = vrot.slane %v3484, %v3492
          %v3496 = vadd.f32 %v3478, %v3489
          %v3497 = vadd.f32 %v3479, %v3493
          %v3500 = vcombine.low %v3496, %v3497
          %v3501 = vcombine.high %v3496, %v3497
          %v3504 = vld [vmem:[#allocation9] sm:$0x3]
          %v3506 = vlaneseq
          %v3507 = vshrl.u32 %v3506, 7
          %v3508 = vsub.s32 0, %v3507
          %v3509 = vrot.slane %v3504, %v3508
          %v3510 = vlaneseq
          %v3511 = vshrl.u32 %v3510, 7
          %v3512 = vsub.s32 1, %v3511
          %v3513 = vrot.slane %v3504, %v3512
          %v3516 = vadd.f32 %v3480, %v3509
          %v3517 = vadd.f32 %v3481, %v3513
          %v3520 = vcombine.low %v3516, %v3517
          %v3521 = vcombine.high %v3516, %v3517
          %v3526 = vcombine.low %v3482, %v3483
          %v3527 = vcombine.high %v3482, %v3483
          %v3528 = vrot.slane %v3526, 5
          %v3529 = vrot.slane %v3528, 4
          %v3530 = vrot.slane %v3527, 5
          %v3531 = vrot.slane %v3530, 4
          %v3534 = vadd.f32 %v3520, %v3529
          %v3535 = vadd.f32 %v3521, %v3531
          %v3536 = vxor.u32 %v3500, 2147483648
          %v3537 = vxor.u32 %v3501, 2147483648
          %v3538 = vmul.f32 %v3536, 1.442695
          %v3539 = vpow.pop %v3538
          %v3540 = vmul.f32 %v3537, 1.442695
          %v3541 = vpow.pop %v3540
          %v3542 = vadd.f32 %v3539, 1.0
          %v3543 = vadd.f32 %v3541, 1.0
          %v3544 = vrcp.pop %v3542
          %v3545 = vmul.f32 1.0, %v3544
          %v3546 = vrcp.pop %v3543
          %v3547 = vmul.f32 1.0, %v3546
          %v3548 = vrot.slane %v3500, 4
          %v3549 = vrot.slane %v3501, 4
          %v3552 = vmul.f32 %v3545, %v3548
          %v3553 = vmul.f32 %v3547, %v3549
          %v3554 = vxor.u32 %v3534, 2147483648
          %v3555 = vxor.u32 %v3535, 2147483648
          %v3556 = vmul.f32 %v3554, 1.442695
          %v3557 = vpow.pop %v3556
          %v3558 = vmul.f32 %v3555, 1.442695
          %v3559 = vpow.pop %v3558
          %v3560 = vadd.f32 %v3557, 1.0
          %v3561 = vadd.f32 %v3559, 1.0
          %v3562 = vrcp.pop %v3560
          %v3563 = vmul.f32 1.0, %v3562
          %v3564 = vrcp.pop %v3561
          %v3565 = vmul.f32 1.0, %v3564
          %v3568 = vrot.slane %v3534, 4
          %v3569 = vrot.slane %v3535, 4
          %v3572 = vmul.f32 %v3563, %v3568
          %v3573 = vmul.f32 %v3565, %v3569
          %vm3574 = vcmask 1043456
          %v3575 = vsel %vm3574, %v3552, -inf
          %v3576 = vrot.slane %v3575, 4
          %v3577 = vmax.f32 %v3575, %v3576
          %v3578 = vrot.slane %v3577, 2
          %v3579 = vmax.f32 %v3577, %v3578
          %v3580 = vrot.slane %v3579, 1
          %v3581 = vmax.f32 %v3579, %v3580
          %v3582 = vsel %vm3574, %v3553, -inf
          %v3583 = vrot.slane %v3582, 4
          %v3584 = vmax.f32 %v3582, %v3583
          %v3585 = vrot.slane %v3584, 2
          %v3586 = vmax.f32 %v3584, %v3585
          %v3587 = vrot.slane %v3586, 1
          %v3588 = vmax.f32 %v3586, %v3587
          %vm3589 = vcmask 1042432
          %v3590 = vsel %vm3589, %v3572, -inf
          %v3591 = vrot.slane %v3590, 4
          %v3592 = vmax.f32 %v3590, %v3591
          %v3593 = vrot.slane %v3592, 2
          %v3594 = vmax.f32 %v3592, %v3593
          %v3595 = vrot.slane %v3594, 1
          %v3596 = vmax.f32 %v3594, %v3595
          %v3597 = vsel %vm3589, %v3573, -inf
          %v3598 = vrot.slane %v3597, 4
          %v3599 = vmax.f32 %v3597, %v3598
          %v3600 = vrot.slane %v3599, 2
          %v3601 = vmax.f32 %v3599, %v3600
          %v3602 = vrot.slane %v3601, 1
          %v3603 = vmax.f32 %v3601, %v3602
          %v3604 = vld [vmem:[#allocation11] sm:$0x1]
          %v3606 = vlaneseq
          %v3607 = vshrl.u32 %v3606, 7
          %v3608 = vsub.s32 0, %v3607
          %v3609 = vrot.slane %v3604, %v3608
          %v3611 = vmul.f32 %v3581, %v3609
          %v3612 = vmul.f32 %v3588, %v3609
          %v3613 = vld [vmem:[#allocation12] sm:$0x1]
          %v3615 = vlaneseq
          %v3616 = vshrl.u32 %v3615, 7
          %v3617 = vsub.s32 0, %v3616
          %v3618 = vrot.slane %v3613, %v3617
          %v3620 = vadd.f32 %v3611, %v3618
          %v3621 = vadd.f32 %v3612, %v3618
          %v3622 = vld [vmem:[#allocation17] sm:$0xff]
          %v3623 = vld [vmem:[#allocation17 + $0x8] sm:$0xff]
          %v3624 = vld [vmem:[#allocation17 + $0x10] sm:$0xff]
          %v3625 = vld [vmem:[#allocation17 + $0x18] sm:$0xff]
          %v3626 = vld [vmem:[#allocation17 + $0x20] sm:$0xff]
          %v3627 = vld [vmem:[#allocation17 + $0x28] sm:$0xff]
          %v3628 = vld [vmem:[#allocation17 + $0x30] sm:$0xff]
          %v3629 = vld [vmem:[#allocation17 + $0x38] sm:$0xff]
          %v3630 = vld [vmem:[#allocation17 + $0x40] sm:$0xff]
          %v3631 = vld [vmem:[#allocation17 + $0x48] sm:$0xff]
          %v3632 = vld [vmem:[#allocation17 + $0x50] sm:$0xff]
          %v3633 = vld [vmem:[#allocation17 + $0x58] sm:$0xff]
          %v3634 = vld [vmem:[#allocation17 + $0x60] sm:$0xff]
          %v3635 = vld [vmem:[#allocation17 + $0x68] sm:$0xff]
          %v3636 = vld [vmem:[#allocation17 + $0x70] sm:$0xff]
          %v3637 = vld [vmem:[#allocation17 + $0x78] sm:$0xff]
          %v3638 = vld [vmem:[#allocation14] sm:$0x1]
          %v3640 = vlaneseq
          %v3641 = vshrl.u32 %v3640, 7
          %v3642 = vsub.s32 0, %v3641
          %v3643 = vrot.slane %v3638, %v3642
          %v3645 = vmul.f32 %v3596, %v3643
          %v3646 = vmul.f32 %v3603, %v3643
          %v3647 = vld [vmem:[#allocation15] sm:$0x1]
          %v3649 = vlaneseq
          %v3650 = vshrl.u32 %v3649, 7
          %v3651 = vsub.s32 0, %v3650
          %v3652 = vrot.slane %v3647, %v3651
          %v3654 = vadd.f32 %v3645, %v3652
          %v3655 = vadd.f32 %v3646, %v3652
          %v3656 = vld [vmem:[#allocation18] sm:$0xff]
          %v3657 = vld [vmem:[#allocation18 + $0x8] sm:$0xff]
          %v3658 = vld [vmem:[#allocation18 + $0x10] sm:$0xff]
          %v3659 = vld [vmem:[#allocation18 + $0x18] sm:$0xff]
          %v3660 = vld [vmem:[#allocation18 + $0x20] sm:$0xff]
          %v3661 = vld [vmem:[#allocation18 + $0x28] sm:$0xff]
          %v3662 = vld [vmem:[#allocation18 + $0x30] sm:$0xff]
          %v3663 = vld [vmem:[#allocation18 + $0x38] sm:$0xff]
          %v3664 = vld [vmem:[#allocation18 + $0x40] sm:$0xff]
          %v3665 = vld [vmem:[#allocation18 + $0x48] sm:$0xff]
          %v3666 = vld [vmem:[#allocation18 + $0x50] sm:$0xff]
          %v3667 = vld [vmem:[#allocation18 + $0x58] sm:$0xff]
          %v3668 = vld [vmem:[#allocation18 + $0x60] sm:$0xff]
          %v3669 = vld [vmem:[#allocation18 + $0x68] sm:$0xff]
          %v3670 = vld [vmem:[#allocation18 + $0x70] sm:$0xff]
          %v3671 = vld [vmem:[#allocation18 + $0x78] sm:$0xff]
          %v3674 = vrot.slane %v3655, 7
          %vm3675 = vcmask 1041409
          %v3676 = vsel %vm3675, %v3674, %v3654
          %3678 = vmatprep.subr.mxu0 0.0
          %3679 = vmatpush1.msra.mxu0 %v3671
          %3680 = vmatprep.subr.mxu0 0.0
          %3681 = vmatpush1.msra.mxu0 %v3670
          %3682 = vmatprep.subr.mxu0 0.0
          %3683 = vmatpush1.msra.mxu0 %v3669
          %3684 = vmatprep.subr.mxu0 0.0
          %3685 = vmatpush1.msra.mxu0 %v3668
          %3686 = vmatprep.subr.mxu0 0.0
          %3687 = vmatpush1.msra.mxu0 %v3667
          %3688 = vmatprep.subr.mxu0 0.0
          %3689 = vmatpush1.msra.mxu0 %v3666
          %3690 = vmatprep.subr.mxu0 0.0
          %3691 = vmatpush1.msra.mxu0 %v3665
          %3692 = vmatprep.subr.mxu0 0.0
          %3693 = vmatpush1.msra.mxu0 %v3664
          %3694 = vmatprep.subr.mxu0 0.0
          %3695 = vmatpush1.msra.mxu0 %v3663
          %3696 = vmatprep.subr.mxu0 0.0
          %3697 = vmatpush1.msra.mxu0 %v3662
          %3698 = vmatprep.subr.mxu0 0.0
          %3699 = vmatpush1.msra.mxu0 %v3661
          %3700 = vmatprep.subr.mxu0 0.0
          %3701 = vmatpush1.msra.mxu0 %v3660
          %3702 = vmatprep.subr.mxu0 0.0
          %3703 = vmatpush1.msra.mxu0 %v3659
          %3704 = vmatprep.subr.mxu0 0.0
          %3705 = vmatpush1.msra.mxu0 %v3658
          %3706 = vmatprep.subr.mxu0 0.0
          %3707 = vmatpush1.msra.mxu0 %v3657
          %3708 = vmatprep.subr.mxu0 0.0
          %3709 = vmatpush1.msra.mxu0 %v3656
          %3710 = vmatprep.subr.mxu0 0.0
          %3711 = vmatpush2.msra.mxu0 0.0
          %3712 = vmatprep.subr.mxu0 0.0
          %3713 = vmatpush2.msra.mxu0 0.0
          %3714 = vmatprep.subr.mxu0 0.0
          %3715 = vmatpush2.msra.mxu0 0.0
          %3716 = vmatprep.subr.mxu0 0.0
          %3717 = vmatpush2.msra.mxu0 0.0
          %3718 = vmatprep.subr.mxu0 0.0
          %3719 = vmatpush2.msra.mxu0 0.0
          %3720 = vmatprep.subr.mxu0 0.0
          %3721 = vmatpush2.msra.mxu0 0.0
          %3722 = vmatprep.subr.mxu0 0.0
          %3723 = vmatpush2.msra.mxu0 0.0
          %3724 = vmatprep.subr.mxu0 0.0
          %3725 = vmatpush2.msra.mxu0 0.0
          %3726 = vmatprep.subr.mxu0 0.0
          %3727 = vmatpush2.msra.mxu0 0.0
          %3728 = vmatprep.subr.mxu0 0.0
          %3729 = vmatpush2.msra.mxu0 0.0
          %3730 = vmatprep.subr.mxu0 0.0
          %3731 = vmatpush2.msra.mxu0 0.0
          %3732 = vmatprep.subr.mxu0 0.0
          %3733 = vmatpush2.msra.mxu0 0.0
          %3734 = vmatprep.subr.mxu0 0.0
          %3735 = vmatpush2.msra.mxu0 0.0
          %3736 = vmatprep.subr.mxu0 0.0
          %3737 = vmatpush2.msra.mxu0 0.0
          %3738 = vmatprep.subr.mxu0 0.0
          %3739 = vmatpush2.msra.mxu0 0.0
          %3740 = vmatprep.subr.mxu0 0.0
          %3741 = vmatpush2.msra.mxu0 0.0
          %3742 = vmatprep.mubr.f32.mxu0 0.0
          %3743 = vmatmul.mubr.f32.gmra.mxu0 %v3676
          %v3744 = vpop.f32.mrf.mxu0
          %v3745 = vadd.f32 0.0, %v3744
          %v3746 = vpop.f32.mrf.mxu0
          %3747 = vdwg.mxu0
          %v3750 = vrot.slane %v3621, 7
          %v3751 = vsel %vm3675, %v3750, %v3620
          %3753 = vmatprep.subr.mxu0 0.0
          %3754 = vmatpush1.msra.mxu0 %v3637
          %3755 = vmatprep.subr.mxu0 0.0
          %3756 = vmatpush1.msra.mxu0 %v3636
          %3757 = vmatprep.subr.mxu0 0.0
          %3758 = vmatpush1.msra.mxu0 %v3635
          %3759 = vmatprep.subr.mxu0 0.0
          %3760 = vmatpush1.msra.mxu0 %v3634
          %3761 = vmatprep.subr.mxu0 0.0
          %3762 = vmatpush1.msra.mxu0 %v3633
          %3763 = vmatprep.subr.mxu0 0.0
          %3764 = vmatpush1.msra.mxu0 %v3632
          %3765 = vmatprep.subr.mxu0 0.0
          %3766 = vmatpush1.msra.mxu0 %v3631
          %3767 = vmatprep.subr.mxu0 0.0
          %3768 = vmatpush1.msra.mxu0 %v3630
          %3769 = vmatprep.subr.mxu0 0.0
          %3770 = vmatpush1.msra.mxu0 %v3629
          %3771 = vmatprep.subr.mxu0 0.0
          %3772 = vmatpush1.msra.mxu0 %v3628
          %3773 = vmatprep.subr.mxu0 0.0
          %3774 = vmatpush1.msra.mxu0 %v3627
          %3775 = vmatprep.subr.mxu0 0.0
          %3776 = vmatpush1.msra.mxu0 %v3626
          %3777 = vmatprep.subr.mxu0 0.0
          %3778 = vmatpush1.msra.mxu0 %v3625
          %3779 = vmatprep.subr.mxu0 0.0
          %3780 = vmatpush1.msra.mxu0 %v3624
          %3781 = vmatprep.subr.mxu0 0.0
          %3782 = vmatpush1.msra.mxu0 %v3623
          %3783 = vmatprep.subr.mxu0 0.0
          %3784 = vmatpush1.msra.mxu0 %v3622
          %3785 = vmatprep.subr.mxu0 0.0
          %3786 = vmatpush2.msra.mxu0 0.0
          %3787 = vmatprep.subr.mxu0 0.0
          %3788 = vmatpush2.msra.mxu0 0.0
          %3789 = vmatprep.subr.mxu0 0.0
          %3790 = vmatpush2.msra.mxu0 0.0
          %3791 = vmatprep.subr.mxu0 0.0
          %3792 = vmatpush2.msra.mxu0 0.0
          %3793 = vmatprep.subr.mxu0 0.0
          %3794 = vmatpush2.msra.mxu0 0.0
          %3795 = vmatprep.subr.mxu0 0.0
          %3796 = vmatpush2.msra.mxu0 0.0
          %3797 = vmatprep.subr.mxu0 0.0
          %3798 = vmatpush2.msra.mxu0 0.0
          %3799 = vmatprep.subr.mxu0 0.0
          %3800 = vmatpush2.msra.mxu0 0.0
          %3801 = vmatprep.subr.mxu0 0.0
          %3802 = vmatpush2.msra.mxu0 0.0
          %3803 = vmatprep.subr.mxu0 0.0
          %3804 = vmatpush2.msra.mxu0 0.0
          %3805 = vmatprep.subr.mxu0 0.0
          %3806 = vmatpush2.msra.mxu0 0.0
          %3807 = vmatprep.subr.mxu0 0.0
          %3808 = vmatpush2.msra.mxu0 0.0
          %3809 = vmatprep.subr.mxu0 0.0
          %3810 = vmatpush2.msra.mxu0 0.0
          %3811 = vmatprep.subr.mxu0 0.0
          %3812 = vmatpush2.msra.mxu0 0.0
          %3813 = vmatprep.subr.mxu0 0.0
          %3814 = vmatpush2.msra.mxu0 0.0
          %3815 = vmatprep.subr.mxu0 0.0
          %3816 = vmatpush2.msra.mxu0 0.0
          %3817 = vmatprep.mubr.f32.mxu0 0.0
          %3818 = vmatmul.mubr.f32.gmra.mxu0 %v3751
          %v3819 = vpop.f32.mrf.mxu0
          %v3820 = vadd.f32 %v3745, %v3819
          %v3821 = vpop.f32.mrf.mxu0
          %3822 = vdwg.mxu0
          %v3823 = vld [vmem:[#allocation20] sm:$0x1]
          %v3825 = vlaneseq
          %v3826 = vshrl.u32 %v3825, 7
          %v3827 = vsub.s32 0, %v3826
          %v3828 = vrot.slane %v3823, %v3827
          %v3830 = vadd.f32 %v3820, %v3828
          %v3831 = vmax.f32 %v3830, 0.0
          %v3832 = vld [vmem:[#allocation21] sm:$0x1]
          %v3834 = vlaneseq
          %v3835 = vshrl.u32 %v3834, 7
          %v3836 = vsub.s32 0, %v3835
          %v3837 = vrot.slane %v3832, %v3836
          %v3839 = vmul.f32 %v3831, %v3837
          %vm3840 = vcmask 1041408
          %v3841 = vsel %vm3840, %v3839, 0.0
          %3842 = vadd.xlane.f32.xlu0 %v3841
          %v3843 = vpop.xlane.xlu0 %3842
          %v3844 = vld [vmem:[#allocation3] sm:$0x1]
          %v3846 = vlaneseq
          %v3847 = vshrl.u32 %v3846, 7
          %v3848 = vsub.s32 0, %v3847
          %v3849 = vrot.slane %v3844, %v3848
          %v3851 = vadd.f32 %v3843, %v3849
          %v3852 = vxor.u32 %v3851, 2147483648
          %v3853 = vmul.f32 %v3852, 1.442695
          %v3854 = vpow.pop %v3853
          %v3855 = vadd.f32 %v3854, 1.0
          %v3856 = vrcp.pop %v3855
          %v3857 = vmul.f32 1.0, %v3856
          %vm3858 = vcmask 1024
          %3859 = vst.msk [vmem:[%s13] sm:$0x3] %vm3858, %v3857
        $region128: #{tpu_custom_call.1} parent=71 // pred_fallthru
          _
        // Predicated region
        $region129: #{tpu_custom_call.1} parent=71 // pred_check
          %p3860 = pneg %p333
        $region130: #{tpu_custom_call.1} parent=71 // pred_check_branch
          %3862 = sbr.rel (%p3860) target = $region132
        $region131: #{tpu_custom_call.1} parent=71 // pred_region
          _
        $region132: #{tpu_custom_call.1} parent=71 // pred_fallthru
          _
        // Predicated region
        $region133: #{tpu_custom_call.1} parent=71 // pred_check
          %p3863 = pneg %p333
        $region134: #{tpu_custom_call.1} parent=71 // pred_check_branch
          %3865 = sbr.rel (%p3863) target = $region136
        $region135: #{tpu_custom_call.1} parent=71 // pred_region
          _
        $region136: #{tpu_custom_call.1} parent=71 // pred_fallthru
          _
      $region72: #{tpu_custom_call.1} parent=5 // pred_fallthru
        _
      %p3866 = scmp.le.s32.totalorder 2, %s32
      // Predicated region
      $region137: #{tpu_custom_call.1} parent=5 // pred_check
        %p3867 = pneg %p3866
      $region138: #{tpu_custom_call.1} parent=5 // pred_check_branch
        %3869 = sbr.rel (%p3867) target = $region140
      $region139: #{tpu_custom_call.1} parent=5 // pred_region
        %s3870 = ssub.s32 %s32, 2
      $region140: #{tpu_custom_call.1} parent=5 // pred_fallthru
        _
    $region6: #{tpu_custom_call.1} parent=1 // loop_footer
      %s36 = sadd.s32 1, %s32
    $region7: #{tpu_custom_call.1} parent=1 // loop_footer_branch
      %31 = sbr.rel target = $region3
    $region8: #{tpu_custom_call.1} parent=1 // loop_exit
      _
    %3871 = vsyncpa [#allocation5], 1
    %s3872 = scalar_lea.sflag [#allocation5], 1
    %3873 = vsyncpa %s3872, 1
    %3874 = vsyncpa [#allocation7], 1
    %s3875 = scalar_lea.sflag [#allocation7], 1
    %3876 = vsyncpa %s3875, 1
    %3877 = vsyncpa [#allocation10], 1
    %3878 = vsyncpa [#allocation13], 1
    %3879 = vsyncpa [#allocation16], 1
    %3880 = vsyncpa [#allocation19], 1
    %3881 = vsyncpa [#allocation22], 1

</llo_original>
